<compile_context>
chip_gen: v7x
topology: tpu7x:2x2x1
jax: 0.10.0
libtpu: 0.0.40
codegen_flags: <defaults>
</compile_context>

<pallas_src>
import jax
import jax.numpy as jnp
from jax.experimental import pallas as pl
from jax.experimental.pallas import tpu as pltpu

LANES = 128


# ----------------------------- in-kernel helpers -----------------------------
def _silu(y):
    # SiLU in f32. exp + reciprocal run on the EUP (separate bundle slot).
    return y * pl.reciprocal(1.0 + jnp.exp(-y), approx=True)


def _pick_tile(m, cap=512):
    # Large tiles (mem-bound 1x1 kernels) but prefer >=2 grid steps (v7x megacore).
    limit = min(cap, m)
    if m >= 16:
        limit = min(limit, m // 2)
    for tm in (512, 256, 128, 64, 32, 16, 8):
        if tm <= limit and m % tm == 0:
            return tm
    return m  # TODO(synk): masked tail for ragged M instead of whole-M fallback


def _params(n_axes):
    return pltpu.CompilerParams(
        dimension_semantics=("parallel",) * n_axes,
        vmem_limit_bytes=32 * 1024 * 1024)


def _pad_axis(a, axis, size):
    pad = size - a.shape[axis]
    if pad <= 0:
        return a
    widths = [(0, 0)] * a.ndim
    widths[axis] = (0, pad)
    return jnp.pad(a, widths)


# ------- kernel A: fused conv1+conv2 of the CSP split (one 256-wide dot) -----
def _dual_pw_kernel(x_ref, w_ref, s_ref, b_ref, o1_ref, o2_ref):
    y = jnp.dot(x_ref[...], w_ref[...], preferred_element_type=jnp.float32)
    y = _silu(y * s_ref[...] + b_ref[...])
    n = o1_ref.shape[-1]
    o1_ref[...] = y[:, :n].astype(o1_ref.dtype)
    o2_ref[...] = y[:, n:].astype(o2_ref.dtype)


def dual_pointwise_bn_silu(x, w12, s12, b12, out_dtype=jnp.bfloat16):
    m, k = x.shape
    n2 = w12.shape[1]
    n = n2 // 2
    tm = _pick_tile(m)
    return pl.pallas_call(
        _dual_pw_kernel,
        out_shape=(jax.ShapeDtypeStruct((m, n), out_dtype),
                   jax.ShapeDtypeStruct((m, n), out_dtype)),
        grid=(m // tm,),
        in_specs=[
            pl.BlockSpec((tm, k), lambda i: (i, 0)),
            pl.BlockSpec((k, n2), lambda i: (0, 0)),
            pl.BlockSpec((1, n2), lambda i: (0, 0)),
            pl.BlockSpec((1, n2), lambda i: (0, 0)),
        ],
        out_specs=(pl.BlockSpec((tm, n), lambda i: (i, 0)),
                   pl.BlockSpec((tm, n), lambda i: (i, 0))),
        compiler_params=_params(1),
    )(x, w12, s12.reshape(1, n2), b12.reshape(1, n2))


# ------- kernel B: fused Bottleneck (1x1 + BN + SiLU -> 3x3 + BN + SiLU + res)
def _bottleneck_kernel(x_ref, w1_ref, s1_ref, b1_ref, w3_ref, s2_ref, b2_ref,
                       o_ref):
    _, H, W, C = x_ref.shape
    HW = H * W
    x = x_ref[0]                                   # (H, W, C) bf16
    xf = x.reshape(HW, C)

    # 1x1 conv + BN + SiLU, kept in VMEM.
    t = _silu(jnp.dot(xf, w1_ref[...], preferred_element_type=jnp.float32)
              * s1_ref[...] + b1_ref[...]).astype(x.dtype)
    t3 = t.reshape(H, W, C)

    # Per-dx source masking: the zeroed source column is never validly used by
    # that tap, and it is exactly what out-of-range horizontal reads land on.
    colx = jax.lax.broadcasted_iota(jnp.int32, (H, W, C), 1)
    t_m1 = jnp.where(colx < W - 1, t3, 0)          # tap dx = -1
    t_p1 = jnp.where(colx > 0, t3, 0)              # tap dx = +1

    # Flat slabs with 2 zero rows of padding top & bottom (handles dy boundary).
    zpad = jnp.zeros((2, W, C), x.dtype)

    def flatpad(src):
        return jnp.concatenate([zpad, src, zpad], axis=0).reshape((H + 4) * W, C)

    bufs = (flatpad(t_m1), flatpad(t3), flatpad(t_p1))   # dx = -1, 0, +1

    # 3x3 conv as 3 matmuls (one per ky) with K = 3*C, single f32 accumulator.
    acc = None
    for ky in range(3):
        ops = []
        for kx in range(3):
            start = (ky + 1) * W + (kx - 1)
            ops.append(bufs[kx][start:start + HW, :])
        op = jnp.concatenate(ops, axis=-1)               # (HW, 3C)
        part = jnp.dot(op, w3_ref[ky], preferred_element_type=jnp.float32)
        acc = part if acc is None else acc + part

    y = _silu(acc * s2_ref[...] + b2_ref[...]) + xf.astype(jnp.float32)
    o_ref[0] = y.reshape(H, W, C).astype(o_ref.dtype)


def bottleneck_fused(x_bhwc, w1, s1, b1, w3, s2, b2, out_dtype=jnp.bfloat16):
    b, h, w, c = x_bhwc.shape
    return pl.pallas_call(
        _bottleneck_kernel,
        out_shape=jax.ShapeDtypeStruct((b, h, w, c), out_dtype),
        grid=(b,),
        in_specs=[
            pl.BlockSpec((1, h, w, c), lambda i: (i, 0, 0, 0)),
            pl.BlockSpec((c, c), lambda i: (0, 0)),
            pl.BlockSpec((1, c), lambda i: (0, 0)),
            pl.BlockSpec((1, c), lambda i: (0, 0)),
            pl.BlockSpec((3, 3 * c, c), lambda i: (0, 0, 0)),
            pl.BlockSpec((1, c), lambda i: (0, 0)),
            pl.BlockSpec((1, c), lambda i: (0, 0)),
        ],
        out_specs=pl.BlockSpec((1, h, w, c), lambda i: (i, 0, 0, 0)),
        compiler_params=_params(1),
    )(x_bhwc, w1, s1.reshape(1, c), b1.reshape(1, c), w3,
      s2.reshape(1, c), b2.reshape(1, c))


# ------- kernel C: concat(x1, x2) + 1x1 conv3 fused (one K=256 dot) ----------
def _cat_pw_kernel(a_ref, c_ref, w_ref, s_ref, b_ref, o_ref):
    xcat = jnp.concatenate([a_ref[...], c_ref[...]], axis=-1)
    y = jnp.dot(xcat, w_ref[...], preferred_element_type=jnp.float32)
    o_ref[...] = _silu(y * s_ref[...] + b_ref[...]).astype(o_ref.dtype)


def cat_pointwise_bn_silu(a, c, wcat, scale, bias, out_dtype=jnp.float32):
    m, ka = a.shape
    kc = c.shape[1]
    n = wcat.shape[1]
    tm = _pick_tile(m)
    return pl.pallas_call(
        _cat_pw_kernel,
        out_shape=jax.ShapeDtypeStruct((m, n), out_dtype),
        grid=(m // tm,),
        in_specs=[
            pl.BlockSpec((tm, ka), lambda i: (i, 0)),
            pl.BlockSpec((tm, kc), lambda i: (i, 0)),
            pl.BlockSpec((ka + kc, n), lambda i: (0, 0)),
            pl.BlockSpec((1, n), lambda i: (0, 0)),
            pl.BlockSpec((1, n), lambda i: (0, 0)),
        ],
        out_specs=pl.BlockSpec((tm, n), lambda i: (i, 0)),
        compiler_params=_params(1),
    )(a, c, wcat, scale.reshape(1, n), bias.reshape(1, n))


# ------------------------------ BN folding -----------------------------------
def bn_fold(bn, eps=1e-5):
    s = bn["gamma"] / jnp.sqrt(bn["rv"] + eps)
    return s, bn["beta"] - bn["rm"] * s


def _fold_pad(bn, width):
    s, b = bn_fold(bn)
    return _pad_axis(s, 0, width), _pad_axis(b, 0, width)


def _pad_w(w, width):
    return _pad_axis(_pad_axis(w, 0, width), 1, width)


# ------------------------------ parameters -----------------------------------
def init_params(key, c_in, c_out, n=1):
    hidden = int(c_out * 0.5)
    keys = iter(jax.random.split(key, 128))

    def nrm(shape, s=0.05):
        return s * jax.random.normal(next(keys), shape, jnp.float32)

    def bn(ch):
        return dict(
            gamma=1.0 + 0.1 * jax.random.normal(next(keys), (ch,), jnp.float32),
            beta=0.1 * jax.random.normal(next(keys), (ch,), jnp.float32),
            rm=0.1 * jax.random.normal(next(keys), (ch,), jnp.float32),
            rv=jax.random.uniform(next(keys), (ch,), jnp.float32, 0.5, 1.5),
        )

    p = {
        "conv1_w": nrm((c_in, hidden)), "bn1": bn(hidden),
        "conv2_w": nrm((c_in, hidden)), "bn2": bn(hidden),
        "conv3_w": nrm((2 * hidden, c_out)), "bn3": bn(c_out),
        "bottlenecks": [],
    }
    for _ in range(n):
        p["bottlenecks"].append(dict(
            conv1_w=nrm((hidden, hidden)), bn1=bn(hidden),
            # 3x3 weights stored tap-major: index ky*3+kx -> (Cin, Cout)
            conv2_w9=nrm((9, hidden, hidden)), bn2=bn(hidden),
        ))
    return p


# -------------------------------- forward ------------------------------------
def csp_layer_forward(p, x_nchw):
    b, c_in, h, w = x_nchw.shape
    hidden = p["conv1_w"].shape[1]
    c_out = p["conv3_w"].shape[1]
    assert w % 8 == 0, "W must be a multiple of 8 (layout-preserving reshapes)"
    cp = LANES
    assert max(c_in, hidden, c_out) <= cp  # TODO(synk): channel tiling for >128
    m = b * h * w
    bf16 = jnp.bfloat16

    # NCHW -> NHWC once, zero-pad channels to 128 lanes once.
    x = jnp.transpose(x_nchw, (0, 2, 3, 1)).reshape(m, c_in)
    x = _pad_axis(x, 1, cp).astype(bf16)

    # CSP split: conv1/conv2 share the input -> one dot against a (128,256) weight.
    s1, b1 = _fold_pad(p["bn1"], cp)
    s2, b2 = _fold_pad(p["bn2"], cp)
    w12 = jnp.concatenate([_pad_w(p["conv1_w"], cp),
                           _pad_w(p["conv2_w"], cp)], axis=1).astype(bf16)
    x1, x2 = dual_pointwise_bn_silu(x, w12,
                                    jnp.concatenate([s1, s2]),
                                    jnp.concatenate([b1, b2]))

    # Bottleneck chain (shortcut=True, expansion=1.0, depthwise=False), fully fused.
    cur = x1.reshape(b, h, w, cp)
    for blk in p["bottlenecks"]:
        sa, ba = _fold_pad(blk["bn1"], cp)
        sb, bb = _fold_pad(blk["bn2"], cp)
        wa = _pad_w(blk["conv1_w"], cp).astype(bf16)
        w3 = jnp.stack([
            jnp.concatenate([_pad_w(blk["conv2_w9"][ky * 3 + kx], cp)
                             for kx in range(3)], axis=0)
            for ky in range(3)], axis=0).astype(bf16)          # (3, 384, 128)
        cur = bottleneck_fused(cur, wa, sa, ba, w3, sb, bb)

    # torch.cat((x_1, x_2), dim=1) + conv3, fused (no concat tensor in HBM).
    s3, b3 = _fold_pad(p["bn3"], cp)
    wcat = jnp.concatenate([_pad_w(p["conv3_w"][:hidden], cp),
                            _pad_w(p["conv3_w"][hidden:], cp)],
                           axis=0).astype(bf16)                # (256, 128)
    out = cat_pointwise_bn_silu(cur.reshape(m, cp), x2, wcat, s3, b3,
                                out_dtype=jnp.float32)
    out = out[:, :c_out].reshape(b, h, w, c_out)
    return jnp.transpose(out, (0, 3, 1, 2))


# --------------------- pure-JAX reference (sanity check) ---------------------
def _ref_forward(p, x_nchw):
    bf16 = jnp.bfloat16
    b, c_in, h, w = x_nchw.shape
    hidden = p["conv1_w"].shape[1]
    c_out = p["conv3_w"].shape[1]

    def silu(y):
        return y * jax.nn.sigmoid(y)

    def pw(x, w_, s, bias):
        y = jnp.dot(x.astype(bf16), w_.astype(bf16),
                    preferred_element_type=jnp.float32)
        return silu(y * s + bias)

    x = jnp.transpose(x_nchw, (0, 2, 3, 1)).reshape(b * h * w, c_in)
    s1, b1 = bn_fold(p["bn1"])
    s2, b2 = bn_fold(p["bn2"])
    x1 = pw(x, p["conv1_w"], s1, b1).astype(bf16)
    x2 = pw(x, p["conv2_w"], s2, b2).astype(bf16)

    cur = x1
    for blk in p["bottlenecks"]:
        sa, ba = bn_fold(blk["bn1"])
        t = pw(cur, blk["conv1_w"], sa, ba).astype(bf16)
        tpad = jnp.pad(t.reshape(b, h, w, hidden),
                       ((0, 0), (1, 1), (1, 1), (0, 0)))
        sb, bb = bn_fold(blk["bn2"])
        acc = jnp.zeros((b, h, w, hidden), jnp.float32)
        for ky in range(3):
            for kx in range(3):
                patch = tpad[:, ky:ky + h, kx:kx + w, :].reshape(-1, hidden)
                acc += jnp.dot(patch, blk["conv2_w9"][ky * 3 + kx].astype(bf16),
                               preferred_element_type=jnp.float32
                               ).reshape(b, h, w, hidden)
        y = silu(acc * sb + bb) + cur.reshape(b, h, w, hidden).astype(jnp.float32)
        cur = y.astype(bf16).reshape(b * h * w, hidden)

    s3, b3 = bn_fold(p["bn3"])
    wa, wb = p["conv3_w"][:hidden], p["conv3_w"][hidden:]
    y = (jnp.dot(cur.astype(bf16), wa.astype(bf16),
                 preferred_element_type=jnp.float32)
         + jnp.dot(x2.astype(bf16), wb.astype(bf16),
                   preferred_element_type=jnp.float32))
    out = silu(y * s3 + b3)
    return jnp.transpose(out.reshape(b, h, w, c_out), (0, 3, 1, 2))


# ---------------------------------- main --------------------------------------
if __name__ == "__main__":
    B, C_IN, C_OUT, H, W = 2, 16, 16, 16, 16     # hidden = 8
    key = jax.random.PRNGKey(0)
    kp, kx = jax.random.split(key)
    params = init_params(kp, C_IN, C_OUT, n=1)
    x = jax.random.normal(kx, (B, C_IN, H, W), jnp.float32)

    fwd = jax.jit(csp_layer_forward)
    out = fwd(params, x)
    jax.block_until_ready(out)
    assert out.shape == (B, C_OUT, H, W)
    assert bool(jnp.all(jnp.isfinite(out)))

    ref = _ref_forward(params, x)
    err = float(jnp.max(jnp.abs(out - ref)))
    assert err < 2e-2, f"mismatch vs reference: {err}"
    print("KERNEL_OK")
</pallas_src>

<mosaic_0001>
module attributes {stable_mosaic.version = 11 : i64} {
  func.func @_dual_pw_kernel(%arg0: i32, %arg1: memref<256x128xbf16, #tpu.memory_space<vmem>>, %arg2: memref<128x256xbf16, #tpu.memory_space<vmem>>, %arg3: memref<1x256xf32, #tpu.memory_space<vmem>>, %arg4: memref<1x256xf32, #tpu.memory_space<vmem>>, %arg5: memref<256x128xbf16, #tpu.memory_space<vmem>>, %arg6: memref<256x128xbf16, #tpu.memory_space<vmem>>) attributes {dimension_semantics = [#tpu.dimension_semantics<parallel>], iteration_bounds = array<i64: 2>, scalar_prefetch = 0 : i64, scratch_operands = 0 : i64, tpu.core_type = #tpu.core_type<tc>, window_params = [{transform_indices = @transform_0, window_bounds = array<i64: 256, 128>}, {pipeline_mode = #tpu.pipeline_mode<synchronous>, transform_indices = @transform_1, window_bounds = array<i64: 128, 256>}, {pipeline_mode = #tpu.pipeline_mode<synchronous>, transform_indices = @transform_2, window_bounds = array<i64: 1, 256>}, {pipeline_mode = #tpu.pipeline_mode<synchronous>, transform_indices = @transform_3, window_bounds = array<i64: 1, 256>}, {transform_indices = @transform_4, window_bounds = array<i64: 256, 128>}, {transform_indices = @transform_5, window_bounds = array<i64: 256, 128>}]} {
    %c0 = arith.constant 0 : index
    %c0_0 = arith.constant 0 : index
    %0 = vector.load %arg1[%c0, %c0_0] : memref<256x128xbf16, #tpu.memory_space<vmem>>, vector<256x128xbf16>
    %c0_1 = arith.constant 0 : index
    %c0_2 = arith.constant 0 : index
    %1 = vector.load %arg2[%c0_1, %c0_2] : memref<128x256xbf16, #tpu.memory_space<vmem>>, vector<128x256xbf16>
    %cst = arith.constant dense<0.000000e+00> : vector<256x256xf32>
    %2 = tpu.matmul %0, %1, %cst {dimension_numbers = #tpu.dot_dimension_numbers<[1], [0], [0], [1], [0, 0, 1, 1], [], []>} : vector<256x128xbf16>, vector<128x256xbf16>, vector<256x256xf32> -> vector<256x256xf32>
    %c0_3 = arith.constant 0 : index
    %c0_4 = arith.constant 0 : index
    %3 = vector.load %arg3[%c0_3, %c0_4] : memref<1x256xf32, #tpu.memory_space<vmem>>, vector<1x256xf32>
    %4 = vector.broadcast %3 : vector<1x256xf32> to vector<256x256xf32>
    %5 = arith.mulf %2, %4 : vector<256x256xf32>
    %c0_5 = arith.constant 0 : index
    %c0_6 = arith.constant 0 : index
    %6 = vector.load %arg4[%c0_5, %c0_6] : memref<1x256xf32, #tpu.memory_space<vmem>>, vector<1x256xf32>
    %7 = vector.broadcast %6 : vector<1x256xf32> to vector<256x256xf32>
    %8 = arith.addf %5, %7 : vector<256x256xf32>
    %cst_7 = arith.constant 0.000000e+00 : f32
    %9 = vector.broadcast %cst_7 : f32 to vector<256x256xf32>
    %10 = arith.subf %9, %8 : vector<256x256xf32>
    %11 = math.exp %10 : vector<256x256xf32>
    %cst_8 = arith.constant 1.000000e+00 : f32
    %12 = vector.broadcast %cst_8 : f32 to vector<256x256xf32>
    %13 = arith.addf %12, %11 : vector<256x256xf32>
    %14 = tpu.reciprocal %13 {approx = true} : vector<256x256xf32> -> vector<256x256xf32>
    %15 = arith.mulf %8, %14 : vector<256x256xf32>
    %16 = vector.extract_strided_slice %15 {offsets = [0, 0], sizes = [256, 128], strides = [1, 1]} : vector<256x256xf32> to vector<256x128xf32>
    %17 = arith.truncf %16 : vector<256x128xf32> to vector<256x128xbf16>
    %c0_9 = arith.constant 0 : index
    %c0_10 = arith.constant 0 : index
    %18 = vector.load %arg5[%c0_9, %c0_10] : memref<256x128xbf16, #tpu.memory_space<vmem>>, vector<256x128xbf16>
    tpu.vector_store %arg5[%c0_9, %c0_10], %17 {strides = array<i32>} : memref<256x128xbf16, #tpu.memory_space<vmem>>, vector<256x128xbf16>,
    %19 = vector.extract_strided_slice %15 {offsets = [0, 128], sizes = [256, 128], strides = [1, 1]} : vector<256x256xf32> to vector<256x128xf32>
    %20 = arith.truncf %19 : vector<256x128xf32> to vector<256x128xbf16>
    %c0_11 = arith.constant 0 : index
    %c0_12 = arith.constant 0 : index
    %21 = vector.load %arg6[%c0_11, %c0_12] : memref<256x128xbf16, #tpu.memory_space<vmem>>, vector<256x128xbf16>
    tpu.vector_store %arg6[%c0_11, %c0_12], %20 {strides = array<i32>} : memref<256x128xbf16, #tpu.memory_space<vmem>>, vector<256x128xbf16>,
    return
  }
  func.func @transform_0(%arg0: i32) -> (i32, i32) {
    %c0_i32 = arith.constant 0 : i32
    %c0_i32_0 = arith.constant 0 : i32
    return %arg0, %c0_i32 : i32, i32
  }
  func.func @transform_1(%arg0: i32) -> (i32, i32) {
    %c0_i32 = arith.constant 0 : i32
    %c0_i32_0 = arith.constant 0 : i32
    %c0_i32_1 = arith.constant 0 : i32
    return %c0_i32, %c0_i32_0 : i32, i32
  }
  func.func @transform_2(%arg0: i32) -> (i32, i32) {
    %c0_i32 = arith.constant 0 : i32
    %c0_i32_0 = arith.constant 0 : i32
    %c0_i32_1 = arith.constant 0 : i32
    return %c0_i32, %c0_i32_0 : i32, i32
  }
  func.func @transform_3(%arg0: i32) -> (i32, i32) {
    %c0_i32 = arith.constant 0 : i32
    %c0_i32_0 = arith.constant 0 : i32
    %c0_i32_1 = arith.constant 0 : i32
    return %c0_i32, %c0_i32_0 : i32, i32
  }
  func.func @transform_4(%arg0: i32) -> (i32, i32) {
    %c0_i32 = arith.constant 0 : i32
    %c0_i32_0 = arith.constant 0 : i32
    return %arg0, %c0_i32 : i32, i32
  }
  func.func @transform_5(%arg0: i32) -> (i32, i32) {
    %c0_i32 = arith.constant 0 : i32
    %c0_i32_0 = arith.constant 0 : i32
    return %arg0, %c0_i32 : i32, i32
  }
}

module attributes {stable_mosaic.version = 11 : i64} {
  func.func @_bottleneck_kernel(%arg0: i32, %arg1: memref<1x16x16x128xbf16, #tpu.memory_space<vmem>>, %arg2: memref<128x128xbf16, #tpu.memory_space<vmem>>, %arg3: memref<1x128xf32, #tpu.memory_space<vmem>>, %arg4: memref<1x128xf32, #tpu.memory_space<vmem>>, %arg5: memref<3x384x128xbf16, #tpu.memory_space<vmem>>, %arg6: memref<1x128xf32, #tpu.memory_space<vmem>>, %arg7: memref<1x128xf32, #tpu.memory_space<vmem>>, %arg8: memref<1x16x16x128xbf16, #tpu.memory_space<vmem>>) attributes {dimension_semantics = [#tpu.dimension_semantics<parallel>], iteration_bounds = array<i64: 2>, scalar_prefetch = 0 : i64, scratch_operands = 0 : i64, tpu.core_type = #tpu.core_type<tc>, window_params = [{transform_indices = @transform_0, window_bounds = array<i64: 1, 16, 16, 128>}, {pipeline_mode = #tpu.pipeline_mode<synchronous>, transform_indices = @transform_1, window_bounds = array<i64: 128, 128>}, {pipeline_mode = #tpu.pipeline_mode<synchronous>, transform_indices = @transform_2, window_bounds = array<i64: 1, 128>}, {pipeline_mode = #tpu.pipeline_mode<synchronous>, transform_indices = @transform_3, window_bounds = array<i64: 1, 128>}, {pipeline_mode = #tpu.pipeline_mode<synchronous>, transform_indices = @transform_4, window_bounds = array<i64: 3, 384, 128>}, {pipeline_mode = #tpu.pipeline_mode<synchronous>, transform_indices = @transform_5, window_bounds = array<i64: 1, 128>}, {pipeline_mode = #tpu.pipeline_mode<synchronous>, transform_indices = @transform_6, window_bounds = array<i64: 1, 128>}, {transform_indices = @transform_7, window_bounds = array<i64: 1, 16, 16, 128>}]} {
    %c0 = arith.constant 0 : index
    %c0_0 = arith.constant 0 : index
    %c0_1 = arith.constant 0 : index
    %c0_2 = arith.constant 0 : index
    %0 = vector.load %arg1[%c0, %c0_0, %c0_1, %c0_2] : memref<1x16x16x128xbf16, #tpu.memory_space<vmem>>, vector<1x16x16x128xbf16>
    %1 = vector.shape_cast %0 : vector<1x16x16x128xbf16> to vector<16x16x128xbf16>
    %2 = vector.shape_cast %1 : vector<16x16x128xbf16> to vector<256x128xbf16>
    %c0_3 = arith.constant 0 : index
    %c0_4 = arith.constant 0 : index
    %3 = vector.load %arg2[%c0_3, %c0_4] : memref<128x128xbf16, #tpu.memory_space<vmem>>, vector<128x128xbf16>
    %cst = arith.constant dense<0.000000e+00> : vector<256x128xf32>
    %4 = tpu.matmul %2, %3, %cst {dimension_numbers = #tpu.dot_dimension_numbers<[1], [0], [0], [1], [0, 0, 1, 1], [], []>} : vector<256x128xbf16>, vector<128x128xbf16>, vector<256x128xf32> -> vector<256x128xf32>
    %c0_5 = arith.constant 0 : index
    %c0_6 = arith.constant 0 : index
    %5 = vector.load %arg3[%c0_5, %c0_6] : memref<1x128xf32, #tpu.memory_space<vmem>>, vector<1x128xf32>
    %6 = vector.broadcast %5 : vector<1x128xf32> to vector<256x128xf32>
    %7 = arith.mulf %4, %6 : vector<256x128xf32>
    %c0_7 = arith.constant 0 : index
    %c0_8 = arith.constant 0 : index
    %8 = vector.load %arg4[%c0_7, %c0_8] : memref<1x128xf32, #tpu.memory_space<vmem>>, vector<1x128xf32>
    %9 = vector.broadcast %8 : vector<1x128xf32> to vector<256x128xf32>
    %10 = arith.addf %7, %9 : vector<256x128xf32>
    %cst_9 = arith.constant 0.000000e+00 : f32
    %11 = vector.broadcast %cst_9 : f32 to vector<256x128xf32>
    %12 = arith.subf %11, %10 : vector<256x128xf32>
    %13 = math.exp %12 : vector<256x128xf32>
    %cst_10 = arith.constant 1.000000e+00 : f32
    %14 = vector.broadcast %cst_10 : f32 to vector<256x128xf32>
    %15 = arith.addf %14, %13 : vector<256x128xf32>
    %16 = tpu.reciprocal %15 {approx = true} : vector<256x128xf32> -> vector<256x128xf32>
    %17 = arith.mulf %10, %16 : vector<256x128xf32>
    %18 = arith.truncf %17 : vector<256x128xf32> to vector<256x128xbf16>
    %19 = vector.shape_cast %18 : vector<256x128xbf16> to vector<16x16x128xbf16>
    %20 = tpu.iota {dimensions = array<i32: 1>} : vector<16x16x128xi32>
    %c15_i32 = arith.constant 15 : i32
    %21 = vector.broadcast %c15_i32 : i32 to vector<16x16x128xi32>
    %22 = arith.cmpi slt, %20, %21 : vector<16x16x128xi32>
    %c0_i32 = arith.constant 0 : i32
    %23 = arith.sitofp %c0_i32 : i32 to bf16
    %24 = vector.broadcast %23 : bf16 to vector<16x16x128xbf16>
    %25 = arith.select %22, %19, %24 : vector<16x16x128xi1>, vector<16x16x128xbf16>
    %c0_i32_11 = arith.constant 0 : i32
    %26 = vector.broadcast %c0_i32_11 : i32 to vector<16x16x128xi32>
    %27 = arith.cmpi sgt, %20, %26 : vector<16x16x128xi32>
    %c0_i32_12 = arith.constant 0 : i32
    %28 = arith.sitofp %c0_i32_12 : i32 to bf16
    %29 = vector.broadcast %28 : bf16 to vector<16x16x128xbf16>
    %30 = arith.select %27, %19, %29 : vector<16x16x128xi1>, vector<16x16x128xbf16>
    %cst_13 = arith.constant 0.000000e+00 : bf16
    %31 = vector.broadcast %cst_13 : bf16 to vector<2x16x128xbf16>
    %32 = tpu.concatenate %31, %25, %31 in 0 : vector<2x16x128xbf16>, vector<16x16x128xbf16>, vector<2x16x128xbf16> -> vector<20x16x128xbf16>
    %33 = vector.shape_cast %32 : vector<20x16x128xbf16> to vector<320x128xbf16>
    %34 = tpu.concatenate %31, %19, %31 in 0 : vector<2x16x128xbf16>, vector<16x16x128xbf16>, vector<2x16x128xbf16> -> vector<20x16x128xbf16>
    %35 = vector.shape_cast %34 : vector<20x16x128xbf16> to vector<320x128xbf16>
    %36 = tpu.concatenate %31, %30, %31 in 0 : vector<2x16x128xbf16>, vector<16x16x128xbf16>, vector<2x16x128xbf16> -> vector<20x16x128xbf16>
    %37 = vector.shape_cast %36 : vector<20x16x128xbf16> to vector<320x128xbf16>
    %38 = vector.extract_strided_slice %33 {offsets = [15, 0], sizes = [256, 128], strides = [1, 1]} : vector<320x128xbf16> to vector<256x128xbf16>
    %39 = vector.extract_strided_slice %35 {offsets = [16, 0], sizes = [256, 128], strides = [1, 1]} : vector<320x128xbf16> to vector<256x128xbf16>
    %40 = vector.extract_strided_slice %37 {offsets = [17, 0], sizes = [256, 128], strides = [1, 1]} : vector<320x128xbf16> to vector<256x128xbf16>
    %41 = tpu.concatenate %38, %39, %40 in 1 : vector<256x128xbf16>, vector<256x128xbf16>, vector<256x128xbf16> -> vector<256x384xbf16>
    %c0_14 = arith.constant 0 : index
    %c0_15 = arith.constant 0 : index
    %c0_16 = arith.constant 0 : index
    %42 = vector.load %arg5[%c0_14, %c0_15, %c0_16] : memref<3x384x128xbf16, #tpu.memory_space<vmem>>, vector<1x384x128xbf16>
    %43 = vector.shape_cast %42 : vector<1x384x128xbf16> to vector<384x128xbf16>
    %cst_17 = arith.constant dense<0.000000e+00> : vector<256x128xf32>
    %44 = tpu.matmul %41, %43, %cst_17 {dimension_numbers = #tpu.dot_dimension_numbers<[1], [0], [0], [1], [0, 0, 1, 1], [], []>} : vector<256x384xbf16>, vector<384x128xbf16>, vector<256x128xf32> -> vector<256x128xf32>
    %45 = vector.extract_strided_slice %33 {offsets = [31, 0], sizes = [256, 128], strides = [1, 1]} : vector<320x128xbf16> to vector<256x128xbf16>
    %46 = vector.extract_strided_slice %35 {offsets = [32, 0], sizes = [256, 128], strides = [1, 1]} : vector<320x128xbf16> to vector<256x128xbf16>
    %47 = vector.extract_strided_slice %37 {offsets = [33, 0], sizes = [256, 128], strides = [1, 1]} : vector<320x128xbf16> to vector<256x128xbf16>
    %48 = tpu.concatenate %45, %46, %47 in 1 : vector<256x128xbf16>, vector<256x128xbf16>, vector<256x128xbf16> -> vector<256x384xbf16>
    %c1 = arith.constant 1 : index
    %c0_18 = arith.constant 0 : index
    %c0_19 = arith.constant 0 : index
    %49 = vector.load %arg5[%c1, %c0_18, %c0_19] : memref<3x384x128xbf16, #tpu.memory_space<vmem>>, vector<1x384x128xbf16>
    %50 = vector.shape_cast %49 : vector<1x384x128xbf16> to vector<384x128xbf16>
    %cst_20 = arith.constant dense<0.000000e+00> : vector<256x128xf32>
    %51 = tpu.matmul %48, %50, %cst_20 {dimension_numbers = #tpu.dot_dimension_numbers<[1], [0], [0], [1], [0, 0, 1, 1], [], []>} : vector<256x384xbf16>, vector<384x128xbf16>, vector<256x128xf32> -> vector<256x128xf32>
    %52 = arith.addf %44, %51 : vector<256x128xf32>
    %53 = vector.extract_strided_slice %33 {offsets = [47, 0], sizes = [256, 128], strides = [1, 1]} : vector<320x128xbf16> to vector<256x128xbf16>
    %54 = vector.extract_strided_slice %35 {offsets = [48, 0], sizes = [256, 128], strides = [1, 1]} : vector<320x128xbf16> to vector<256x128xbf16>
    %55 = vector.extract_strided_slice %37 {offsets = [49, 0], sizes = [256, 128], strides = [1, 1]} : vector<320x128xbf16> to vector<256x128xbf16>
    %56 = tpu.concatenate %53, %54, %55 in 1 : vector<256x128xbf16>, vector<256x128xbf16>, vector<256x128xbf16> -> vector<256x384xbf16>
    %c2 = arith.constant 2 : index
    %c0_21 = arith.constant 0 : index
    %c0_22 = arith.constant 0 : index
    %57 = vector.load %arg5[%c2, %c0_21, %c0_22] : memref<3x384x128xbf16, #tpu.memory_space<vmem>>, vector<1x384x128xbf16>
    %58 = vector.shape_cast %57 : vector<1x384x128xbf16> to vector<384x128xbf16>
    %cst_23 = arith.constant dense<0.000000e+00> : vector<256x128xf32>
    %59 = tpu.matmul %56, %58, %cst_23 {dimension_numbers = #tpu.dot_dimension_numbers<[1], [0], [0], [1], [0, 0, 1, 1], [], []>} : vector<256x384xbf16>, vector<384x128xbf16>, vector<256x128xf32> -> vector<256x128xf32>
    %60 = arith.addf %52, %59 : vector<256x128xf32>
    %c0_24 = arith.constant 0 : index
    %c0_25 = arith.constant 0 : index
    %61 = vector.load %arg6[%c0_24, %c0_25] : memref<1x128xf32, #tpu.memory_space<vmem>>, vector<1x128xf32>
    %62 = vector.broadcast %61 : vector<1x128xf32> to vector<256x128xf32>
    %63 = arith.mulf %60, %62 : vector<256x128xf32>
    %c0_26 = arith.constant 0 : index
    %c0_27 = arith.constant 0 : index
    %64 = vector.load %arg7[%c0_26, %c0_27] : memref<1x128xf32, #tpu.memory_space<vmem>>, vector<1x128xf32>
    %65 = vector.broadcast %64 : vector<1x128xf32> to vector<256x128xf32>
    %66 = arith.addf %63, %65 : vector<256x128xf32>
    %cst_28 = arith.constant 0.000000e+00 : f32
    %67 = vector.broadcast %cst_28 : f32 to vector<256x128xf32>
    %68 = arith.subf %67, %66 : vector<256x128xf32>
    %69 = math.exp %68 : vector<256x128xf32>
    %cst_29 = arith.constant 1.000000e+00 : f32
    %70 = vector.broadcast %cst_29 : f32 to vector<256x128xf32>
    %71 = arith.addf %70, %69 : vector<256x128xf32>
    %72 = tpu.reciprocal %71 {approx = true} : vector<256x128xf32> -> vector<256x128xf32>
    %73 = arith.mulf %66, %72 : vector<256x128xf32>
    %74 = arith.extf %2 : vector<256x128xbf16> to vector<256x128xf32>
    %75 = arith.addf %73, %74 : vector<256x128xf32>
    %76 = vector.shape_cast %75 : vector<256x128xf32> to vector<16x16x128xf32>
    %77 = arith.truncf %76 : vector<16x16x128xf32> to vector<16x16x128xbf16>
    %c0_30 = arith.constant 0 : index
    %c0_31 = arith.constant 0 : index
    %c0_32 = arith.constant 0 : index
    %c0_33 = arith.constant 0 : index
    %78 = vector.load %arg8[%c0_30, %c0_31, %c0_32, %c0_33] : memref<1x16x16x128xbf16, #tpu.memory_space<vmem>>, vector<1x16x16x128xbf16>
    %79 = vector.shape_cast %78 : vector<1x16x16x128xbf16> to vector<16x16x128xbf16>
    %80 = vector.shape_cast %77 : vector<16x16x128xbf16> to vector<1x16x16x128xbf16>
    tpu.vector_store %arg8[%c0_30, %c0_31, %c0_32, %c0_33], %80 {strides = array<i32>} : memref<1x16x16x128xbf16, #tpu.memory_space<vmem>>, vector<1x16x16x128xbf16>,
    return
  }
  func.func @transform_0(%arg0: i32) -> (i32, i32, i32, i32) {
    %c0_i32 = arith.constant 0 : i32
    %c0_i32_0 = arith.constant 0 : i32
    %c0_i32_1 = arith.constant 0 : i32
    %c0_i32_2 = arith.constant 0 : i32
    return %arg0, %c0_i32, %c0_i32_0, %c0_i32_1 : i32, i32, i32, i32
  }
  func.func @transform_1(%arg0: i32) -> (i32, i32) {
    %c0_i32 = arith.constant 0 : i32
    %c0_i32_0 = arith.constant 0 : i32
    %c0_i32_1 = arith.constant 0 : i32
    return %c0_i32, %c0_i32_0 : i32, i32
  }
  func.func @transform_2(%arg0: i32) -> (i32, i32) {
    %c0_i32 = arith.constant 0 : i32
    %c0_i32_0 = arith.constant 0 : i32
    %c0_i32_1 = arith.constant 0 : i32
    return %c0_i32, %c0_i32_0 : i32, i32
  }
  func.func @transform_3(%arg0: i32) -> (i32, i32) {
    %c0_i32 = arith.constant 0 : i32
    %c0_i32_0 = arith.constant 0 : i32
    %c0_i32_1 = arith.constant 0 : i32
    return %c0_i32, %c0_i32_0 : i32, i32
  }
  func.func @transform_4(%arg0: i32) -> (i32, i32, i32) {
    %c0_i32 = arith.constant 0 : i32
    %c0_i32_0 = arith.constant 0 : i32
    %c0_i32_1 = arith.constant 0 : i32
    %c0_i32_2 = arith.constant 0 : i32
    return %c0_i32, %c0_i32_0, %c0_i32_1 : i32, i32, i32
  }
  func.func @transform_5(%arg0: i32) -> (i32, i32) {
    %c0_i32 = arith.constant 0 : i32
    %c0_i32_0 = arith.constant 0 : i32
    %c0_i32_1 = arith.constant 0 : i32
    return %c0_i32, %c0_i32_0 : i32, i32
  }
  func.func @transform_6(%arg0: i32) -> (i32, i32) {
    %c0_i32 = arith.constant 0 : i32
    %c0_i32_0 = arith.constant 0 : i32
    %c0_i32_1 = arith.constant 0 : i32
    return %c0_i32, %c0_i32_0 : i32, i32
  }
  func.func @transform_7(%arg0: i32) -> (i32, i32, i32, i32) {
    %c0_i32 = arith.constant 0 : i32
    %c0_i32_0 = arith.constant 0 : i32
    %c0_i32_1 = arith.constant 0 : i32
    %c0_i32_2 = arith.constant 0 : i32
    return %arg0, %c0_i32, %c0_i32_0, %c0_i32_1 : i32, i32, i32, i32
  }
}

module attributes {stable_mosaic.version = 11 : i64} {
  func.func @_cat_pw_kernel(%arg0: i32, %arg1: memref<256x128xbf16, #tpu.memory_space<vmem>>, %arg2: memref<256x128xbf16, #tpu.memory_space<vmem>>, %arg3: memref<256x128xbf16, #tpu.memory_space<vmem>>, %arg4: memref<1x128xf32, #tpu.memory_space<vmem>>, %arg5: memref<1x128xf32, #tpu.memory_space<vmem>>, %arg6: memref<256x128xf32, #tpu.memory_space<vmem>>) attributes {dimension_semantics = [#tpu.dimension_semantics<parallel>], iteration_bounds = array<i64: 2>, scalar_prefetch = 0 : i64, scratch_operands = 0 : i64, tpu.core_type = #tpu.core_type<tc>, window_params = [{transform_indices = @transform_0, window_bounds = array<i64: 256, 128>}, {transform_indices = @transform_1, window_bounds = array<i64: 256, 128>}, {pipeline_mode = #tpu.pipeline_mode<synchronous>, transform_indices = @transform_2, window_bounds = array<i64: 256, 128>}, {pipeline_mode = #tpu.pipeline_mode<synchronous>, transform_indices = @transform_3, window_bounds = array<i64: 1, 128>}, {pipeline_mode = #tpu.pipeline_mode<synchronous>, transform_indices = @transform_4, window_bounds = array<i64: 1, 128>}, {transform_indices = @transform_5, window_bounds = array<i64: 256, 128>}]} {
    %c0 = arith.constant 0 : index
    %c0_0 = arith.constant 0 : index
    %0 = vector.load %arg1[%c0, %c0_0] : memref<256x128xbf16, #tpu.memory_space<vmem>>, vector<256x128xbf16>
    %c0_1 = arith.constant 0 : index
    %c0_2 = arith.constant 0 : index
    %1 = vector.load %arg2[%c0_1, %c0_2] : memref<256x128xbf16, #tpu.memory_space<vmem>>, vector<256x128xbf16>
    %2 = tpu.concatenate %0, %1 in 1 : vector<256x128xbf16>, vector<256x128xbf16> -> vector<256x256xbf16>
    %c0_3 = arith.constant 0 : index
    %c0_4 = arith.constant 0 : index
    %3 = vector.load %arg3[%c0_3, %c0_4] : memref<256x128xbf16, #tpu.memory_space<vmem>>, vector<256x128xbf16>
    %cst = arith.constant dense<0.000000e+00> : vector<256x128xf32>
    %4 = tpu.matmul %2, %3, %cst {dimension_numbers = #tpu.dot_dimension_numbers<[1], [0], [0], [1], [0, 0, 1, 1], [], []>} : vector<256x256xbf16>, vector<256x128xbf16>, vector<256x128xf32> -> vector<256x128xf32>
    %c0_5 = arith.constant 0 : index
    %c0_6 = arith.constant 0 : index
    %5 = vector.load %arg4[%c0_5, %c0_6] : memref<1x128xf32, #tpu.memory_space<vmem>>, vector<1x128xf32>
    %6 = vector.broadcast %5 : vector<1x128xf32> to vector<256x128xf32>
    %7 = arith.mulf %4, %6 : vector<256x128xf32>
    %c0_7 = arith.constant 0 : index
    %c0_8 = arith.constant 0 : index
    %8 = vector.load %arg5[%c0_7, %c0_8] : memref<1x128xf32, #tpu.memory_space<vmem>>, vector<1x128xf32>
    %9 = vector.broadcast %8 : vector<1x128xf32> to vector<256x128xf32>
    %10 = arith.addf %7, %9 : vector<256x128xf32>
    %cst_9 = arith.constant 0.000000e+00 : f32
    %11 = vector.broadcast %cst_9 : f32 to vector<256x128xf32>
    %12 = arith.subf %11, %10 : vector<256x128xf32>
    %13 = math.exp %12 : vector<256x128xf32>
    %cst_10 = arith.constant 1.000000e+00 : f32
    %14 = vector.broadcast %cst_10 : f32 to vector<256x128xf32>
    %15 = arith.addf %14, %13 : vector<256x128xf32>
    %16 = tpu.reciprocal %15 {approx = true} : vector<256x128xf32> -> vector<256x128xf32>
    %17 = arith.mulf %10, %16 : vector<256x128xf32>
    %c0_11 = arith.constant 0 : index
    %c0_12 = arith.constant 0 : index
    %18 = vector.load %arg6[%c0_11, %c0_12] : memref<256x128xf32, #tpu.memory_space<vmem>>, vector<256x128xf32>
    tpu.vector_store %arg6[%c0_11, %c0_12], %17 {strides = array<i32>} : memref<256x128xf32, #tpu.memory_space<vmem>>, vector<256x128xf32>,
    return
  }
  func.func @transform_0(%arg0: i32) -> (i32, i32) {
    %c0_i32 = arith.constant 0 : i32
    %c0_i32_0 = arith.constant 0 : i32
    return %arg0, %c0_i32 : i32, i32
  }
  func.func @transform_1(%arg0: i32) -> (i32, i32) {
    %c0_i32 = arith.constant 0 : i32
    %c0_i32_0 = arith.constant 0 : i32
    return %arg0, %c0_i32 : i32, i32
  }
  func.func @transform_2(%arg0: i32) -> (i32, i32) {
    %c0_i32 = arith.constant 0 : i32
    %c0_i32_0 = arith.constant 0 : i32
    %c0_i32_1 = arith.constant 0 : i32
    return %c0_i32, %c0_i32_0 : i32, i32
  }
  func.func @transform_3(%arg0: i32) -> (i32, i32) {
    %c0_i32 = arith.constant 0 : i32
    %c0_i32_0 = arith.constant 0 : i32
    %c0_i32_1 = arith.constant 0 : i32
    return %c0_i32, %c0_i32_0 : i32, i32
  }
  func.func @transform_4(%arg0: i32) -> (i32, i32) {
    %c0_i32 = arith.constant 0 : i32
    %c0_i32_0 = arith.constant 0 : i32
    %c0_i32_1 = arith.constant 0 : i32
    return %c0_i32, %c0_i32_0 : i32, i32
  }
  func.func @transform_5(%arg0: i32) -> (i32, i32) {
    %c0_i32 = arith.constant 0 : i32
    %c0_i32_0 = arith.constant 0 : i32
    return %arg0, %c0_i32 : i32, i32
  }
}

</mosaic_0001>

<llo_original>
// kernel: csp_layer_forward.5
$region0: #{csp_layer_forward.5}
  #allocation0 [shape = 'u32[]', space=smem, size = 0x4, offset = 0x4, fixed_abs, tag = 'smem constant byte address 0x4 - core index']
  #allocation1 [shape = 'u32[144,128]{1,0:T(1,128)}', space=vmem, size = 0x12000, scoped, tag = 'internal scratch']
  %s0 = inlined_call_operand.vmem [shape: bf16[512,128], index: 0, kind: input, shape index: {}]
  %s1 = inlined_call_operand.vmem [shape: bf16[512,128], index: 1, kind: input, shape index: {}]
  %s2 = inlined_call_operand.vmem [shape: bf16[256,128], index: 2, kind: input, shape index: {}]
  %s3 = inlined_call_operand.vmem [shape: f32[1,128], index: 3, kind: input, shape index: {}]
  %s4 = inlined_call_operand.vmem [shape: f32[1,128], index: 4, kind: input, shape index: {}]
  %s5 = inlined_call_operand.vmem [shape: f32[512,128], index: 5, kind: output, shape index: {}]
  %s6 = sld [smem:[#allocation0]]
  $region53: #{csp_layer_forward.5} parent=0
    _
  %s8 = ssub.s32 1, %s6
  %s9 = scalar_select 0, %s8, %s6
  loop: start=0, step=1, limit=4
  $region2: #{csp_layer_forward.5} parent=0 // loop_pre_header
    _
  $region3: #{csp_layer_forward.5} parent=0 // loop_header
    %s11 = sphi 0, %s15
    %p12 = scmp.ge.s32.totalorder %s11, 4
    %s21 = sphi 0, %s23
    %s24 = sphi 0, %s21
    %s25 = sphi 0, %s24
    %s41 = sphi 0, %s25
    %s47 = sphi 0, %s49
    %s50 = sphi 0, %s47
    %s51 = sphi 0, %s50
    %s67 = sphi 0, %s51
    %s71 = sphi 0, %s71
    %s73 = sphi 0, %s71
    %s74 = sphi 0, %s73
    %s88 = sphi 0, %s74
    %s92 = sphi 0, %s92
    %s94 = sphi 0, %s92
    %s95 = sphi 0, %s94
    %s109 = sphi 0, %s95
    %s113 = sphi 0, %s113
    %s115 = sphi 0, %s113
    %s116 = sphi 0, %s115
    %s130 = sphi 0, %s116
    %s136 = sphi 0, %s138
    %s139 = sphi 0, %s136
    %s140 = sphi 0, %s139
    %s156 = sphi 0, %s140
  $region4: #{csp_layer_forward.5} parent=0 // loop_header_branch
    %14 = sbr.rel (%p12) target = $region8
  $region5: #{csp_layer_forward.5} parent=0 // loop_body
    %s16 = ssub.s32 %s11, 1
    %s17 = ssub.s32 %s11, 2
    %s18 = sadd.s32 %s11, 1
    %s19 = ssub.s32 %s11, %s18
    %p20 = scmp.eq.s32.totalorder %s19, 0
    %s22 = sadd.s32 %s21, 1
    %s23 = scalar_select %p20, %s21, %s22
    %p26 = pneg %p20
    %p27 = scmp.eq.s32.totalorder %s11, 1
    %p28 = por %p26, %p27
    %p29 = scmp.ne.s32.totalorder %s21, %s24
    %p30 = scmp.eq.s32.totalorder %s11, 0
    %p31 = por %p29, %p30
    %p32 = scmp.ne.s32.totalorder %s21, %s24
    %p33 = scmp.eq.s32.totalorder %s16, 1
    %p34 = por %p32, %p33
    %p35 = scmp.ne.s32.totalorder %s24, %s25
    %p36 = scmp.eq.s32.totalorder %s16, 0
    %p37 = por %p35, %p36
    %p38 = scmp.ne.s32.totalorder %s24, %s25
    %p39 = scmp.eq.s32.totalorder %s17, 1
    %p40 = por %p38, %p39
    %p42 = scmp.ne.s32.totalorder %s25, %s41
    %p43 = scmp.eq.s32.totalorder %s17, 0
    %p44 = por %p42, %p43
    %s45 = ssub.s32 %s11, %s18
    %p46 = scmp.eq.s32.totalorder %s45, 0
    %s48 = sadd.s32 %s47, 1
    %s49 = scalar_select %p46, %s47, %s48
    %p52 = pneg %p46
    %p53 = scmp.eq.s32.totalorder %s11, 1
    %p54 = por %p52, %p53
    %p55 = scmp.ne.s32.totalorder %s47, %s50
    %p56 = scmp.eq.s32.totalorder %s11, 0
    %p57 = por %p55, %p56
    %p58 = scmp.ne.s32.totalorder %s47, %s50
    %p59 = scmp.eq.s32.totalorder %s16, 1
    %p60 = por %p58, %p59
    %p61 = scmp.ne.s32.totalorder %s50, %s51
    %p62 = scmp.eq.s32.totalorder %s16, 0
    %p63 = por %p61, %p62
    %p64 = scmp.ne.s32.totalorder %s50, %s51
    %p65 = scmp.eq.s32.totalorder %s17, 1
    %p66 = por %p64, %p65
    %p68 = scmp.ne.s32.totalorder %s51, %s67
    %p69 = scmp.eq.s32.totalorder %s17, 0
    %p70 = por %p68, %p69
    %s72 = sadd.s32 %s71, 1
    %p75 = scmp.eq.s32.totalorder %s11, 1
    %p76 = scmp.ne.s32.totalorder %s71, %s73
    %p77 = scmp.eq.s32.totalorder %s11, 0
    %p78 = por %p76, %p77
    %p79 = scmp.ne.s32.totalorder %s71, %s73
    %p80 = scmp.eq.s32.totalorder %s16, 1
    %p81 = por %p79, %p80
    %p82 = scmp.ne.s32.totalorder %s73, %s74
    %p83 = scmp.eq.s32.totalorder %s16, 0
    %p84 = por %p82, %p83
    %p85 = scmp.ne.s32.totalorder %s73, %s74
    %p86 = scmp.eq.s32.totalorder %s17, 1
    %p87 = por %p85, %p86
    %p89 = scmp.ne.s32.totalorder %s74, %s88
    %p90 = scmp.eq.s32.totalorder %s17, 0
    %p91 = por %p89, %p90
    %s93 = sadd.s32 %s92, 1
    %p96 = scmp.eq.s32.totalorder %s11, 1
    %p97 = scmp.ne.s32.totalorder %s92, %s94
    %p98 = scmp.eq.s32.totalorder %s11, 0
    %p99 = por %p97, %p98
    %p100 = scmp.ne.s32.totalorder %s92, %s94
    %p101 = scmp.eq.s32.totalorder %s16, 1
    %p102 = por %p100, %p101
    %p103 = scmp.ne.s32.totalorder %s94, %s95
    %p104 = scmp.eq.s32.totalorder %s16, 0
    %p105 = por %p103, %p104
    %p106 = scmp.ne.s32.totalorder %s94, %s95
    %p107 = scmp.eq.s32.totalorder %s17, 1
    %p108 = por %p106, %p107
    %p110 = scmp.ne.s32.totalorder %s95, %s109
    %p111 = scmp.eq.s32.totalorder %s17, 0
    %p112 = por %p110, %p111
    %s114 = sadd.s32 %s113, 1
    %p117 = scmp.eq.s32.totalorder %s11, 1
    %p118 = scmp.ne.s32.totalorder %s113, %s115
    %p119 = scmp.eq.s32.totalorder %s11, 0
    %p120 = por %p118, %p119
    %p121 = scmp.ne.s32.totalorder %s113, %s115
    %p122 = scmp.eq.s32.totalorder %s16, 1
    %p123 = por %p121, %p122
    %p124 = scmp.ne.s32.totalorder %s115, %s116
    %p125 = scmp.eq.s32.totalorder %s16, 0
    %p126 = por %p124, %p125
    %p127 = scmp.ne.s32.totalorder %s115, %s116
    %p128 = scmp.eq.s32.totalorder %s17, 1
    %p129 = por %p127, %p128
    %p131 = scmp.ne.s32.totalorder %s116, %s130
    %p132 = scmp.eq.s32.totalorder %s17, 0
    %p133 = por %p131, %p132
    %s134 = ssub.s32 %s11, %s18
    %p135 = scmp.eq.s32.totalorder %s134, 0
    %s137 = sadd.s32 %s136, 1
    %s138 = scalar_select %p135, %s136, %s137
    %p141 = pneg %p135
    %p142 = scmp.eq.s32.totalorder %s11, 1
    %p143 = por %p141, %p142
    %p144 = scmp.ne.s32.totalorder %s136, %s139
    %p145 = scmp.eq.s32.totalorder %s11, 0
    %p146 = por %p144, %p145
    %p147 = scmp.ne.s32.totalorder %s136, %s139
    %p148 = scmp.eq.s32.totalorder %s16, 1
    %p149 = por %p147, %p148
    %p150 = scmp.ne.s32.totalorder %s139, %s140
    %p151 = scmp.eq.s32.totalorder %s16, 0
    %p152 = por %p150, %p151
    %p153 = scmp.ne.s32.totalorder %s139, %s140
    %p154 = scmp.eq.s32.totalorder %s17, 1
    %p155 = por %p153, %p154
    %p157 = scmp.ne.s32.totalorder %s140, %s156
    %p158 = scmp.eq.s32.totalorder %s17, 0
    %p159 = por %p157, %p158
    %p160 = scmp.le.s32.totalorder 1, %s11
    %p161 = scmp.lt.s32.totalorder %s11, 3
    %p162 = pnand %p160, %p161
    %p163 = pneg %p162
    // Predicated region
    $region9: #{csp_layer_forward.5} parent=5 // pred_check
      _
    $region10: #{csp_layer_forward.5} parent=5 // pred_check_branch
      %165 = sbr.rel (%p162) target = $region12
    $region11: #{csp_layer_forward.5} parent=5 // pred_region
      %s166 = ssub.s32 %s11, 1
      // Predicated region
      $region13: #{csp_layer_forward.5} parent=11 // pred_check
        %p167 = pneg %p84
      $region14: #{csp_layer_forward.5} parent=11 // pred_check_branch
        %169 = sbr.rel (%p167) target = $region16
      $region15: #{csp_layer_forward.5} parent=11 // pred_region
        _
      $region16: #{csp_layer_forward.5} parent=11 // pred_fallthru
        _
      // Predicated region
      $region17: #{csp_layer_forward.5} parent=11 // pred_check
        %p170 = pneg %p105
      $region18: #{csp_layer_forward.5} parent=11 // pred_check_branch
        %172 = sbr.rel (%p170) target = $region20
      $region19: #{csp_layer_forward.5} parent=11 // pred_region
        _
      $region20: #{csp_layer_forward.5} parent=11 // pred_fallthru
        _
      // Predicated region
      $region21: #{csp_layer_forward.5} parent=11 // pred_check
        %p173 = pneg %p126
      $region22: #{csp_layer_forward.5} parent=11 // pred_check_branch
        %175 = sbr.rel (%p173) target = $region24
      $region23: #{csp_layer_forward.5} parent=11 // pred_region
        _
      $region24: #{csp_layer_forward.5} parent=11 // pred_fallthru
        _
    $region12: #{csp_layer_forward.5} parent=5 // pred_fallthru
      _
    %p176 = scmp.lt.s32.totalorder %s11, 2
    // Predicated region
    $region25: #{csp_layer_forward.5} parent=5 // pred_check
      %p177 = pneg %p176
    $region26: #{csp_layer_forward.5} parent=5 // pred_check_branch
      %179 = sbr.rel (%p177) target = $region28
    $region27: #{csp_layer_forward.5} parent=5 // pred_region
      // Predicated region
      $region29: #{csp_layer_forward.5} parent=27 // pred_check
        %p180 = pneg %p31
      $region30: #{csp_layer_forward.5} parent=27 // pred_check_branch
        %182 = sbr.rel (%p180) target = $region32
      $region31: #{csp_layer_forward.5} parent=27 // pred_region
        %s183 = smul.u32 32, %s11
        %p184 = scmp.lt.s32.totalorder %s183, 63
        %s185 = scalar_select %p184, %s183, 63
        %s186 = smul.addr %s185, 4
        %s187 = scalar_lea.vmem %s0, %s186
        %s188 = smul.u32 32, %s11
      $region32: #{csp_layer_forward.5} parent=27 // pred_fallthru
        _
      // Predicated region
      $region33: #{csp_layer_forward.5} parent=27 // pred_check
        %p189 = pneg %p57
      $region34: #{csp_layer_forward.5} parent=27 // pred_check_branch
        %191 = sbr.rel (%p189) target = $region36
      $region35: #{csp_layer_forward.5} parent=27 // pred_region
        %s192 = smul.u32 32, %s11
        %p193 = scmp.lt.s32.totalorder %s192, 63
        %s194 = scalar_select %p193, %s192, 63
        %s195 = smul.addr %s194, 4
        %s196 = scalar_lea.vmem %s1, %s195
        %s197 = smul.u32 32, %s11
      $region36: #{csp_layer_forward.5} parent=27 // pred_fallthru
        _
    $region28: #{csp_layer_forward.5} parent=5 // pred_fallthru
      _
    %p198 = scmp.le.s32.totalorder 1, %s11
    %p199 = scmp.lt.s32.totalorder %s11, 3
    %p200 = pnand %p198, %p199
    %p201 = pneg %p200
    // Predicated region
    $region37: #{csp_layer_forward.5} parent=5 // pred_check
      _
    $region38: #{csp_layer_forward.5} parent=5 // pred_check_branch
      %203 = sbr.rel (%p200) target = $region40
    $region39: #{csp_layer_forward.5} parent=5 // pred_region
      %s204 = ssub.s32 %s11, 1
      %s205 = smul.u32 32, %s16
      %p206 = scmp.lt.s32.totalorder %s205, 63
      %s207 = scalar_select %p206, %s205, 63
      %s208 = smul.addr %s207, 4
      %s209 = scalar_lea.vmem %s0, %s208
      %p210 = pneg %p37
      %p211 = pneg %p34
      %s212 = smul.u32 32, %s16
      %p213 = scmp.lt.s32.totalorder %s212, 63
      %s214 = scalar_select %p213, %s212, 63
      %s215 = smul.addr %s214, 4
      %s216 = scalar_lea.vmem %s1, %s215
      %p217 = pneg %p63
      %p218 = pneg %p60
      %p219 = pneg %p84
      %p220 = pneg %p81
      %p221 = pneg %p105
      %p222 = pneg %p102
      %p223 = pneg %p126
      %p224 = pneg %p123
      %p225 = pneg %p152
      %p226 = pneg %p149
      %s227 = smul.u32 32, %s16
      %p228 = scmp.lt.s32.totalorder %s227, 63
      %s229 = scalar_select %p228, %s227, 63
      %s230 = smul.addr %s229, 8
      %s231 = scalar_lea.vmem %s5, %s230
      %s232 = smul.u32 32, %s16
      %p233 = scmp.lt.s32.totalorder %s232, 63
      %s234 = scalar_select %p233, %s232, 63
      %s235 = smul.addr %s234, 4
      %s236 = scalar_lea.vmem %s0, %s235
      %s237 = smul.u32 32, %s16
      %s238 = smul.u32 32, %s16
      %p239 = scmp.lt.s32.totalorder %s238, 63
      %s240 = scalar_select %p239, %s238, 63
      %s241 = smul.addr %s240, 4
      %s242 = scalar_lea.vmem %s1, %s241
      %s243 = smul.u32 32, %s16
      %s244 = smul.u32 32, %s16
      %p245 = scmp.lt.s32.totalorder %s244, 63
      %s246 = scalar_select %p245, %s244, 63
      %s247 = smul.addr %s246, 8
      %s248 = scalar_lea.vmem %s5, %s247
      %s249 = smul.u32 32, %s16
      %v251 = vld [vmem:[%s236] sm:$0xf]
      %v252 = vld [vmem:[%s236 + $0x4] sm:$0xf]
      %v253 = vld [vmem:[%s236 + $0x8] sm:$0xf]
      %v254 = vld [vmem:[%s236 + $0xc] sm:$0xf]
      %v255 = vld [vmem:[%s236 + $0x10] sm:$0xf]
      %v256 = vld [vmem:[%s236 + $0x14] sm:$0xf]
      %v257 = vld [vmem:[%s236 + $0x18] sm:$0xf]
      %v258 = vld [vmem:[%s236 + $0x1c] sm:$0xf]
      %v259 = vld [vmem:[%s236 + $0x20] sm:$0xf]
      %v260 = vld [vmem:[%s236 + $0x24] sm:$0xf]
      %v261 = vld [vmem:[%s236 + $0x28] sm:$0xf]
      %v262 = vld [vmem:[%s236 + $0x2c] sm:$0xf]
      %v263 = vld [vmem:[%s236 + $0x30] sm:$0xf]
      %v264 = vld [vmem:[%s236 + $0x34] sm:$0xf]
      %v265 = vld [vmem:[%s236 + $0x38] sm:$0xf]
      %v266 = vld [vmem:[%s236 + $0x3c] sm:$0xf]
      %v267 = vld [vmem:[%s236 + $0x40] sm:$0xf]
      %v268 = vld [vmem:[%s236 + $0x44] sm:$0xf]
      %v269 = vld [vmem:[%s236 + $0x48] sm:$0xf]
      %v270 = vld [vmem:[%s236 + $0x4c] sm:$0xf]
      %v271 = vld [vmem:[%s236 + $0x50] sm:$0xf]
      %v272 = vld [vmem:[%s236 + $0x54] sm:$0xf]
      %v273 = vld [vmem:[%s236 + $0x58] sm:$0xf]
      %v274 = vld [vmem:[%s236 + $0x5c] sm:$0xf]
      %v275 = vld [vmem:[%s236 + $0x60] sm:$0xf]
      %v276 = vld [vmem:[%s236 + $0x64] sm:$0xf]
      %v277 = vld [vmem:[%s236 + $0x68] sm:$0xf]
      %v278 = vld [vmem:[%s236 + $0x6c] sm:$0xf]
      %v279 = vld [vmem:[%s236 + $0x70] sm:$0xf]
      %v280 = vld [vmem:[%s236 + $0x74] sm:$0xf]
      %v281 = vld [vmem:[%s236 + $0x78] sm:$0xf]
      %v282 = vld [vmem:[%s236 + $0x7c] sm:$0xf]
      %v283 = vld [vmem:[%s242] sm:$0xf]
      %v284 = vld [vmem:[%s242 + $0x4] sm:$0xf]
      %v285 = vld [vmem:[%s242 + $0x8] sm:$0xf]
      %v286 = vld [vmem:[%s242 + $0xc] sm:$0xf]
      %v287 = vld [vmem:[%s242 + $0x10] sm:$0xf]
      %v288 = vld [vmem:[%s242 + $0x14] sm:$0xf]
      %v289 = vld [vmem:[%s242 + $0x18] sm:$0xf]
      %v290 = vld [vmem:[%s242 + $0x1c] sm:$0xf]
      %v291 = vld [vmem:[%s242 + $0x20] sm:$0xf]
      %v292 = vld [vmem:[%s242 + $0x24] sm:$0xf]
      %v293 = vld [vmem:[%s242 + $0x28] sm:$0xf]
      %v294 = vld [vmem:[%s242 + $0x2c] sm:$0xf]
      %v295 = vld [vmem:[%s242 + $0x30] sm:$0xf]
      %v296 = vld [vmem:[%s242 + $0x34] sm:$0xf]
      %v297 = vld [vmem:[%s242 + $0x38] sm:$0xf]
      %v298 = vld [vmem:[%s242 + $0x3c] sm:$0xf]
      %v299 = vld [vmem:[%s242 + $0x40] sm:$0xf]
      %v300 = vld [vmem:[%s242 + $0x44] sm:$0xf]
      %v301 = vld [vmem:[%s242 + $0x48] sm:$0xf]
      %v302 = vld [vmem:[%s242 + $0x4c] sm:$0xf]
      %v303 = vld [vmem:[%s242 + $0x50] sm:$0xf]
      %v304 = vld [vmem:[%s242 + $0x54] sm:$0xf]
      %v305 = vld [vmem:[%s242 + $0x58] sm:$0xf]
      %v306 = vld [vmem:[%s242 + $0x5c] sm:$0xf]
      %v307 = vld [vmem:[%s242 + $0x60] sm:$0xf]
      %v308 = vld [vmem:[%s242 + $0x64] sm:$0xf]
      %v309 = vld [vmem:[%s242 + $0x68] sm:$0xf]
      %v310 = vld [vmem:[%s242 + $0x6c] sm:$0xf]
      %v311 = vld [vmem:[%s242 + $0x70] sm:$0xf]
      %v312 = vld [vmem:[%s242 + $0x74] sm:$0xf]
      %v313 = vld [vmem:[%s242 + $0x78] sm:$0xf]
      %v314 = vld [vmem:[%s242 + $0x7c] sm:$0xf]
      %v347 = vunpack.c.l.b16 %v251
      %v348 = vunpack.c.l.b16 %v252
      %v349 = vunpack.c.l.b16 %v253
      %v350 = vunpack.c.l.b16 %v254
      %v351 = vunpack.c.l.b16 %v255
      %v352 = vunpack.c.l.b16 %v256
      %v353 = vunpack.c.l.b16 %v257
      %v354 = vunpack.c.l.b16 %v258
      %v355 = vunpack.c.l.b16 %v259
      %v356 = vunpack.c.l.b16 %v260
      %v357 = vunpack.c.l.b16 %v261
      %v358 = vunpack.c.l.b16 %v262
      %v359 = vunpack.c.l.b16 %v263
      %v360 = vunpack.c.l.b16 %v264
      %v361 = vunpack.c.l.b16 %v265
      %v362 = vunpack.c.l.b16 %v266
      %v363 = vunpack.c.l.b16 %v267
      %v364 = vunpack.c.l.b16 %v268
      %v365 = vunpack.c.l.b16 %v269
      %v366 = vunpack.c.l.b16 %v270
      %v367 = vunpack.c.l.b16 %v271
      %v368 = vunpack.c.l.b16 %v272
      %v369 = vunpack.c.l.b16 %v273
      %v370 = vunpack.c.l.b16 %v274
      %v371 = vunpack.c.l.b16 %v275
      %v372 = vunpack.c.l.b16 %v276
      %v373 = vunpack.c.l.b16 %v277
      %v374 = vunpack.c.l.b16 %v278
      %v375 = vunpack.c.l.b16 %v279
      %v376 = vunpack.c.l.b16 %v280
      %v377 = vunpack.c.l.b16 %v281
      %v378 = vunpack.c.l.b16 %v282
      %v379 = vpack.c.b16 %v348, %v347
      %v380 = vpack.c.b16 %v350, %v349
      %v381 = vpack.c.b16 %v352, %v351
      %v382 = vpack.c.b16 %v354, %v353
      %v383 = vpack.c.b16 %v356, %v355
      %v384 = vpack.c.b16 %v358, %v357
      %v385 = vpack.c.b16 %v360, %v359
      %v386 = vpack.c.b16 %v362, %v361
      %v387 = vpack.c.b16 %v364, %v363
      %v388 = vpack.c.b16 %v366, %v365
      %v389 = vpack.c.b16 %v368, %v367
      %v390 = vpack.c.b16 %v370, %v369
      %v391 = vpack.c.b16 %v372, %v371
      %v392 = vpack.c.b16 %v374, %v373
      %v393 = vpack.c.b16 %v376, %v375
      %v394 = vpack.c.b16 %v378, %v377
      %v443 = vunpack.c.l.b16 %v283
      %v444 = vunpack.c.l.b16 %v284
      %v445 = vunpack.c.l.b16 %v285
      %v446 = vunpack.c.l.b16 %v286
      %v447 = vunpack.c.l.b16 %v287
      %v448 = vunpack.c.l.b16 %v288
      %v449 = vunpack.c.l.b16 %v289
      %v450 = vunpack.c.l.b16 %v290
      %v451 = vunpack.c.l.b16 %v291
      %v452 = vunpack.c.l.b16 %v292
      %v453 = vunpack.c.l.b16 %v293
      %v454 = vunpack.c.l.b16 %v294
      %v455 = vunpack.c.l.b16 %v295
      %v456 = vunpack.c.l.b16 %v296
      %v457 = vunpack.c.l.b16 %v297
      %v458 = vunpack.c.l.b16 %v298
      %v459 = vunpack.c.l.b16 %v299
      %v460 = vunpack.c.l.b16 %v300
      %v461 = vunpack.c.l.b16 %v301
      %v462 = vunpack.c.l.b16 %v302
      %v463 = vunpack.c.l.b16 %v303
      %v464 = vunpack.c.l.b16 %v304
      %v465 = vunpack.c.l.b16 %v305
      %v466 = vunpack.c.l.b16 %v306
      %v467 = vunpack.c.l.b16 %v307
      %v468 = vunpack.c.l.b16 %v308
      %v469 = vunpack.c.l.b16 %v309
      %v470 = vunpack.c.l.b16 %v310
      %v471 = vunpack.c.l.b16 %v311
      %v472 = vunpack.c.l.b16 %v312
      %v473 = vunpack.c.l.b16 %v313
      %v474 = vunpack.c.l.b16 %v314
      %v475 = vpack.c.b16 %v444, %v443
      %v476 = vpack.c.b16 %v446, %v445
      %v477 = vpack.c.b16 %v448, %v447
      %v478 = vpack.c.b16 %v450, %v449
      %v479 = vpack.c.b16 %v452, %v451
      %v480 = vpack.c.b16 %v454, %v453
      %v481 = vpack.c.b16 %v456, %v455
      %v482 = vpack.c.b16 %v458, %v457
      %v483 = vpack.c.b16 %v460, %v459
      %v484 = vpack.c.b16 %v462, %v461
      %v485 = vpack.c.b16 %v464, %v463
      %v486 = vpack.c.b16 %v466, %v465
      %v487 = vpack.c.b16 %v468, %v467
      %v488 = vpack.c.b16 %v470, %v469
      %v489 = vpack.c.b16 %v472, %v471
      %v490 = vpack.c.b16 %v474, %v473
      %v507 = vld [vmem:[%s2] sm:$0xf]
      %v508 = vld [vmem:[%s2 + $0x4] sm:$0xf]
      %v509 = vld [vmem:[%s2 + $0x8] sm:$0xf]
      %v510 = vld [vmem:[%s2 + $0xc] sm:$0xf]
      %v511 = vld [vmem:[%s2 + $0x10] sm:$0xf]
      %v512 = vld [vmem:[%s2 + $0x14] sm:$0xf]
      %v513 = vld [vmem:[%s2 + $0x18] sm:$0xf]
      %v514 = vld [vmem:[%s2 + $0x1c] sm:$0xf]
      %v515 = vld [vmem:[%s2 + $0x20] sm:$0xf]
      %v516 = vld [vmem:[%s2 + $0x24] sm:$0xf]
      %v517 = vld [vmem:[%s2 + $0x28] sm:$0xf]
      %v518 = vld [vmem:[%s2 + $0x2c] sm:$0xf]
      %v519 = vld [vmem:[%s2 + $0x30] sm:$0xf]
      %v520 = vld [vmem:[%s2 + $0x34] sm:$0xf]
      %v521 = vld [vmem:[%s2 + $0x38] sm:$0xf]
      %v522 = vld [vmem:[%s2 + $0x3c] sm:$0xf]
      %v523 = vld [vmem:[%s2 + $0x40] sm:$0xf]
      %v524 = vld [vmem:[%s2 + $0x44] sm:$0xf]
      %v525 = vld [vmem:[%s2 + $0x48] sm:$0xf]
      %v526 = vld [vmem:[%s2 + $0x4c] sm:$0xf]
      %v527 = vld [vmem:[%s2 + $0x50] sm:$0xf]
      %v528 = vld [vmem:[%s2 + $0x54] sm:$0xf]
      %v529 = vld [vmem:[%s2 + $0x58] sm:$0xf]
      %v530 = vld [vmem:[%s2 + $0x5c] sm:$0xf]
      %v531 = vld [vmem:[%s2 + $0x60] sm:$0xf]
      %v532 = vld [vmem:[%s2 + $0x64] sm:$0xf]
      %v533 = vld [vmem:[%s2 + $0x68] sm:$0xf]
      %v534 = vld [vmem:[%s2 + $0x6c] sm:$0xf]
      %v535 = vld [vmem:[%s2 + $0x70] sm:$0xf]
      %v536 = vld [vmem:[%s2 + $0x74] sm:$0xf]
      %v537 = vld [vmem:[%s2 + $0x78] sm:$0xf]
      %v538 = vld [vmem:[%s2 + $0x7c] sm:$0xf]
      %v571 = vunpack.c.l.b16 %v507
      %v572 = vunpack.c.l.b16 %v508
      %v573 = vunpack.c.l.b16 %v509
      %v574 = vunpack.c.l.b16 %v510
      %v575 = vunpack.c.l.b16 %v511
      %v576 = vunpack.c.l.b16 %v512
      %v577 = vunpack.c.l.b16 %v513
      %v578 = vunpack.c.l.b16 %v514
      %v579 = vunpack.c.l.b16 %v515
      %v580 = vunpack.c.l.b16 %v516
      %v581 = vunpack.c.l.b16 %v517
      %v582 = vunpack.c.l.b16 %v518
      %v583 = vunpack.c.l.b16 %v519
      %v584 = vunpack.c.l.b16 %v520
      %v585 = vunpack.c.l.b16 %v521
      %v586 = vunpack.c.l.b16 %v522
      %v587 = vunpack.c.l.b16 %v523
      %v588 = vunpack.c.l.b16 %v524
      %v589 = vunpack.c.l.b16 %v525
      %v590 = vunpack.c.l.b16 %v526
      %v591 = vunpack.c.l.b16 %v527
      %v592 = vunpack.c.l.b16 %v528
      %v593 = vunpack.c.l.b16 %v529
      %v594 = vunpack.c.l.b16 %v530
      %v595 = vunpack.c.l.b16 %v531
      %v596 = vunpack.c.l.b16 %v532
      %v597 = vunpack.c.l.b16 %v533
      %v598 = vunpack.c.l.b16 %v534
      %v599 = vunpack.c.l.b16 %v535
      %v600 = vunpack.c.l.b16 %v536
      %v601 = vunpack.c.l.b16 %v537
      %v602 = vunpack.c.l.b16 %v538
      %v603 = vpack.c.b16 %v572, %v571
      %v604 = vpack.c.b16 %v574, %v573
      %v605 = vpack.c.b16 %v576, %v575
      %v606 = vpack.c.b16 %v578, %v577
      %v607 = vpack.c.b16 %v580, %v579
      %v608 = vpack.c.b16 %v582, %v581
      %v609 = vpack.c.b16 %v584, %v583
      %v610 = vpack.c.b16 %v586, %v585
      %v611 = vpack.c.b16 %v588, %v587
      %v612 = vpack.c.b16 %v590, %v589
      %v613 = vpack.c.b16 %v592, %v591
      %v614 = vpack.c.b16 %v594, %v593
      %v615 = vpack.c.b16 %v596, %v595
      %v616 = vpack.c.b16 %v598, %v597
      %v617 = vpack.c.b16 %v600, %v599
      %v618 = vpack.c.b16 %v602, %v601
      %635 = vmatprep.subr.bf16.mxu0 0
      %636 = vmatpush1.bf16.msra.mxu0 %v603
      %637 = vmatprep.subr.bf16.mxu0 0
      %638 = vmatpush1.bf16.msra.mxu0 %v604
      %639 = vmatprep.subr.bf16.mxu0 0
      %640 = vmatpush1.bf16.msra.mxu0 %v605
      %641 = vmatprep.subr.bf16.mxu0 0
      %642 = vmatpush1.bf16.msra.mxu0 %v606
      %643 = vmatprep.subr.bf16.mxu0 0
      %644 = vmatpush1.bf16.msra.mxu0 %v607
      %645 = vmatprep.subr.bf16.mxu0 0
      %646 = vmatpush1.bf16.msra.mxu0 %v608
      %647 = vmatprep.subr.bf16.mxu0 0
      %648 = vmatpush1.bf16.msra.mxu0 %v609
      %649 = vmatprep.subr.bf16.mxu0 0
      %650 = vmatpush1.bf16.msra.mxu0 %v610
      %651 = vmatprep.subr.bf16.mxu0 0
      %652 = vmatpush1.bf16.msra.mxu0 %v611
      %653 = vmatprep.subr.bf16.mxu0 0
      %654 = vmatpush1.bf16.msra.mxu0 %v612
      %655 = vmatprep.subr.bf16.mxu0 0
      %656 = vmatpush1.bf16.msra.mxu0 %v613
      %657 = vmatprep.subr.bf16.mxu0 0
      %658 = vmatpush1.bf16.msra.mxu0 %v614
      %659 = vmatprep.subr.bf16.mxu0 0
      %660 = vmatpush1.bf16.msra.mxu0 %v615
      %661 = vmatprep.subr.bf16.mxu0 0
      %662 = vmatpush1.bf16.msra.mxu0 %v616
      %663 = vmatprep.subr.bf16.mxu0 0
      %664 = vmatpush1.bf16.msra.mxu0 %v617
      %665 = vmatprep.subr.bf16.mxu0 0
      %666 = vmatpush1.bf16.msra.mxu0 %v618
      %667 = vmatprep.mubr.bf16.mxu0 %v475
      %668 = vmatmul.mubr.bf16.gmra.mrb[0].mxu0 %v379
      %v669 = vpop.f32.mrb[0].mxu0
      %v670 = vadd.f32 0.0, %v669
      %v671 = vpop.f32.mrb[0].mxu0
      %v672 = vpop.f32.mrb[0].mxu0
      %v673 = vadd.f32 0.0, %v672
      %v674 = vpop.f32.mrb[0].mxu0
      %675 = vmatprep.mubr.bf16.mxu0 %v476
      %676 = vmatmul.mubr.bf16.gmra.mrb[0].mxu0 %v380
      %v677 = vpop.f32.mrb[0].mxu0
      %v678 = vadd.f32 0.0, %v677
      %v679 = vpop.f32.mrb[0].mxu0
      %v680 = vpop.f32.mrb[0].mxu0
      %v681 = vadd.f32 0.0, %v680
      %v682 = vpop.f32.mrb[0].mxu0
      %683 = vmatprep.mubr.bf16.mxu0 %v477
      %684 = vmatmul.mubr.bf16.gmra.mrb[0].mxu0 %v381
      %v685 = vpop.f32.mrb[0].mxu0
      %v686 = vadd.f32 0.0, %v685
      %v687 = vpop.f32.mrb[0].mxu0
      %v688 = vpop.f32.mrb[0].mxu0
      %v689 = vadd.f32 0.0, %v688
      %v690 = vpop.f32.mrb[0].mxu0
      %691 = vmatprep.mubr.bf16.mxu0 %v478
      %692 = vmatmul.mubr.bf16.gmra.mrb[0].mxu0 %v382
      %v693 = vpop.f32.mrb[0].mxu0
      %v694 = vadd.f32 0.0, %v693
      %v695 = vpop.f32.mrb[0].mxu0
      %v696 = vpop.f32.mrb[0].mxu0
      %v697 = vadd.f32 0.0, %v696
      %v698 = vpop.f32.mrb[0].mxu0
      %699 = vmatprep.mubr.bf16.mxu0 %v479
      %700 = vmatmul.mubr.bf16.gmra.mrb[0].mxu0 %v383
      %v701 = vpop.f32.mrb[0].mxu0
      %v702 = vadd.f32 0.0, %v701
      %v703 = vpop.f32.mrb[0].mxu0
      %v704 = vpop.f32.mrb[0].mxu0
      %v705 = vadd.f32 0.0, %v704
      %v706 = vpop.f32.mrb[0].mxu0
      %707 = vmatprep.mubr.bf16.mxu0 %v480
      %708 = vmatmul.mubr.bf16.gmra.mrb[0].mxu0 %v384
      %v709 = vpop.f32.mrb[0].mxu0
      %v710 = vadd.f32 0.0, %v709
      %v711 = vpop.f32.mrb[0].mxu0
      %v712 = vpop.f32.mrb[0].mxu0
      %v713 = vadd.f32 0.0, %v712
      %v714 = vpop.f32.mrb[0].mxu0
      %715 = vmatprep.mubr.bf16.mxu0 %v481
      %716 = vmatmul.mubr.bf16.gmra.mrb[0].mxu0 %v385
      %v717 = vpop.f32.mrb[0].mxu0
      %v718 = vadd.f32 0.0, %v717
      %v719 = vpop.f32.mrb[0].mxu0
      %v720 = vpop.f32.mrb[0].mxu0
      %v721 = vadd.f32 0.0, %v720
      %v722 = vpop.f32.mrb[0].mxu0
      %723 = vmatprep.mubr.bf16.mxu0 %v482
      %724 = vmatmul.mubr.bf16.gmra.mrb[0].mxu0 %v386
      %v725 = vpop.f32.mrb[0].mxu0
      %v726 = vadd.f32 0.0, %v725
      %v727 = vpop.f32.mrb[0].mxu0
      %v728 = vpop.f32.mrb[0].mxu0
      %v729 = vadd.f32 0.0, %v728
      %v730 = vpop.f32.mrb[0].mxu0
      %731 = vmatprep.mubr.bf16.mxu0 %v483
      %732 = vmatmul.mubr.bf16.gmra.mrb[0].mxu0 %v387
      %v733 = vpop.f32.mrb[0].mxu0
      %v734 = vadd.f32 0.0, %v733
      %v735 = vpop.f32.mrb[0].mxu0
      %v736 = vpop.f32.mrb[0].mxu0
      %v737 = vadd.f32 0.0, %v736
      %v738 = vpop.f32.mrb[0].mxu0
      %739 = vmatprep.mubr.bf16.mxu0 %v484
      %740 = vmatmul.mubr.bf16.gmra.mrb[0].mxu0 %v388
      %v741 = vpop.f32.mrb[0].mxu0
      %v742 = vadd.f32 0.0, %v741
      %v743 = vpop.f32.mrb[0].mxu0
      %v744 = vpop.f32.mrb[0].mxu0
      %v745 = vadd.f32 0.0, %v744
      %v746 = vpop.f32.mrb[0].mxu0
      %747 = vmatprep.mubr.bf16.mxu0 %v485
      %748 = vmatmul.mubr.bf16.gmra.mrb[0].mxu0 %v389
      %v749 = vpop.f32.mrb[0].mxu0
      %v750 = vadd.f32 0.0, %v749
      %v751 = vpop.f32.mrb[0].mxu0
      %v752 = vpop.f32.mrb[0].mxu0
      %v753 = vadd.f32 0.0, %v752
      %v754 = vpop.f32.mrb[0].mxu0
      %755 = vmatprep.mubr.bf16.mxu0 %v486
      %756 = vmatmul.mubr.bf16.gmra.mrb[0].mxu0 %v390
      %v757 = vpop.f32.mrb[0].mxu0
      %v758 = vadd.f32 0.0, %v757
      %v759 = vpop.f32.mrb[0].mxu0
      %v760 = vpop.f32.mrb[0].mxu0
      %v761 = vadd.f32 0.0, %v760
      %v762 = vpop.f32.mrb[0].mxu0
      %763 = vmatprep.mubr.bf16.mxu0 %v487
      %764 = vmatmul.mubr.bf16.gmra.mrb[0].mxu0 %v391
      %v765 = vpop.f32.mrb[0].mxu0
      %v766 = vadd.f32 0.0, %v765
      %v767 = vpop.f32.mrb[0].mxu0
      %v768 = vpop.f32.mrb[0].mxu0
      %v769 = vadd.f32 0.0, %v768
      %v770 = vpop.f32.mrb[0].mxu0
      %771 = vmatprep.mubr.bf16.mxu0 %v488
      %772 = vmatmul.mubr.bf16.gmra.mrb[0].mxu0 %v392
      %v773 = vpop.f32.mrb[0].mxu0
      %v774 = vadd.f32 0.0, %v773
      %v775 = vpop.f32.mrb[0].mxu0
      %v776 = vpop.f32.mrb[0].mxu0
      %v777 = vadd.f32 0.0, %v776
      %v778 = vpop.f32.mrb[0].mxu0
      %779 = vmatprep.mubr.bf16.mxu0 %v489
      %780 = vmatmul.mubr.bf16.gmra.mrb[0].mxu0 %v393
      %v781 = vpop.f32.mrb[0].mxu0
      %v782 = vadd.f32 0.0, %v781
      %v783 = vpop.f32.mrb[0].mxu0
      %v784 = vpop.f32.mrb[0].mxu0
      %v785 = vadd.f32 0.0, %v784
      %v786 = vpop.f32.mrb[0].mxu0
      %787 = vmatprep.mubr.bf16.mxu0 %v490
      %788 = vmatmul.mubr.bf16.gmra.mrb[0].mxu0 %v394
      %v789 = vpop.f32.mrb[0].mxu0
      %v790 = vadd.f32 0.0, %v789
      %v791 = vpop.f32.mrb[0].mxu0
      %v792 = vpop.f32.mrb[0].mxu0
      %v793 = vadd.f32 0.0, %v792
      %v794 = vpop.f32.mrb[0].mxu0
      %795 = vdwg.mxu0
      %v796 = vld [vmem:[%s3] sm:$0x1]
      %v798 = vlaneseq
      %v799 = vshrl.u32 %v798, 7
      %v800 = vsub.s32 0, %v799
      %v801 = vrot.slane %v796, %v800
      %v803 = vmul.f32 %v670, %v801
      %v804 = vmul.f32 %v673, %v801
      %v805 = vmul.f32 %v678, %v801
      %v806 = vmul.f32 %v681, %v801
      %v807 = vmul.f32 %v686, %v801
      %v808 = vmul.f32 %v689, %v801
      %v809 = vmul.f32 %v694, %v801
      %v810 = vmul.f32 %v697, %v801
      %v811 = vmul.f32 %v702, %v801
      %v812 = vmul.f32 %v705, %v801
      %v813 = vmul.f32 %v710, %v801
      %v814 = vmul.f32 %v713, %v801
      %v815 = vmul.f32 %v718, %v801
      %v816 = vmul.f32 %v721, %v801
      %v817 = vmul.f32 %v726, %v801
      %v818 = vmul.f32 %v729, %v801
      %v819 = vmul.f32 %v734, %v801
      %v820 = vmul.f32 %v737, %v801
      %v821 = vmul.f32 %v742, %v801
      %v822 = vmul.f32 %v745, %v801
      %v823 = vmul.f32 %v750, %v801
      %v824 = vmul.f32 %v753, %v801
      %v825 = vmul.f32 %v758, %v801
      %v826 = vmul.f32 %v761, %v801
      %v827 = vmul.f32 %v766, %v801
      %v828 = vmul.f32 %v769, %v801
      %v829 = vmul.f32 %v774, %v801
      %v830 = vmul.f32 %v777, %v801
      %v831 = vmul.f32 %v782, %v801
      %v832 = vmul.f32 %v785, %v801
      %v833 = vmul.f32 %v790, %v801
      %v834 = vmul.f32 %v793, %v801
      %v835 = vld [vmem:[%s4] sm:$0x1]
      %v837 = vlaneseq
      %v838 = vshrl.u32 %v837, 7
      %v839 = vsub.s32 0, %v838
      %v840 = vrot.slane %v835, %v839
      %v842 = vadd.f32 %v803, %v840
      %v843 = vadd.f32 %v804, %v840
      %v844 = vadd.f32 %v805, %v840
      %v845 = vadd.f32 %v806, %v840
      %v846 = vadd.f32 %v807, %v840
      %v847 = vadd.f32 %v808, %v840
      %v848 = vadd.f32 %v809, %v840
      %v849 = vadd.f32 %v810, %v840
      %v850 = vadd.f32 %v811, %v840
      %v851 = vadd.f32 %v812, %v840
      %v852 = vadd.f32 %v813, %v840
      %v853 = vadd.f32 %v814, %v840
      %v854 = vadd.f32 %v815, %v840
      %v855 = vadd.f32 %v816, %v840
      %v856 = vadd.f32 %v817, %v840
      %v857 = vadd.f32 %v818, %v840
      %v858 = vadd.f32 %v819, %v840
      %v859 = vadd.f32 %v820, %v840
      %v860 = vadd.f32 %v821, %v840
      %v861 = vadd.f32 %v822, %v840
      %v862 = vadd.f32 %v823, %v840
      %v863 = vadd.f32 %v824, %v840
      %v864 = vadd.f32 %v825, %v840
      %v865 = vadd.f32 %v826, %v840
      %v866 = vadd.f32 %v827, %v840
      %v867 = vadd.f32 %v828, %v840
      %v868 = vadd.f32 %v829, %v840
      %v869 = vadd.f32 %v830, %v840
      %v870 = vadd.f32 %v831, %v840
      %v871 = vadd.f32 %v832, %v840
      %v872 = vadd.f32 %v833, %v840
      %v873 = vadd.f32 %v834, %v840
      %v874 = vsub.f32 0.0, %v842
      %v875 = vsub.f32 0.0, %v843
      %v876 = vsub.f32 0.0, %v844
      %v877 = vsub.f32 0.0, %v845
      %v878 = vsub.f32 0.0, %v846
      %v879 = vsub.f32 0.0, %v847
      %v880 = vsub.f32 0.0, %v848
      %v881 = vsub.f32 0.0, %v849
      %v882 = vsub.f32 0.0, %v850
      %v883 = vsub.f32 0.0, %v851
      %v884 = vsub.f32 0.0, %v852
      %v885 = vsub.f32 0.0, %v853
      %v886 = vsub.f32 0.0, %v854
      %v887 = vsub.f32 0.0, %v855
      %v888 = vsub.f32 0.0, %v856
      %v889 = vsub.f32 0.0, %v857
      %v890 = vsub.f32 0.0, %v858
      %v891 = vsub.f32 0.0, %v859
      %v892 = vsub.f32 0.0, %v860
      %v893 = vsub.f32 0.0, %v861
      %v894 = vsub.f32 0.0, %v862
      %v895 = vsub.f32 0.0, %v863
      %v896 = vsub.f32 0.0, %v864
      %v897 = vsub.f32 0.0, %v865
      %v898 = vsub.f32 0.0, %v866
      %v899 = vsub.f32 0.0, %v867
      %v900 = vsub.f32 0.0, %v868
      %v901 = vsub.f32 0.0, %v869
      %v902 = vsub.f32 0.0, %v870
      %v903 = vsub.f32 0.0, %v871
      %v904 = vsub.f32 0.0, %v872
      %v905 = vsub.f32 0.0, %v873
      %v906 = vmul.f32 %v874, 1.442695
      %v907 = vpow.pop %v906
      %v908 = vmul.f32 %v875, 1.442695
      %v909 = vpow.pop %v908
      %v910 = vmul.f32 %v876, 1.442695
      %v911 = vpow.pop %v910
      %v912 = vmul.f32 %v877, 1.442695
      %v913 = vpow.pop %v912
      %v914 = vmul.f32 %v878, 1.442695
      %v915 = vpow.pop %v914
      %v916 = vmul.f32 %v879, 1.442695
      %v917 = vpow.pop %v916
      %v918 = vmul.f32 %v880, 1.442695
      %v919 = vpow.pop %v918
      %v920 = vmul.f32 %v881, 1.442695
      %v921 = vpow.pop %v920
      %v922 = vmul.f32 %v882, 1.442695
      %v923 = vpow.pop %v922
      %v924 = vmul.f32 %v883, 1.442695
      %v925 = vpow.pop %v924
      %v926 = vmul.f32 %v884, 1.442695
      %v927 = vpow.pop %v926
      %v928 = vmul.f32 %v885, 1.442695
      %v929 = vpow.pop %v928
      %v930 = vmul.f32 %v886, 1.442695
      %v931 = vpow.pop %v930
      %v932 = vmul.f32 %v887, 1.442695
      %v933 = vpow.pop %v932
      %v934 = vmul.f32 %v888, 1.442695
      %v935 = vpow.pop %v934
      %v936 = vmul.f32 %v889, 1.442695
      %v937 = vpow.pop %v936
      %v938 = vmul.f32 %v890, 1.442695
      %v939 = vpow.pop %v938
      %v940 = vmul.f32 %v891, 1.442695
      %v941 = vpow.pop %v940
      %v942 = vmul.f32 %v892, 1.442695
      %v943 = vpow.pop %v942
      %v944 = vmul.f32 %v893, 1.442695
      %v945 = vpow.pop %v944
      %v946 = vmul.f32 %v894, 1.442695
      %v947 = vpow.pop %v946
      %v948 = vmul.f32 %v895, 1.442695
      %v949 = vpow.pop %v948
      %v950 = vmul.f32 %v896, 1.442695
      %v951 = vpow.pop %v950
      %v952 = vmul.f32 %v897, 1.442695
      %v953 = vpow.pop %v952
      %v954 = vmul.f32 %v898, 1.442695
      %v955 = vpow.pop %v954
      %v956 = vmul.f32 %v899, 1.442695
      %v957 = vpow.pop %v956
      %v958 = vmul.f32 %v900, 1.442695
      %v959 = vpow.pop %v958
      %v960 = vmul.f32 %v901, 1.442695
      %v961 = vpow.pop %v960
      %v962 = vmul.f32 %v902, 1.442695
      %v963 = vpow.pop %v962
      %v964 = vmul.f32 %v903, 1.442695
      %v965 = vpow.pop %v964
      %v966 = vmul.f32 %v904, 1.442695
      %v967 = vpow.pop %v966
      %v968 = vmul.f32 %v905, 1.442695
      %v969 = vpow.pop %v968
      %v970 = vadd.f32 %v907, 1.0
      %v971 = vadd.f32 %v909, 1.0
      %v972 = vadd.f32 %v911, 1.0
      %v973 = vadd.f32 %v913, 1.0
      %v974 = vadd.f32 %v915, 1.0
      %v975 = vadd.f32 %v917, 1.0
      %v976 = vadd.f32 %v919, 1.0
      %v977 = vadd.f32 %v921, 1.0
      %v978 = vadd.f32 %v923, 1.0
      %v979 = vadd.f32 %v925, 1.0
      %v980 = vadd.f32 %v927, 1.0
      %v981 = vadd.f32 %v929, 1.0
      %v982 = vadd.f32 %v931, 1.0
      %v983 = vadd.f32 %v933, 1.0
      %v984 = vadd.f32 %v935, 1.0
      %v985 = vadd.f32 %v937, 1.0
      %v986 = vadd.f32 %v939, 1.0
      %v987 = vadd.f32 %v941, 1.0
      %v988 = vadd.f32 %v943, 1.0
      %v989 = vadd.f32 %v945, 1.0
      %v990 = vadd.f32 %v947, 1.0
      %v991 = vadd.f32 %v949, 1.0
      %v992 = vadd.f32 %v951, 1.0
      %v993 = vadd.f32 %v953, 1.0
      %v994 = vadd.f32 %v955, 1.0
      %v995 = vadd.f32 %v957, 1.0
      %v996 = vadd.f32 %v959, 1.0
      %v997 = vadd.f32 %v961, 1.0
      %v998 = vadd.f32 %v963, 1.0
      %v999 = vadd.f32 %v965, 1.0
      %v1000 = vadd.f32 %v967, 1.0
      %v1001 = vadd.f32 %v969, 1.0
      %v1002 = vrcp.pop %v970
      %v1003 = vrcp.pop %v971
      %v1004 = vrcp.pop %v972
      %v1005 = vrcp.pop %v973
      %v1006 = vrcp.pop %v974
      %v1007 = vrcp.pop %v975
      %v1008 = vrcp.pop %v976
      %v1009 = vrcp.pop %v977
      %v1010 = vrcp.pop %v978
      %v1011 = vrcp.pop %v979
      %v1012 = vrcp.pop %v980
      %v1013 = vrcp.pop %v981
      %v1014 = vrcp.pop %v982
      %v1015 = vrcp.pop %v983
      %v1016 = vrcp.pop %v984
      %v1017 = vrcp.pop %v985
      %v1018 = vrcp.pop %v986
      %v1019 = vrcp.pop %v987
      %v1020 = vrcp.pop %v988
      %v1021 = vrcp.pop %v989
      %v1022 = vrcp.pop %v990
      %v1023 = vrcp.pop %v991
      %v1024 = vrcp.pop %v992
      %v1025 = vrcp.pop %v993
      %v1026 = vrcp.pop %v994
      %v1027 = vrcp.pop %v995
      %v1028 = vrcp.pop %v996
      %v1029 = vrcp.pop %v997
      %v1030 = vrcp.pop %v998
      %v1031 = vrcp.pop %v999
      %v1032 = vrcp.pop %v1000
      %v1033 = vrcp.pop %v1001
      %v1034 = vmul.f32 %v842, %v1002
      %v1035 = vmul.f32 %v843, %v1003
      %v1036 = vmul.f32 %v844, %v1004
      %v1037 = vmul.f32 %v845, %v1005
      %v1038 = vmul.f32 %v846, %v1006
      %v1039 = vmul.f32 %v847, %v1007
      %v1040 = vmul.f32 %v848, %v1008
      %v1041 = vmul.f32 %v849, %v1009
      %v1042 = vmul.f32 %v850, %v1010
      %v1043 = vmul.f32 %v851, %v1011
      %v1044 = vmul.f32 %v852, %v1012
      %v1045 = vmul.f32 %v853, %v1013
      %v1046 = vmul.f32 %v854, %v1014
      %v1047 = vmul.f32 %v855, %v1015
      %v1048 = vmul.f32 %v856, %v1016
      %v1049 = vmul.f32 %v857, %v1017
      %v1050 = vmul.f32 %v858, %v1018
      %v1051 = vmul.f32 %v859, %v1019
      %v1052 = vmul.f32 %v860, %v1020
      %v1053 = vmul.f32 %v861, %v1021
      %v1054 = vmul.f32 %v862, %v1022
      %v1055 = vmul.f32 %v863, %v1023
      %v1056 = vmul.f32 %v864, %v1024
      %v1057 = vmul.f32 %v865, %v1025
      %v1058 = vmul.f32 %v866, %v1026
      %v1059 = vmul.f32 %v867, %v1027
      %v1060 = vmul.f32 %v868, %v1028
      %v1061 = vmul.f32 %v869, %v1029
      %v1062 = vmul.f32 %v870, %v1030
      %v1063 = vmul.f32 %v871, %v1031
      %v1064 = vmul.f32 %v872, %v1032
      %v1065 = vmul.f32 %v873, %v1033
      %1066 = vst [vmem:[%s248] sm:$0xff] %v1034
      %1067 = vst [vmem:[%s248 + $0x8] sm:$0xff] %v1035
      %1068 = vst [vmem:[%s248 + $0x10] sm:$0xff] %v1036
      %1069 = vst [vmem:[%s248 + $0x18] sm:$0xff] %v1037
      %1070 = vst [vmem:[%s248 + $0x20] sm:$0xff] %v1038
      %1071 = vst [vmem:[%s248 + $0x28] sm:$0xff] %v1039
      %1072 = vst [vmem:[%s248 + $0x30] sm:$0xff] %v1040
      %1073 = vst [vmem:[%s248 + $0x38] sm:$0xff] %v1041
      %1074 = vst [vmem:[%s248 + $0x40] sm:$0xff] %v1042
      %1075 = vst [vmem:[%s248 + $0x48] sm:$0xff] %v1043
      %1076 = vst [vmem:[%s248 + $0x50] sm:$0xff] %v1044
      %1077 = vst [vmem:[%s248 + $0x58] sm:$0xff] %v1045
      %1078 = vst [vmem:[%s248 + $0x60] sm:$0xff] %v1046
      %1079 = vst [vmem:[%s248 + $0x68] sm:$0xff] %v1047
      %1080 = vst [vmem:[%s248 + $0x70] sm:$0xff] %v1048
      %1081 = vst [vmem:[%s248 + $0x78] sm:$0xff] %v1049
      %1082 = vst [vmem:[%s248 + $0x80] sm:$0xff] %v1050
      %1083 = vst [vmem:[%s248 + $0x88] sm:$0xff] %v1051
      %1084 = vst [vmem:[%s248 + $0x90] sm:$0xff] %v1052
      %1085 = vst [vmem:[%s248 + $0x98] sm:$0xff] %v1053
      %1086 = vst [vmem:[%s248 + $0xa0] sm:$0xff] %v1054
      %1087 = vst [vmem:[%s248 + $0xa8] sm:$0xff] %v1055
      %1088 = vst [vmem:[%s248 + $0xb0] sm:$0xff] %v1056
      %1089 = vst [vmem:[%s248 + $0xb8] sm:$0xff] %v1057
      %1090 = vst [vmem:[%s248 + $0xc0] sm:$0xff] %v1058
      %1091 = vst [vmem:[%s248 + $0xc8] sm:$0xff] %v1059
      %1092 = vst [vmem:[%s248 + $0xd0] sm:$0xff] %v1060
      %1093 = vst [vmem:[%s248 + $0xd8] sm:$0xff] %v1061
      %1094 = vst [vmem:[%s248 + $0xe0] sm:$0xff] %v1062
      %1095 = vst [vmem:[%s248 + $0xe8] sm:$0xff] %v1063
      %1096 = vst [vmem:[%s248 + $0xf0] sm:$0xff] %v1064
      %1097 = vst [vmem:[%s248 + $0xf8] sm:$0xff] %v1065
      %s1098 = smul.u32 32, %s16
      %p1099 = scmp.lt.s32.totalorder %s1098, 63
      %s1100 = scalar_select %p1099, %s1098, 63
      %s1101 = smul.addr %s1100, 8
      %s1102 = scalar_lea.vmem %s5, %s1101
      // Predicated region
      $region41: #{csp_layer_forward.5} parent=39 // pred_check
        %p1103 = pneg %p149
      $region42: #{csp_layer_forward.5} parent=39 // pred_check_branch
        %1105 = sbr.rel (%p1103) target = $region44
      $region43: #{csp_layer_forward.5} parent=39 // pred_region
        %s1106 = smul.u32 32, %s16
      $region44: #{csp_layer_forward.5} parent=39 // pred_fallthru
        _
    $region40: #{csp_layer_forward.5} parent=5 // pred_fallthru
      _
    %p1107 = scmp.le.s32.totalorder 2, %s11
    // Predicated region
    $region45: #{csp_layer_forward.5} parent=5 // pred_check
      %p1108 = pneg %p1107
    $region46: #{csp_layer_forward.5} parent=5 // pred_check_branch
      %1110 = sbr.rel (%p1108) target = $region48
    $region47: #{csp_layer_forward.5} parent=5 // pred_region
      %s1111 = ssub.s32 %s11, 2
      // Predicated region
      $region49: #{csp_layer_forward.5} parent=47 // pred_check
        %p1112 = pneg %p155
      $region50: #{csp_layer_forward.5} parent=47 // pred_check_branch
        %1114 = sbr.rel (%p1112) target = $region52
      $region51: #{csp_layer_forward.5} parent=47 // pred_region
        %s1115 = smul.u32 32, %s17
        %p1116 = scmp.lt.s32.totalorder %s1115, 63
        %s1117 = scalar_select %p1116, %s1115, 63
        %s1118 = smul.addr %s1117, 8
        %s1119 = scalar_lea.vmem %s5, %s1118
      $region52: #{csp_layer_forward.5} parent=47 // pred_fallthru
        _
    $region48: #{csp_layer_forward.5} parent=5 // pred_fallthru
      _
  $region6: #{csp_layer_forward.5} parent=0 // loop_footer
    %s15 = sadd.s32 1, %s11
  $region7: #{csp_layer_forward.5} parent=0 // loop_footer_branch
    %10 = sbr.rel target = $region3
  $region8: #{csp_layer_forward.5} parent=0 // loop_exit
    _

// kernel: csp_layer_forward.3
$region0: #{csp_layer_forward.3}
  #allocation0 [shape = 'u32[]', space=smem, size = 0x4, offset = 0x4, fixed_abs, tag = 'smem constant byte address 0x4 - core index']
  #allocation1 [shape = 'u32[144,128]{1,0:T(1,128)}', space=vmem, size = 0x12000, scoped, tag = 'internal scratch']
  %s0 = inlined_call_operand.vmem [shape: bf16[512,128], index: 0, kind: input, shape index: {}]
  %s1 = inlined_call_operand.vmem [shape: bf16[128,256], index: 1, kind: input, shape index: {}]
  %s2 = inlined_call_operand.vmem [shape: f32[1,256], index: 2, kind: input, shape index: {}]
  %s3 = inlined_call_operand.vmem [shape: f32[1,256], index: 3, kind: input, shape index: {}]
  %s4 = inlined_call_operand.vmem [shape: bf16[512,128], index: 4, kind: output, shape index: {0}]
  %s5 = inlined_call_operand.vmem [shape: bf16[512,128], index: 5, kind: output, shape index: {1}]
  %6 = xla_tuple %s4, %s5
  %s7 = sld [smem:[#allocation0]]
  $region57: #{csp_layer_forward.3} parent=0
    _
  %s9 = ssub.s32 1, %s7
  %s10 = scalar_select 0, %s9, %s7
  loop: start=0, step=1, limit=4
  $region2: #{csp_layer_forward.3} parent=0 // loop_pre_header
    _
  $region3: #{csp_layer_forward.3} parent=0 // loop_header
    %s12 = sphi 0, %s16
    %p13 = scmp.ge.s32.totalorder %s12, 4
    %s22 = sphi 0, %s24
    %s25 = sphi 0, %s22
    %s26 = sphi 0, %s25
    %s42 = sphi 0, %s26
    %s46 = sphi 0, %s46
    %s48 = sphi 0, %s46
    %s49 = sphi 0, %s48
    %s63 = sphi 0, %s49
    %s67 = sphi 0, %s67
    %s69 = sphi 0, %s67
    %s70 = sphi 0, %s69
    %s84 = sphi 0, %s70
    %s88 = sphi 0, %s88
    %s90 = sphi 0, %s88
    %s91 = sphi 0, %s90
    %s105 = sphi 0, %s91
    %s111 = sphi 0, %s113
    %s114 = sphi 0, %s111
    %s115 = sphi 0, %s114
    %s131 = sphi 0, %s115
    %s137 = sphi 0, %s139
    %s140 = sphi 0, %s137
    %s141 = sphi 0, %s140
    %s157 = sphi 0, %s141
  $region4: #{csp_layer_forward.3} parent=0 // loop_header_branch
    %15 = sbr.rel (%p13) target = $region8
  $region5: #{csp_layer_forward.3} parent=0 // loop_body
    %s17 = ssub.s32 %s12, 1
    %s18 = ssub.s32 %s12, 2
    %s19 = sadd.s32 %s12, 1
    %s20 = ssub.s32 %s12, %s19
    %p21 = scmp.eq.s32.totalorder %s20, 0
    %s23 = sadd.s32 %s22, 1
    %s24 = scalar_select %p21, %s22, %s23
    %p27 = pneg %p21
    %p28 = scmp.eq.s32.totalorder %s12, 1
    %p29 = por %p27, %p28
    %p30 = scmp.ne.s32.totalorder %s22, %s25
    %p31 = scmp.eq.s32.totalorder %s12, 0
    %p32 = por %p30, %p31
    %p33 = scmp.ne.s32.totalorder %s22, %s25
    %p34 = scmp.eq.s32.totalorder %s17, 1
    %p35 = por %p33, %p34
    %p36 = scmp.ne.s32.totalorder %s25, %s26
    %p37 = scmp.eq.s32.totalorder %s17, 0
    %p38 = por %p36, %p37
    %p39 = scmp.ne.s32.totalorder %s25, %s26
    %p40 = scmp.eq.s32.totalorder %s18, 1
    %p41 = por %p39, %p40
    %p43 = scmp.ne.s32.totalorder %s26, %s42
    %p44 = scmp.eq.s32.totalorder %s18, 0
    %p45 = por %p43, %p44
    %s47 = sadd.s32 %s46, 1
    %p50 = scmp.eq.s32.totalorder %s12, 1
    %p51 = scmp.ne.s32.totalorder %s46, %s48
    %p52 = scmp.eq.s32.totalorder %s12, 0
    %p53 = por %p51, %p52
    %p54 = scmp.ne.s32.totalorder %s46, %s48
    %p55 = scmp.eq.s32.totalorder %s17, 1
    %p56 = por %p54, %p55
    %p57 = scmp.ne.s32.totalorder %s48, %s49
    %p58 = scmp.eq.s32.totalorder %s17, 0
    %p59 = por %p57, %p58
    %p60 = scmp.ne.s32.totalorder %s48, %s49
    %p61 = scmp.eq.s32.totalorder %s18, 1
    %p62 = por %p60, %p61
    %p64 = scmp.ne.s32.totalorder %s49, %s63
    %p65 = scmp.eq.s32.totalorder %s18, 0
    %p66 = por %p64, %p65
    %s68 = sadd.s32 %s67, 1
    %p71 = scmp.eq.s32.totalorder %s12, 1
    %p72 = scmp.ne.s32.totalorder %s67, %s69
    %p73 = scmp.eq.s32.totalorder %s12, 0
    %p74 = por %p72, %p73
    %p75 = scmp.ne.s32.totalorder %s67, %s69
    %p76 = scmp.eq.s32.totalorder %s17, 1
    %p77 = por %p75, %p76
    %p78 = scmp.ne.s32.totalorder %s69, %s70
    %p79 = scmp.eq.s32.totalorder %s17, 0
    %p80 = por %p78, %p79
    %p81 = scmp.ne.s32.totalorder %s69, %s70
    %p82 = scmp.eq.s32.totalorder %s18, 1
    %p83 = por %p81, %p82
    %p85 = scmp.ne.s32.totalorder %s70, %s84
    %p86 = scmp.eq.s32.totalorder %s18, 0
    %p87 = por %p85, %p86
    %s89 = sadd.s32 %s88, 1
    %p92 = scmp.eq.s32.totalorder %s12, 1
    %p93 = scmp.ne.s32.totalorder %s88, %s90
    %p94 = scmp.eq.s32.totalorder %s12, 0
    %p95 = por %p93, %p94
    %p96 = scmp.ne.s32.totalorder %s88, %s90
    %p97 = scmp.eq.s32.totalorder %s17, 1
    %p98 = por %p96, %p97
    %p99 = scmp.ne.s32.totalorder %s90, %s91
    %p100 = scmp.eq.s32.totalorder %s17, 0
    %p101 = por %p99, %p100
    %p102 = scmp.ne.s32.totalorder %s90, %s91
    %p103 = scmp.eq.s32.totalorder %s18, 1
    %p104 = por %p102, %p103
    %p106 = scmp.ne.s32.totalorder %s91, %s105
    %p107 = scmp.eq.s32.totalorder %s18, 0
    %p108 = por %p106, %p107
    %s109 = ssub.s32 %s12, %s19
    %p110 = scmp.eq.s32.totalorder %s109, 0
    %s112 = sadd.s32 %s111, 1
    %s113 = scalar_select %p110, %s111, %s112
    %p116 = pneg %p110
    %p117 = scmp.eq.s32.totalorder %s12, 1
    %p118 = por %p116, %p117
    %p119 = scmp.ne.s32.totalorder %s111, %s114
    %p120 = scmp.eq.s32.totalorder %s12, 0
    %p121 = por %p119, %p120
    %p122 = scmp.ne.s32.totalorder %s111, %s114
    %p123 = scmp.eq.s32.totalorder %s17, 1
    %p124 = por %p122, %p123
    %p125 = scmp.ne.s32.totalorder %s114, %s115
    %p126 = scmp.eq.s32.totalorder %s17, 0
    %p127 = por %p125, %p126
    %p128 = scmp.ne.s32.totalorder %s114, %s115
    %p129 = scmp.eq.s32.totalorder %s18, 1
    %p130 = por %p128, %p129
    %p132 = scmp.ne.s32.totalorder %s115, %s131
    %p133 = scmp.eq.s32.totalorder %s18, 0
    %p134 = por %p132, %p133
    %s135 = ssub.s32 %s12, %s19
    %p136 = scmp.eq.s32.totalorder %s135, 0
    %s138 = sadd.s32 %s137, 1
    %s139 = scalar_select %p136, %s137, %s138
    %p142 = pneg %p136
    %p143 = scmp.eq.s32.totalorder %s12, 1
    %p144 = por %p142, %p143
    %p145 = scmp.ne.s32.totalorder %s137, %s140
    %p146 = scmp.eq.s32.totalorder %s12, 0
    %p147 = por %p145, %p146
    %p148 = scmp.ne.s32.totalorder %s137, %s140
    %p149 = scmp.eq.s32.totalorder %s17, 1
    %p150 = por %p148, %p149
    %p151 = scmp.ne.s32.totalorder %s140, %s141
    %p152 = scmp.eq.s32.totalorder %s17, 0
    %p153 = por %p151, %p152
    %p154 = scmp.ne.s32.totalorder %s140, %s141
    %p155 = scmp.eq.s32.totalorder %s18, 1
    %p156 = por %p154, %p155
    %p158 = scmp.ne.s32.totalorder %s141, %s157
    %p159 = scmp.eq.s32.totalorder %s18, 0
    %p160 = por %p158, %p159
    %p161 = scmp.le.s32.totalorder 1, %s12
    %p162 = scmp.lt.s32.totalorder %s12, 3
    %p163 = pnand %p161, %p162
    %p164 = pneg %p163
    // Predicated region
    $region9: #{csp_layer_forward.3} parent=5 // pred_check
      _
    $region10: #{csp_layer_forward.3} parent=5 // pred_check_branch
      %166 = sbr.rel (%p163) target = $region12
    $region11: #{csp_layer_forward.3} parent=5 // pred_region
      %s167 = ssub.s32 %s12, 1
      // Predicated region
      $region13: #{csp_layer_forward.3} parent=11 // pred_check
        %p168 = pneg %p59
      $region14: #{csp_layer_forward.3} parent=11 // pred_check_branch
        %170 = sbr.rel (%p168) target = $region16
      $region15: #{csp_layer_forward.3} parent=11 // pred_region
        _
      $region16: #{csp_layer_forward.3} parent=11 // pred_fallthru
        _
      // Predicated region
      $region17: #{csp_layer_forward.3} parent=11 // pred_check
        %p171 = pneg %p80
      $region18: #{csp_layer_forward.3} parent=11 // pred_check_branch
        %173 = sbr.rel (%p171) target = $region20
      $region19: #{csp_layer_forward.3} parent=11 // pred_region
        _
      $region20: #{csp_layer_forward.3} parent=11 // pred_fallthru
        _
      // Predicated region
      $region21: #{csp_layer_forward.3} parent=11 // pred_check
        %p174 = pneg %p101
      $region22: #{csp_layer_forward.3} parent=11 // pred_check_branch
        %176 = sbr.rel (%p174) target = $region24
      $region23: #{csp_layer_forward.3} parent=11 // pred_region
        _
      $region24: #{csp_layer_forward.3} parent=11 // pred_fallthru
        _
    $region12: #{csp_layer_forward.3} parent=5 // pred_fallthru
      _
    %p177 = scmp.lt.s32.totalorder %s12, 2
    // Predicated region
    $region25: #{csp_layer_forward.3} parent=5 // pred_check
      %p178 = pneg %p177
    $region26: #{csp_layer_forward.3} parent=5 // pred_check_branch
      %180 = sbr.rel (%p178) target = $region28
    $region27: #{csp_layer_forward.3} parent=5 // pred_region
      // Predicated region
      $region29: #{csp_layer_forward.3} parent=27 // pred_check
        %p181 = pneg %p32
      $region30: #{csp_layer_forward.3} parent=27 // pred_check_branch
        %183 = sbr.rel (%p181) target = $region32
      $region31: #{csp_layer_forward.3} parent=27 // pred_region
        %s184 = smul.u32 32, %s12
        %p185 = scmp.lt.s32.totalorder %s184, 63
        %s186 = scalar_select %p185, %s184, 63
        %s187 = smul.addr %s186, 4
        %s188 = scalar_lea.vmem %s0, %s187
        %s189 = smul.u32 32, %s12
      $region32: #{csp_layer_forward.3} parent=27 // pred_fallthru
        _
    $region28: #{csp_layer_forward.3} parent=5 // pred_fallthru
      _
    %p190 = scmp.le.s32.totalorder 1, %s12
    %p191 = scmp.lt.s32.totalorder %s12, 3
    %p192 = pnand %p190, %p191
    %p193 = pneg %p192
    // Predicated region
    $region33: #{csp_layer_forward.3} parent=5 // pred_check
      _
    $region34: #{csp_layer_forward.3} parent=5 // pred_check_branch
      %195 = sbr.rel (%p192) target = $region36
    $region35: #{csp_layer_forward.3} parent=5 // pred_region
      %s196 = ssub.s32 %s12, 1
      %s197 = smul.u32 32, %s17
      %p198 = scmp.lt.s32.totalorder %s197, 63
      %s199 = scalar_select %p198, %s197, 63
      %s200 = smul.addr %s199, 4
      %s201 = scalar_lea.vmem %s0, %s200
      %p202 = pneg %p38
      %p203 = pneg %p35
      %p204 = pneg %p59
      %p205 = pneg %p56
      %p206 = pneg %p80
      %p207 = pneg %p77
      %p208 = pneg %p101
      %p209 = pneg %p98
      %p210 = pneg %p127
      %p211 = pneg %p124
      %s212 = smul.u32 32, %s17
      %p213 = scmp.lt.s32.totalorder %s212, 63
      %s214 = scalar_select %p213, %s212, 63
      %s215 = smul.addr %s214, 4
      %s216 = scalar_lea.vmem %s4, %s215
      %p217 = pneg %p153
      %p218 = pneg %p150
      %s219 = smul.u32 32, %s17
      %p220 = scmp.lt.s32.totalorder %s219, 63
      %s221 = scalar_select %p220, %s219, 63
      %s222 = smul.addr %s221, 4
      %s223 = scalar_lea.vmem %s5, %s222
      %s224 = smul.u32 32, %s17
      %p225 = scmp.lt.s32.totalorder %s224, 63
      %s226 = scalar_select %p225, %s224, 63
      %s227 = smul.addr %s226, 4
      %s228 = scalar_lea.vmem %s0, %s227
      %s229 = smul.u32 32, %s17
      %s230 = smul.u32 32, %s17
      %p231 = scmp.lt.s32.totalorder %s230, 63
      %s232 = scalar_select %p231, %s230, 63
      %s233 = smul.addr %s232, 4
      %s234 = scalar_lea.vmem %s4, %s233
      %s235 = smul.u32 32, %s17
      %s236 = smul.u32 32, %s17
      %p237 = scmp.lt.s32.totalorder %s236, 63
      %s238 = scalar_select %p237, %s236, 63
      %s239 = smul.addr %s238, 4
      %s240 = scalar_lea.vmem %s5, %s239
      %s241 = smul.u32 32, %s17
      %v243 = vld [vmem:[%s228] sm:$0xf]
      %v244 = vld [vmem:[%s228 + $0x4] sm:$0xf]
      %v245 = vld [vmem:[%s228 + $0x8] sm:$0xf]
      %v246 = vld [vmem:[%s228 + $0xc] sm:$0xf]
      %v247 = vld [vmem:[%s228 + $0x10] sm:$0xf]
      %v248 = vld [vmem:[%s228 + $0x14] sm:$0xf]
      %v249 = vld [vmem:[%s228 + $0x18] sm:$0xf]
      %v250 = vld [vmem:[%s228 + $0x1c] sm:$0xf]
      %v251 = vld [vmem:[%s228 + $0x20] sm:$0xf]
      %v252 = vld [vmem:[%s228 + $0x24] sm:$0xf]
      %v253 = vld [vmem:[%s228 + $0x28] sm:$0xf]
      %v254 = vld [vmem:[%s228 + $0x2c] sm:$0xf]
      %v255 = vld [vmem:[%s228 + $0x30] sm:$0xf]
      %v256 = vld [vmem:[%s228 + $0x34] sm:$0xf]
      %v257 = vld [vmem:[%s228 + $0x38] sm:$0xf]
      %v258 = vld [vmem:[%s228 + $0x3c] sm:$0xf]
      %v259 = vld [vmem:[%s228 + $0x40] sm:$0xf]
      %v260 = vld [vmem:[%s228 + $0x44] sm:$0xf]
      %v261 = vld [vmem:[%s228 + $0x48] sm:$0xf]
      %v262 = vld [vmem:[%s228 + $0x4c] sm:$0xf]
      %v263 = vld [vmem:[%s228 + $0x50] sm:$0xf]
      %v264 = vld [vmem:[%s228 + $0x54] sm:$0xf]
      %v265 = vld [vmem:[%s228 + $0x58] sm:$0xf]
      %v266 = vld [vmem:[%s228 + $0x5c] sm:$0xf]
      %v267 = vld [vmem:[%s228 + $0x60] sm:$0xf]
      %v268 = vld [vmem:[%s228 + $0x64] sm:$0xf]
      %v269 = vld [vmem:[%s228 + $0x68] sm:$0xf]
      %v270 = vld [vmem:[%s228 + $0x6c] sm:$0xf]
      %v271 = vld [vmem:[%s228 + $0x70] sm:$0xf]
      %v272 = vld [vmem:[%s228 + $0x74] sm:$0xf]
      %v273 = vld [vmem:[%s228 + $0x78] sm:$0xf]
      %v274 = vld [vmem:[%s228 + $0x7c] sm:$0xf]
      %v275 = vld [vmem:[%s1] sm:$0xff]
      %v276 = vld [vmem:[%s1 + $0x8] sm:$0xff]
      %v277 = vld [vmem:[%s1 + $0x10] sm:$0xff]
      %v278 = vld [vmem:[%s1 + $0x18] sm:$0xff]
      %v279 = vld [vmem:[%s1 + $0x20] sm:$0xff]
      %v280 = vld [vmem:[%s1 + $0x28] sm:$0xff]
      %v281 = vld [vmem:[%s1 + $0x30] sm:$0xff]
      %v282 = vld [vmem:[%s1 + $0x38] sm:$0xff]
      %v283 = vld [vmem:[%s1 + $0x40] sm:$0xff]
      %v284 = vld [vmem:[%s1 + $0x48] sm:$0xff]
      %v285 = vld [vmem:[%s1 + $0x50] sm:$0xff]
      %v286 = vld [vmem:[%s1 + $0x58] sm:$0xff]
      %v287 = vld [vmem:[%s1 + $0x60] sm:$0xff]
      %v288 = vld [vmem:[%s1 + $0x68] sm:$0xff]
      %v289 = vld [vmem:[%s1 + $0x70] sm:$0xff]
      %v290 = vld [vmem:[%s1 + $0x78] sm:$0xff]
      %v323 = vunpack.c.l.b16 %v243
      %v324 = vunpack.c.l.b16 %v244
      %v325 = vunpack.c.l.b16 %v245
      %v326 = vunpack.c.l.b16 %v246
      %v327 = vunpack.c.l.b16 %v247
      %v328 = vunpack.c.l.b16 %v248
      %v329 = vunpack.c.l.b16 %v249
      %v330 = vunpack.c.l.b16 %v250
      %v331 = vunpack.c.l.b16 %v251
      %v332 = vunpack.c.l.b16 %v252
      %v333 = vunpack.c.l.b16 %v253
      %v334 = vunpack.c.l.b16 %v254
      %v335 = vunpack.c.l.b16 %v255
      %v336 = vunpack.c.l.b16 %v256
      %v337 = vunpack.c.l.b16 %v257
      %v338 = vunpack.c.l.b16 %v258
      %v339 = vunpack.c.l.b16 %v259
      %v340 = vunpack.c.l.b16 %v260
      %v341 = vunpack.c.l.b16 %v261
      %v342 = vunpack.c.l.b16 %v262
      %v343 = vunpack.c.l.b16 %v263
      %v344 = vunpack.c.l.b16 %v264
      %v345 = vunpack.c.l.b16 %v265
      %v346 = vunpack.c.l.b16 %v266
      %v347 = vunpack.c.l.b16 %v267
      %v348 = vunpack.c.l.b16 %v268
      %v349 = vunpack.c.l.b16 %v269
      %v350 = vunpack.c.l.b16 %v270
      %v351 = vunpack.c.l.b16 %v271
      %v352 = vunpack.c.l.b16 %v272
      %v353 = vunpack.c.l.b16 %v273
      %v354 = vunpack.c.l.b16 %v274
      %v355 = vpack.c.b16 %v324, %v323
      %v356 = vpack.c.b16 %v326, %v325
      %v357 = vpack.c.b16 %v328, %v327
      %v358 = vpack.c.b16 %v330, %v329
      %v359 = vpack.c.b16 %v332, %v331
      %v360 = vpack.c.b16 %v334, %v333
      %v361 = vpack.c.b16 %v336, %v335
      %v362 = vpack.c.b16 %v338, %v337
      %v363 = vpack.c.b16 %v340, %v339
      %v364 = vpack.c.b16 %v342, %v341
      %v365 = vpack.c.b16 %v344, %v343
      %v366 = vpack.c.b16 %v346, %v345
      %v367 = vpack.c.b16 %v348, %v347
      %v368 = vpack.c.b16 %v350, %v349
      %v369 = vpack.c.b16 %v352, %v351
      %v370 = vpack.c.b16 %v354, %v353
      %v403 = vunpack.c.l.b16 %v275
      %v404 = vunpack.c.h.b16 %v275
      %v405 = vunpack.c.l.b16 %v276
      %v406 = vunpack.c.h.b16 %v276
      %v407 = vunpack.c.l.b16 %v277
      %v408 = vunpack.c.h.b16 %v277
      %v409 = vunpack.c.l.b16 %v278
      %v410 = vunpack.c.h.b16 %v278
      %v411 = vunpack.c.l.b16 %v279
      %v412 = vunpack.c.h.b16 %v279
      %v413 = vunpack.c.l.b16 %v280
      %v414 = vunpack.c.h.b16 %v280
      %v415 = vunpack.c.l.b16 %v281
      %v416 = vunpack.c.h.b16 %v281
      %v417 = vunpack.c.l.b16 %v282
      %v418 = vunpack.c.h.b16 %v282
      %v419 = vunpack.c.l.b16 %v283
      %v420 = vunpack.c.h.b16 %v283
      %v421 = vunpack.c.l.b16 %v284
      %v422 = vunpack.c.h.b16 %v284
      %v423 = vunpack.c.l.b16 %v285
      %v424 = vunpack.c.h.b16 %v285
      %v425 = vunpack.c.l.b16 %v286
      %v426 = vunpack.c.h.b16 %v286
      %v427 = vunpack.c.l.b16 %v287
      %v428 = vunpack.c.h.b16 %v287
      %v429 = vunpack.c.l.b16 %v288
      %v430 = vunpack.c.h.b16 %v288
      %v431 = vunpack.c.l.b16 %v289
      %v432 = vunpack.c.h.b16 %v289
      %v433 = vunpack.c.l.b16 %v290
      %v434 = vunpack.c.h.b16 %v290
      %v435 = vpack.c.b16 %v405, %v403
      %v436 = vpack.c.b16 %v406, %v404
      %v437 = vpack.c.b16 %v409, %v407
      %v438 = vpack.c.b16 %v410, %v408
      %v439 = vpack.c.b16 %v413, %v411
      %v440 = vpack.c.b16 %v414, %v412
      %v441 = vpack.c.b16 %v417, %v415
      %v442 = vpack.c.b16 %v418, %v416
      %v443 = vpack.c.b16 %v421, %v419
      %v444 = vpack.c.b16 %v422, %v420
      %v445 = vpack.c.b16 %v425, %v423
      %v446 = vpack.c.b16 %v426, %v424
      %v447 = vpack.c.b16 %v429, %v427
      %v448 = vpack.c.b16 %v430, %v428
      %v449 = vpack.c.b16 %v433, %v431
      %v450 = vpack.c.b16 %v434, %v432
      %467 = vmatprep.subr.bf16.mxu0 %v436
      %468 = vmatpush1.bf16.msra.mxu0 %v435
      %469 = vmatprep.subr.bf16.mxu0 %v438
      %470 = vmatpush1.bf16.msra.mxu0 %v437
      %471 = vmatprep.subr.bf16.mxu0 %v440
      %472 = vmatpush1.bf16.msra.mxu0 %v439
      %473 = vmatprep.subr.bf16.mxu0 %v442
      %474 = vmatpush1.bf16.msra.mxu0 %v441
      %475 = vmatprep.subr.bf16.mxu0 %v444
      %476 = vmatpush1.bf16.msra.mxu0 %v443
      %477 = vmatprep.subr.bf16.mxu0 %v446
      %478 = vmatpush1.bf16.msra.mxu0 %v445
      %479 = vmatprep.subr.bf16.mxu0 %v448
      %480 = vmatpush1.bf16.msra.mxu0 %v447
      %481 = vmatprep.subr.bf16.mxu0 %v450
      %482 = vmatpush1.bf16.msra.mxu0 %v449
      %483 = vmatprep.subr.bf16.mxu0 0
      %484 = vmatpush1.bf16.msra.mxu0 0
      %485 = vmatprep.subr.bf16.mxu0 0
      %486 = vmatpush1.bf16.msra.mxu0 0
      %487 = vmatprep.subr.bf16.mxu0 0
      %488 = vmatpush1.bf16.msra.mxu0 0
      %489 = vmatprep.subr.bf16.mxu0 0
      %490 = vmatpush1.bf16.msra.mxu0 0
      %491 = vmatprep.subr.bf16.mxu0 0
      %492 = vmatpush1.bf16.msra.mxu0 0
      %493 = vmatprep.subr.bf16.mxu0 0
      %494 = vmatpush1.bf16.msra.mxu0 0
      %495 = vmatprep.subr.bf16.mxu0 0
      %496 = vmatpush1.bf16.msra.mxu0 0
      %497 = vmatprep.subr.bf16.mxu0 0
      %498 = vmatpush1.bf16.msra.mxu0 0
      %499 = vmatprep.mubr.bf16.mxu0 0
      %500 = vmatmul.mubr.bf16.gmra.mrb[0].mxu0 %v355
      %v501 = vpop.f32.mrb[0].mxu0
      %v502 = vadd.f32 0.0, %v501
      %v503 = vpop.f32.mrb[0].mxu0
      %v504 = vadd.f32 0.0, %v503
      %v505 = vpop.f32.mrb[0].mxu0
      %v506 = vadd.f32 0.0, %v505
      %v507 = vpop.f32.mrb[0].mxu0
      %v508 = vadd.f32 0.0, %v507
      %509 = vmatprep.mubr.bf16.mxu0 0
      %510 = vmatmul.mubr.bf16.gmra.mrb[0].mxu0 %v356
      %v511 = vpop.f32.mrb[0].mxu0
      %v512 = vadd.f32 0.0, %v511
      %v513 = vpop.f32.mrb[0].mxu0
      %v514 = vadd.f32 0.0, %v513
      %v515 = vpop.f32.mrb[0].mxu0
      %v516 = vadd.f32 0.0, %v515
      %v517 = vpop.f32.mrb[0].mxu0
      %v518 = vadd.f32 0.0, %v517
      %519 = vmatprep.mubr.bf16.mxu0 0
      %520 = vmatmul.mubr.bf16.gmra.mrb[0].mxu0 %v357
      %v521 = vpop.f32.mrb[0].mxu0
      %v522 = vadd.f32 0.0, %v521
      %v523 = vpop.f32.mrb[0].mxu0
      %v524 = vadd.f32 0.0, %v523
      %v525 = vpop.f32.mrb[0].mxu0
      %v526 = vadd.f32 0.0, %v525
      %v527 = vpop.f32.mrb[0].mxu0
      %v528 = vadd.f32 0.0, %v527
      %529 = vmatprep.mubr.bf16.mxu0 0
      %530 = vmatmul.mubr.bf16.gmra.mrb[0].mxu0 %v358
      %v531 = vpop.f32.mrb[0].mxu0
      %v532 = vadd.f32 0.0, %v531
      %v533 = vpop.f32.mrb[0].mxu0
      %v534 = vadd.f32 0.0, %v533
      %v535 = vpop.f32.mrb[0].mxu0
      %v536 = vadd.f32 0.0, %v535
      %v537 = vpop.f32.mrb[0].mxu0
      %v538 = vadd.f32 0.0, %v537
      %539 = vmatprep.mubr.bf16.mxu0 0
      %540 = vmatmul.mubr.bf16.gmra.mrb[0].mxu0 %v359
      %v541 = vpop.f32.mrb[0].mxu0
      %v542 = vadd.f32 0.0, %v541
      %v543 = vpop.f32.mrb[0].mxu0
      %v544 = vadd.f32 0.0, %v543
      %v545 = vpop.f32.mrb[0].mxu0
      %v546 = vadd.f32 0.0, %v545
      %v547 = vpop.f32.mrb[0].mxu0
      %v548 = vadd.f32 0.0, %v547
      %549 = vmatprep.mubr.bf16.mxu0 0
      %550 = vmatmul.mubr.bf16.gmra.mrb[0].mxu0 %v360
      %v551 = vpop.f32.mrb[0].mxu0
      %v552 = vadd.f32 0.0, %v551
      %v553 = vpop.f32.mrb[0].mxu0
      %v554 = vadd.f32 0.0, %v553
      %v555 = vpop.f32.mrb[0].mxu0
      %v556 = vadd.f32 0.0, %v555
      %v557 = vpop.f32.mrb[0].mxu0
      %v558 = vadd.f32 0.0, %v557
      %559 = vmatprep.mubr.bf16.mxu0 0
      %560 = vmatmul.mubr.bf16.gmra.mrb[0].mxu0 %v361
      %v561 = vpop.f32.mrb[0].mxu0
      %v562 = vadd.f32 0.0, %v561
      %v563 = vpop.f32.mrb[0].mxu0
      %v564 = vadd.f32 0.0, %v563
      %v565 = vpop.f32.mrb[0].mxu0
      %v566 = vadd.f32 0.0, %v565
      %v567 = vpop.f32.mrb[0].mxu0
      %v568 = vadd.f32 0.0, %v567
      %569 = vmatprep.mubr.bf16.mxu0 0
      %570 = vmatmul.mubr.bf16.gmra.mrb[0].mxu0 %v362
      %v571 = vpop.f32.mrb[0].mxu0
      %v572 = vadd.f32 0.0, %v571
      %v573 = vpop.f32.mrb[0].mxu0
      %v574 = vadd.f32 0.0, %v573
      %v575 = vpop.f32.mrb[0].mxu0
      %v576 = vadd.f32 0.0, %v575
      %v577 = vpop.f32.mrb[0].mxu0
      %v578 = vadd.f32 0.0, %v577
      %579 = vmatprep.mubr.bf16.mxu0 0
      %580 = vmatmul.mubr.bf16.gmra.mrb[0].mxu0 %v363
      %v581 = vpop.f32.mrb[0].mxu0
      %v582 = vadd.f32 0.0, %v581
      %v583 = vpop.f32.mrb[0].mxu0
      %v584 = vadd.f32 0.0, %v583
      %v585 = vpop.f32.mrb[0].mxu0
      %v586 = vadd.f32 0.0, %v585
      %v587 = vpop.f32.mrb[0].mxu0
      %v588 = vadd.f32 0.0, %v587
      %589 = vmatprep.mubr.bf16.mxu0 0
      %590 = vmatmul.mubr.bf16.gmra.mrb[0].mxu0 %v364
      %v591 = vpop.f32.mrb[0].mxu0
      %v592 = vadd.f32 0.0, %v591
      %v593 = vpop.f32.mrb[0].mxu0
      %v594 = vadd.f32 0.0, %v593
      %v595 = vpop.f32.mrb[0].mxu0
      %v596 = vadd.f32 0.0, %v595
      %v597 = vpop.f32.mrb[0].mxu0
      %v598 = vadd.f32 0.0, %v597
      %599 = vmatprep.mubr.bf16.mxu0 0
      %600 = vmatmul.mubr.bf16.gmra.mrb[0].mxu0 %v365
      %v601 = vpop.f32.mrb[0].mxu0
      %v602 = vadd.f32 0.0, %v601
      %v603 = vpop.f32.mrb[0].mxu0
      %v604 = vadd.f32 0.0, %v603
      %v605 = vpop.f32.mrb[0].mxu0
      %v606 = vadd.f32 0.0, %v605
      %v607 = vpop.f32.mrb[0].mxu0
      %v608 = vadd.f32 0.0, %v607
      %609 = vmatprep.mubr.bf16.mxu0 0
      %610 = vmatmul.mubr.bf16.gmra.mrb[0].mxu0 %v366
      %v611 = vpop.f32.mrb[0].mxu0
      %v612 = vadd.f32 0.0, %v611
      %v613 = vpop.f32.mrb[0].mxu0
      %v614 = vadd.f32 0.0, %v613
      %v615 = vpop.f32.mrb[0].mxu0
      %v616 = vadd.f32 0.0, %v615
      %v617 = vpop.f32.mrb[0].mxu0
      %v618 = vadd.f32 0.0, %v617
      %619 = vmatprep.mubr.bf16.mxu0 0
      %620 = vmatmul.mubr.bf16.gmra.mrb[0].mxu0 %v367
      %v621 = vpop.f32.mrb[0].mxu0
      %v622 = vadd.f32 0.0, %v621
      %v623 = vpop.f32.mrb[0].mxu0
      %v624 = vadd.f32 0.0, %v623
      %v625 = vpop.f32.mrb[0].mxu0
      %v626 = vadd.f32 0.0, %v625
      %v627 = vpop.f32.mrb[0].mxu0
      %v628 = vadd.f32 0.0, %v627
      %629 = vmatprep.mubr.bf16.mxu0 0
      %630 = vmatmul.mubr.bf16.gmra.mrb[0].mxu0 %v368
      %v631 = vpop.f32.mrb[0].mxu0
      %v632 = vadd.f32 0.0, %v631
      %v633 = vpop.f32.mrb[0].mxu0
      %v634 = vadd.f32 0.0, %v633
      %v635 = vpop.f32.mrb[0].mxu0
      %v636 = vadd.f32 0.0, %v635
      %v637 = vpop.f32.mrb[0].mxu0
      %v638 = vadd.f32 0.0, %v637
      %639 = vmatprep.mubr.bf16.mxu0 0
      %640 = vmatmul.mubr.bf16.gmra.mrb[0].mxu0 %v369
      %v641 = vpop.f32.mrb[0].mxu0
      %v642 = vadd.f32 0.0, %v641
      %v643 = vpop.f32.mrb[0].mxu0
      %v644 = vadd.f32 0.0, %v643
      %v645 = vpop.f32.mrb[0].mxu0
      %v646 = vadd.f32 0.0, %v645
      %v647 = vpop.f32.mrb[0].mxu0
      %v648 = vadd.f32 0.0, %v647
      %649 = vmatprep.mubr.bf16.mxu0 0
      %650 = vmatmul.mubr.bf16.gmra.mrb[0].mxu0 %v370
      %v651 = vpop.f32.mrb[0].mxu0
      %v652 = vadd.f32 0.0, %v651
      %v653 = vpop.f32.mrb[0].mxu0
      %v654 = vadd.f32 0.0, %v653
      %v655 = vpop.f32.mrb[0].mxu0
      %v656 = vadd.f32 0.0, %v655
      %v657 = vpop.f32.mrb[0].mxu0
      %v658 = vadd.f32 0.0, %v657
      %659 = vdwg.mxu0
      %v660 = vld [vmem:[%s2] sm:$0x3]
      %v662 = vlaneseq
      %v663 = vshrl.u32 %v662, 7
      %v664 = vsub.s32 0, %v663
      %v665 = vrot.slane %v660, %v664
      %v666 = vlaneseq
      %v667 = vshrl.u32 %v666, 7
      %v668 = vsub.s32 1, %v667
      %v669 = vrot.slane %v660, %v668
      %v672 = vmul.f32 %v502, %v665
      %v673 = vmul.f32 %v504, %v669
      %v674 = vmul.f32 %v506, %v665
      %v675 = vmul.f32 %v508, %v669
      %v676 = vmul.f32 %v512, %v665
      %v677 = vmul.f32 %v514, %v669
      %v678 = vmul.f32 %v516, %v665
      %v679 = vmul.f32 %v518, %v669
      %v680 = vmul.f32 %v522, %v665
      %v681 = vmul.f32 %v524, %v669
      %v682 = vmul.f32 %v526, %v665
      %v683 = vmul.f32 %v528, %v669
      %v684 = vmul.f32 %v532, %v665
      %v685 = vmul.f32 %v534, %v669
      %v686 = vmul.f32 %v536, %v665
      %v687 = vmul.f32 %v538, %v669
      %v688 = vmul.f32 %v542, %v665
      %v689 = vmul.f32 %v544, %v669
      %v690 = vmul.f32 %v546, %v665
      %v691 = vmul.f32 %v548, %v669
      %v692 = vmul.f32 %v552, %v665
      %v693 = vmul.f32 %v554, %v669
      %v694 = vmul.f32 %v556, %v665
      %v695 = vmul.f32 %v558, %v669
      %v696 = vmul.f32 %v562, %v665
      %v697 = vmul.f32 %v564, %v669
      %v698 = vmul.f32 %v566, %v665
      %v699 = vmul.f32 %v568, %v669
      %v700 = vmul.f32 %v572, %v665
      %v701 = vmul.f32 %v574, %v669
      %v702 = vmul.f32 %v576, %v665
      %v703 = vmul.f32 %v578, %v669
      %v704 = vmul.f32 %v582, %v665
      %v705 = vmul.f32 %v584, %v669
      %v706 = vmul.f32 %v586, %v665
      %v707 = vmul.f32 %v588, %v669
      %v708 = vmul.f32 %v592, %v665
      %v709 = vmul.f32 %v594, %v669
      %v710 = vmul.f32 %v596, %v665
      %v711 = vmul.f32 %v598, %v669
      %v712 = vmul.f32 %v602, %v665
      %v713 = vmul.f32 %v604, %v669
      %v714 = vmul.f32 %v606, %v665
      %v715 = vmul.f32 %v608, %v669
      %v716 = vmul.f32 %v612, %v665
      %v717 = vmul.f32 %v614, %v669
      %v718 = vmul.f32 %v616, %v665
      %v719 = vmul.f32 %v618, %v669
      %v720 = vmul.f32 %v622, %v665
      %v721 = vmul.f32 %v624, %v669
      %v722 = vmul.f32 %v626, %v665
      %v723 = vmul.f32 %v628, %v669
      %v724 = vmul.f32 %v632, %v665
      %v725 = vmul.f32 %v634, %v669
      %v726 = vmul.f32 %v636, %v665
      %v727 = vmul.f32 %v638, %v669
      %v728 = vmul.f32 %v642, %v665
      %v729 = vmul.f32 %v644, %v669
      %v730 = vmul.f32 %v646, %v665
      %v731 = vmul.f32 %v648, %v669
      %v732 = vmul.f32 %v652, %v665
      %v733 = vmul.f32 %v654, %v669
      %v734 = vmul.f32 %v656, %v665
      %v735 = vmul.f32 %v658, %v669
      %v736 = vld [vmem:[%s3] sm:$0x3]
      %v738 = vlaneseq
      %v739 = vshrl.u32 %v738, 7
      %v740 = vsub.s32 0, %v739
      %v741 = vrot.slane %v736, %v740
      %v742 = vlaneseq
      %v743 = vshrl.u32 %v742, 7
      %v744 = vsub.s32 1, %v743
      %v745 = vrot.slane %v736, %v744
      %v748 = vadd.f32 %v672, %v741
      %v749 = vadd.f32 %v673, %v745
      %v750 = vadd.f32 %v674, %v741
      %v751 = vadd.f32 %v675, %v745
      %v752 = vadd.f32 %v676, %v741
      %v753 = vadd.f32 %v677, %v745
      %v754 = vadd.f32 %v678, %v741
      %v755 = vadd.f32 %v679, %v745
      %v756 = vadd.f32 %v680, %v741
      %v757 = vadd.f32 %v681, %v745
      %v758 = vadd.f32 %v682, %v741
      %v759 = vadd.f32 %v683, %v745
      %v760 = vadd.f32 %v684, %v741
      %v761 = vadd.f32 %v685, %v745
      %v762 = vadd.f32 %v686, %v741
      %v763 = vadd.f32 %v687, %v745
      %v764 = vadd.f32 %v688, %v741
      %v765 = vadd.f32 %v689, %v745
      %v766 = vadd.f32 %v690, %v741
      %v767 = vadd.f32 %v691, %v745
      %v768 = vadd.f32 %v692, %v741
      %v769 = vadd.f32 %v693, %v745
      %v770 = vadd.f32 %v694, %v741
      %v771 = vadd.f32 %v695, %v745
      %v772 = vadd.f32 %v696, %v741
      %v773 = vadd.f32 %v697, %v745
      %v774 = vadd.f32 %v698, %v741
      %v775 = vadd.f32 %v699, %v745
      %v776 = vadd.f32 %v700, %v741
      %v777 = vadd.f32 %v701, %v745
      %v778 = vadd.f32 %v702, %v741
      %v779 = vadd.f32 %v703, %v745
      %v780 = vadd.f32 %v704, %v741
      %v781 = vadd.f32 %v705, %v745
      %v782 = vadd.f32 %v706, %v741
      %v783 = vadd.f32 %v707, %v745
      %v784 = vadd.f32 %v708, %v741
      %v785 = vadd.f32 %v709, %v745
      %v786 = vadd.f32 %v710, %v741
      %v787 = vadd.f32 %v711, %v745
      %v788 = vadd.f32 %v712, %v741
      %v789 = vadd.f32 %v713, %v745
      %v790 = vadd.f32 %v714, %v741
      %v791 = vadd.f32 %v715, %v745
      %v792 = vadd.f32 %v716, %v741
      %v793 = vadd.f32 %v717, %v745
      %v794 = vadd.f32 %v718, %v741
      %v795 = vadd.f32 %v719, %v745
      %v796 = vadd.f32 %v720, %v741
      %v797 = vadd.f32 %v721, %v745
      %v798 = vadd.f32 %v722, %v741
      %v799 = vadd.f32 %v723, %v745
      %v800 = vadd.f32 %v724, %v741
      %v801 = vadd.f32 %v725, %v745
      %v802 = vadd.f32 %v726, %v741
      %v803 = vadd.f32 %v727, %v745
      %v804 = vadd.f32 %v728, %v741
      %v805 = vadd.f32 %v729, %v745
      %v806 = vadd.f32 %v730, %v741
      %v807 = vadd.f32 %v731, %v745
      %v808 = vadd.f32 %v732, %v741
      %v809 = vadd.f32 %v733, %v745
      %v810 = vadd.f32 %v734, %v741
      %v811 = vadd.f32 %v735, %v745
      %v812 = vsub.f32 0.0, %v748
      %v813 = vsub.f32 0.0, %v749
      %v814 = vsub.f32 0.0, %v750
      %v815 = vsub.f32 0.0, %v751
      %v816 = vsub.f32 0.0, %v752
      %v817 = vsub.f32 0.0, %v753
      %v818 = vsub.f32 0.0, %v754
      %v819 = vsub.f32 0.0, %v755
      %v820 = vsub.f32 0.0, %v756
      %v821 = vsub.f32 0.0, %v757
      %v822 = vsub.f32 0.0, %v758
      %v823 = vsub.f32 0.0, %v759
      %v824 = vsub.f32 0.0, %v760
      %v825 = vsub.f32 0.0, %v761
      %v826 = vsub.f32 0.0, %v762
      %v827 = vsub.f32 0.0, %v763
      %v828 = vsub.f32 0.0, %v764
      %v829 = vsub.f32 0.0, %v765
      %v830 = vsub.f32 0.0, %v766
      %v831 = vsub.f32 0.0, %v767
      %v832 = vsub.f32 0.0, %v768
      %v833 = vsub.f32 0.0, %v769
      %v834 = vsub.f32 0.0, %v770
      %v835 = vsub.f32 0.0, %v771
      %v836 = vsub.f32 0.0, %v772
      %v837 = vsub.f32 0.0, %v773
      %v838 = vsub.f32 0.0, %v774
      %v839 = vsub.f32 0.0, %v775
      %v840 = vsub.f32 0.0, %v776
      %v841 = vsub.f32 0.0, %v777
      %v842 = vsub.f32 0.0, %v778
      %v843 = vsub.f32 0.0, %v779
      %v844 = vsub.f32 0.0, %v780
      %v845 = vsub.f32 0.0, %v781
      %v846 = vsub.f32 0.0, %v782
      %v847 = vsub.f32 0.0, %v783
      %v848 = vsub.f32 0.0, %v784
      %v849 = vsub.f32 0.0, %v785
      %v850 = vsub.f32 0.0, %v786
      %v851 = vsub.f32 0.0, %v787
      %v852 = vsub.f32 0.0, %v788
      %v853 = vsub.f32 0.0, %v789
      %v854 = vsub.f32 0.0, %v790
      %v855 = vsub.f32 0.0, %v791
      %v856 = vsub.f32 0.0, %v792
      %v857 = vsub.f32 0.0, %v793
      %v858 = vsub.f32 0.0, %v794
      %v859 = vsub.f32 0.0, %v795
      %v860 = vsub.f32 0.0, %v796
      %v861 = vsub.f32 0.0, %v797
      %v862 = vsub.f32 0.0, %v798
      %v863 = vsub.f32 0.0, %v799
      %v864 = vsub.f32 0.0, %v800
      %v865 = vsub.f32 0.0, %v801
      %v866 = vsub.f32 0.0, %v802
      %v867 = vsub.f32 0.0, %v803
      %v868 = vsub.f32 0.0, %v804
      %v869 = vsub.f32 0.0, %v805
      %v870 = vsub.f32 0.0, %v806
      %v871 = vsub.f32 0.0, %v807
      %v872 = vsub.f32 0.0, %v808
      %v873 = vsub.f32 0.0, %v809
      %v874 = vsub.f32 0.0, %v810
      %v875 = vsub.f32 0.0, %v811
      %v876 = vmul.f32 %v812, 1.442695
      %v877 = vpow.pop %v876
      %v878 = vmul.f32 %v813, 1.442695
      %v879 = vpow.pop %v878
      %v880 = vmul.f32 %v814, 1.442695
      %v881 = vpow.pop %v880
      %v882 = vmul.f32 %v815, 1.442695
      %v883 = vpow.pop %v882
      %v884 = vmul.f32 %v816, 1.442695
      %v885 = vpow.pop %v884
      %v886 = vmul.f32 %v817, 1.442695
      %v887 = vpow.pop %v886
      %v888 = vmul.f32 %v818, 1.442695
      %v889 = vpow.pop %v888
      %v890 = vmul.f32 %v819, 1.442695
      %v891 = vpow.pop %v890
      %v892 = vmul.f32 %v820, 1.442695
      %v893 = vpow.pop %v892
      %v894 = vmul.f32 %v821, 1.442695
      %v895 = vpow.pop %v894
      %v896 = vmul.f32 %v822, 1.442695
      %v897 = vpow.pop %v896
      %v898 = vmul.f32 %v823, 1.442695
      %v899 = vpow.pop %v898
      %v900 = vmul.f32 %v824, 1.442695
      %v901 = vpow.pop %v900
      %v902 = vmul.f32 %v825, 1.442695
      %v903 = vpow.pop %v902
      %v904 = vmul.f32 %v826, 1.442695
      %v905 = vpow.pop %v904
      %v906 = vmul.f32 %v827, 1.442695
      %v907 = vpow.pop %v906
      %v908 = vmul.f32 %v828, 1.442695
      %v909 = vpow.pop %v908
      %v910 = vmul.f32 %v829, 1.442695
      %v911 = vpow.pop %v910
      %v912 = vmul.f32 %v830, 1.442695
      %v913 = vpow.pop %v912
      %v914 = vmul.f32 %v831, 1.442695
      %v915 = vpow.pop %v914
      %v916 = vmul.f32 %v832, 1.442695
      %v917 = vpow.pop %v916
      %v918 = vmul.f32 %v833, 1.442695
      %v919 = vpow.pop %v918
      %v920 = vmul.f32 %v834, 1.442695
      %v921 = vpow.pop %v920
      %v922 = vmul.f32 %v835, 1.442695
      %v923 = vpow.pop %v922
      %v924 = vmul.f32 %v836, 1.442695
      %v925 = vpow.pop %v924
      %v926 = vmul.f32 %v837, 1.442695
      %v927 = vpow.pop %v926
      %v928 = vmul.f32 %v838, 1.442695
      %v929 = vpow.pop %v928
      %v930 = vmul.f32 %v839, 1.442695
      %v931 = vpow.pop %v930
      %v932 = vmul.f32 %v840, 1.442695
      %v933 = vpow.pop %v932
      %v934 = vmul.f32 %v841, 1.442695
      %v935 = vpow.pop %v934
      %v936 = vmul.f32 %v842, 1.442695
      %v937 = vpow.pop %v936
      %v938 = vmul.f32 %v843, 1.442695
      %v939 = vpow.pop %v938
      %v940 = vmul.f32 %v844, 1.442695
      %v941 = vpow.pop %v940
      %v942 = vmul.f32 %v845, 1.442695
      %v943 = vpow.pop %v942
      %v944 = vmul.f32 %v846, 1.442695
      %v945 = vpow.pop %v944
      %v946 = vmul.f32 %v847, 1.442695
      %v947 = vpow.pop %v946
      %v948 = vmul.f32 %v848, 1.442695
      %v949 = vpow.pop %v948
      %v950 = vmul.f32 %v849, 1.442695
      %v951 = vpow.pop %v950
      %v952 = vmul.f32 %v850, 1.442695
      %v953 = vpow.pop %v952
      %v954 = vmul.f32 %v851, 1.442695
      %v955 = vpow.pop %v954
      %v956 = vmul.f32 %v852, 1.442695
      %v957 = vpow.pop %v956
      %v958 = vmul.f32 %v853, 1.442695
      %v959 = vpow.pop %v958
      %v960 = vmul.f32 %v854, 1.442695
      %v961 = vpow.pop %v960
      %v962 = vmul.f32 %v855, 1.442695
      %v963 = vpow.pop %v962
      %v964 = vmul.f32 %v856, 1.442695
      %v965 = vpow.pop %v964
      %v966 = vmul.f32 %v857, 1.442695
      %v967 = vpow.pop %v966
      %v968 = vmul.f32 %v858, 1.442695
      %v969 = vpow.pop %v968
      %v970 = vmul.f32 %v859, 1.442695
      %v971 = vpow.pop %v970
      %v972 = vmul.f32 %v860, 1.442695
      %v973 = vpow.pop %v972
      %v974 = vmul.f32 %v861, 1.442695
      %v975 = vpow.pop %v974
      %v976 = vmul.f32 %v862, 1.442695
      %v977 = vpow.pop %v976
      %v978 = vmul.f32 %v863, 1.442695
      %v979 = vpow.pop %v978
      %v980 = vmul.f32 %v864, 1.442695
      %v981 = vpow.pop %v980
      %v982 = vmul.f32 %v865, 1.442695
      %v983 = vpow.pop %v982
      %v984 = vmul.f32 %v866, 1.442695
      %v985 = vpow.pop %v984
      %v986 = vmul.f32 %v867, 1.442695
      %v987 = vpow.pop %v986
      %v988 = vmul.f32 %v868, 1.442695
      %v989 = vpow.pop %v988
      %v990 = vmul.f32 %v869, 1.442695
      %v991 = vpow.pop %v990
      %v992 = vmul.f32 %v870, 1.442695
      %v993 = vpow.pop %v992
      %v994 = vmul.f32 %v871, 1.442695
      %v995 = vpow.pop %v994
      %v996 = vmul.f32 %v872, 1.442695
      %v997 = vpow.pop %v996
      %v998 = vmul.f32 %v873, 1.442695
      %v999 = vpow.pop %v998
      %v1000 = vmul.f32 %v874, 1.442695
      %v1001 = vpow.pop %v1000
      %v1002 = vmul.f32 %v875, 1.442695
      %v1003 = vpow.pop %v1002
      %v1004 = vadd.f32 %v877, 1.0
      %v1005 = vadd.f32 %v879, 1.0
      %v1006 = vadd.f32 %v881, 1.0
      %v1007 = vadd.f32 %v883, 1.0
      %v1008 = vadd.f32 %v885, 1.0
      %v1009 = vadd.f32 %v887, 1.0
      %v1010 = vadd.f32 %v889, 1.0
      %v1011 = vadd.f32 %v891, 1.0
      %v1012 = vadd.f32 %v893, 1.0
      %v1013 = vadd.f32 %v895, 1.0
      %v1014 = vadd.f32 %v897, 1.0
      %v1015 = vadd.f32 %v899, 1.0
      %v1016 = vadd.f32 %v901, 1.0
      %v1017 = vadd.f32 %v903, 1.0
      %v1018 = vadd.f32 %v905, 1.0
      %v1019 = vadd.f32 %v907, 1.0
      %v1020 = vadd.f32 %v909, 1.0
      %v1021 = vadd.f32 %v911, 1.0
      %v1022 = vadd.f32 %v913, 1.0
      %v1023 = vadd.f32 %v915, 1.0
      %v1024 = vadd.f32 %v917, 1.0
      %v1025 = vadd.f32 %v919, 1.0
      %v1026 = vadd.f32 %v921, 1.0
      %v1027 = vadd.f32 %v923, 1.0
      %v1028 = vadd.f32 %v925, 1.0
      %v1029 = vadd.f32 %v927, 1.0
      %v1030 = vadd.f32 %v929, 1.0
      %v1031 = vadd.f32 %v931, 1.0
      %v1032 = vadd.f32 %v933, 1.0
      %v1033 = vadd.f32 %v935, 1.0
      %v1034 = vadd.f32 %v937, 1.0
      %v1035 = vadd.f32 %v939, 1.0
      %v1036 = vadd.f32 %v941, 1.0
      %v1037 = vadd.f32 %v943, 1.0
      %v1038 = vadd.f32 %v945, 1.0
      %v1039 = vadd.f32 %v947, 1.0
      %v1040 = vadd.f32 %v949, 1.0
      %v1041 = vadd.f32 %v951, 1.0
      %v1042 = vadd.f32 %v953, 1.0
      %v1043 = vadd.f32 %v955, 1.0
      %v1044 = vadd.f32 %v957, 1.0
      %v1045 = vadd.f32 %v959, 1.0
      %v1046 = vadd.f32 %v961, 1.0
      %v1047 = vadd.f32 %v963, 1.0
      %v1048 = vadd.f32 %v965, 1.0
      %v1049 = vadd.f32 %v967, 1.0
      %v1050 = vadd.f32 %v969, 1.0
      %v1051 = vadd.f32 %v971, 1.0
      %v1052 = vadd.f32 %v973, 1.0
      %v1053 = vadd.f32 %v975, 1.0
      %v1054 = vadd.f32 %v977, 1.0
      %v1055 = vadd.f32 %v979, 1.0
      %v1056 = vadd.f32 %v981, 1.0
      %v1057 = vadd.f32 %v983, 1.0
      %v1058 = vadd.f32 %v985, 1.0
      %v1059 = vadd.f32 %v987, 1.0
      %v1060 = vadd.f32 %v989, 1.0
      %v1061 = vadd.f32 %v991, 1.0
      %v1062 = vadd.f32 %v993, 1.0
      %v1063 = vadd.f32 %v995, 1.0
      %v1064 = vadd.f32 %v997, 1.0
      %v1065 = vadd.f32 %v999, 1.0
      %v1066 = vadd.f32 %v1001, 1.0
      %v1067 = vadd.f32 %v1003, 1.0
      %v1068 = vrcp.pop %v1004
      %v1069 = vrcp.pop %v1005
      %v1070 = vrcp.pop %v1006
      %v1071 = vrcp.pop %v1007
      %v1072 = vrcp.pop %v1008
      %v1073 = vrcp.pop %v1009
      %v1074 = vrcp.pop %v1010
      %v1075 = vrcp.pop %v1011
      %v1076 = vrcp.pop %v1012
      %v1077 = vrcp.pop %v1013
      %v1078 = vrcp.pop %v1014
      %v1079 = vrcp.pop %v1015
      %v1080 = vrcp.pop %v1016
      %v1081 = vrcp.pop %v1017
      %v1082 = vrcp.pop %v1018
      %v1083 = vrcp.pop %v1019
      %v1084 = vrcp.pop %v1020
      %v1085 = vrcp.pop %v1021
      %v1086 = vrcp.pop %v1022
      %v1087 = vrcp.pop %v1023
      %v1088 = vrcp.pop %v1024
      %v1089 = vrcp.pop %v1025
      %v1090 = vrcp.pop %v1026
      %v1091 = vrcp.pop %v1027
      %v1092 = vrcp.pop %v1028
      %v1093 = vrcp.pop %v1029
      %v1094 = vrcp.pop %v1030
      %v1095 = vrcp.pop %v1031
      %v1096 = vrcp.pop %v1032
      %v1097 = vrcp.pop %v1033
      %v1098 = vrcp.pop %v1034
      %v1099 = vrcp.pop %v1035
      %v1100 = vrcp.pop %v1036
      %v1101 = vrcp.pop %v1037
      %v1102 = vrcp.pop %v1038
      %v1103 = vrcp.pop %v1039
      %v1104 = vrcp.pop %v1040
      %v1105 = vrcp.pop %v1041
      %v1106 = vrcp.pop %v1042
      %v1107 = vrcp.pop %v1043
      %v1108 = vrcp.pop %v1044
      %v1109 = vrcp.pop %v1045
      %v1110 = vrcp.pop %v1046
      %v1111 = vrcp.pop %v1047
      %v1112 = vrcp.pop %v1048
      %v1113 = vrcp.pop %v1049
      %v1114 = vrcp.pop %v1050
      %v1115 = vrcp.pop %v1051
      %v1116 = vrcp.pop %v1052
      %v1117 = vrcp.pop %v1053
      %v1118 = vrcp.pop %v1054
      %v1119 = vrcp.pop %v1055
      %v1120 = vrcp.pop %v1056
      %v1121 = vrcp.pop %v1057
      %v1122 = vrcp.pop %v1058
      %v1123 = vrcp.pop %v1059
      %v1124 = vrcp.pop %v1060
      %v1125 = vrcp.pop %v1061
      %v1126 = vrcp.pop %v1062
      %v1127 = vrcp.pop %v1063
      %v1128 = vrcp.pop %v1064
      %v1129 = vrcp.pop %v1065
      %v1130 = vrcp.pop %v1066
      %v1131 = vrcp.pop %v1067
      %v1132 = vmul.f32 %v748, %v1068
      %v1133 = vmul.f32 %v749, %v1069
      %v1134 = vmul.f32 %v750, %v1070
      %v1135 = vmul.f32 %v751, %v1071
      %v1136 = vmul.f32 %v752, %v1072
      %v1137 = vmul.f32 %v753, %v1073
      %v1138 = vmul.f32 %v754, %v1074
      %v1139 = vmul.f32 %v755, %v1075
      %v1140 = vmul.f32 %v756, %v1076
      %v1141 = vmul.f32 %v757, %v1077
      %v1142 = vmul.f32 %v758, %v1078
      %v1143 = vmul.f32 %v759, %v1079
      %v1144 = vmul.f32 %v760, %v1080
      %v1145 = vmul.f32 %v761, %v1081
      %v1146 = vmul.f32 %v762, %v1082
      %v1147 = vmul.f32 %v763, %v1083
      %v1148 = vmul.f32 %v764, %v1084
      %v1149 = vmul.f32 %v765, %v1085
      %v1150 = vmul.f32 %v766, %v1086
      %v1151 = vmul.f32 %v767, %v1087
      %v1152 = vmul.f32 %v768, %v1088
      %v1153 = vmul.f32 %v769, %v1089
      %v1154 = vmul.f32 %v770, %v1090
      %v1155 = vmul.f32 %v771, %v1091
      %v1156 = vmul.f32 %v772, %v1092
      %v1157 = vmul.f32 %v773, %v1093
      %v1158 = vmul.f32 %v774, %v1094
      %v1159 = vmul.f32 %v775, %v1095
      %v1160 = vmul.f32 %v776, %v1096
      %v1161 = vmul.f32 %v777, %v1097
      %v1162 = vmul.f32 %v778, %v1098
      %v1163 = vmul.f32 %v779, %v1099
      %v1164 = vmul.f32 %v780, %v1100
      %v1165 = vmul.f32 %v781, %v1101
      %v1166 = vmul.f32 %v782, %v1102
      %v1167 = vmul.f32 %v783, %v1103
      %v1168 = vmul.f32 %v784, %v1104
      %v1169 = vmul.f32 %v785, %v1105
      %v1170 = vmul.f32 %v786, %v1106
      %v1171 = vmul.f32 %v787, %v1107
      %v1172 = vmul.f32 %v788, %v1108
      %v1173 = vmul.f32 %v789, %v1109
      %v1174 = vmul.f32 %v790, %v1110
      %v1175 = vmul.f32 %v791, %v1111
      %v1176 = vmul.f32 %v792, %v1112
      %v1177 = vmul.f32 %v793, %v1113
      %v1178 = vmul.f32 %v794, %v1114
      %v1179 = vmul.f32 %v795, %v1115
      %v1180 = vmul.f32 %v796, %v1116
      %v1181 = vmul.f32 %v797, %v1117
      %v1182 = vmul.f32 %v798, %v1118
      %v1183 = vmul.f32 %v799, %v1119
      %v1184 = vmul.f32 %v800, %v1120
      %v1185 = vmul.f32 %v801, %v1121
      %v1186 = vmul.f32 %v802, %v1122
      %v1187 = vmul.f32 %v803, %v1123
      %v1188 = vmul.f32 %v804, %v1124
      %v1189 = vmul.f32 %v805, %v1125
      %v1190 = vmul.f32 %v806, %v1126
      %v1191 = vmul.f32 %v807, %v1127
      %v1192 = vmul.f32 %v808, %v1128
      %v1193 = vmul.f32 %v809, %v1129
      %v1194 = vmul.f32 %v810, %v1130
      %v1195 = vmul.f32 %v811, %v1131
      %v1196 = vpack.c.bf16 %v1134, %v1132
      %v1197 = vpack.c.bf16 %v1138, %v1136
      %v1198 = vpack.c.bf16 %v1142, %v1140
      %v1199 = vpack.c.bf16 %v1146, %v1144
      %v1200 = vpack.c.bf16 %v1150, %v1148
      %v1201 = vpack.c.bf16 %v1154, %v1152
      %v1202 = vpack.c.bf16 %v1158, %v1156
      %v1203 = vpack.c.bf16 %v1162, %v1160
      %v1204 = vpack.c.bf16 %v1166, %v1164
      %v1205 = vpack.c.bf16 %v1170, %v1168
      %v1206 = vpack.c.bf16 %v1174, %v1172
      %v1207 = vpack.c.bf16 %v1178, %v1176
      %v1208 = vpack.c.bf16 %v1182, %v1180
      %v1209 = vpack.c.bf16 %v1186, %v1184
      %v1210 = vpack.c.bf16 %v1190, %v1188
      %v1211 = vpack.c.bf16 %v1194, %v1192
      %v1228 = vunpack.c.l.b16 %v1196
      %v1229 = vunpack.c.h.b16 %v1196
      %v1230 = vunpack.c.l.b16 %v1197
      %v1231 = vunpack.c.h.b16 %v1197
      %v1232 = vunpack.c.l.b16 %v1198
      %v1233 = vunpack.c.h.b16 %v1198
      %v1234 = vunpack.c.l.b16 %v1199
      %v1235 = vunpack.c.h.b16 %v1199
      %v1236 = vunpack.c.l.b16 %v1200
      %v1237 = vunpack.c.h.b16 %v1200
      %v1238 = vunpack.c.l.b16 %v1201
      %v1239 = vunpack.c.h.b16 %v1201
      %v1240 = vunpack.c.l.b16 %v1202
      %v1241 = vunpack.c.h.b16 %v1202
      %v1242 = vunpack.c.l.b16 %v1203
      %v1243 = vunpack.c.h.b16 %v1203
      %v1244 = vunpack.c.l.b16 %v1204
      %v1245 = vunpack.c.h.b16 %v1204
      %v1246 = vunpack.c.l.b16 %v1205
      %v1247 = vunpack.c.h.b16 %v1205
      %v1248 = vunpack.c.l.b16 %v1206
      %v1249 = vunpack.c.h.b16 %v1206
      %v1250 = vunpack.c.l.b16 %v1207
      %v1251 = vunpack.c.h.b16 %v1207
      %v1252 = vunpack.c.l.b16 %v1208
      %v1253 = vunpack.c.h.b16 %v1208
      %v1254 = vunpack.c.l.b16 %v1209
      %v1255 = vunpack.c.h.b16 %v1209
      %v1256 = vunpack.c.l.b16 %v1210
      %v1257 = vunpack.c.h.b16 %v1210
      %v1258 = vunpack.c.l.b16 %v1211
      %v1259 = vunpack.c.h.b16 %v1211
      %v1260 = vpack.c.b16 %v1228, %v1228
      %v1261 = vpack.c.b16 %v1229, %v1229
      %v1262 = vpack.c.b16 %v1230, %v1230
      %v1263 = vpack.c.b16 %v1231, %v1231
      %v1264 = vpack.c.b16 %v1232, %v1232
      %v1265 = vpack.c.b16 %v1233, %v1233
      %v1266 = vpack.c.b16 %v1234, %v1234
      %v1267 = vpack.c.b16 %v1235, %v1235
      %v1268 = vpack.c.b16 %v1236, %v1236
      %v1269 = vpack.c.b16 %v1237, %v1237
      %v1270 = vpack.c.b16 %v1238, %v1238
      %v1271 = vpack.c.b16 %v1239, %v1239
      %v1272 = vpack.c.b16 %v1240, %v1240
      %v1273 = vpack.c.b16 %v1241, %v1241
      %v1274 = vpack.c.b16 %v1242, %v1242
      %v1275 = vpack.c.b16 %v1243, %v1243
      %v1276 = vpack.c.b16 %v1244, %v1244
      %v1277 = vpack.c.b16 %v1245, %v1245
      %v1278 = vpack.c.b16 %v1246, %v1246
      %v1279 = vpack.c.b16 %v1247, %v1247
      %v1280 = vpack.c.b16 %v1248, %v1248
      %v1281 = vpack.c.b16 %v1249, %v1249
      %v1282 = vpack.c.b16 %v1250, %v1250
      %v1283 = vpack.c.b16 %v1251, %v1251
      %v1284 = vpack.c.b16 %v1252, %v1252
      %v1285 = vpack.c.b16 %v1253, %v1253
      %v1286 = vpack.c.b16 %v1254, %v1254
      %v1287 = vpack.c.b16 %v1255, %v1255
      %v1288 = vpack.c.b16 %v1256, %v1256
      %v1289 = vpack.c.b16 %v1257, %v1257
      %v1290 = vpack.c.b16 %v1258, %v1258
      %v1291 = vpack.c.b16 %v1259, %v1259
      %1324 = vst [vmem:[%s234] sm:$0xf] %v1260
      %1325 = vst [vmem:[%s234 + $0x4] sm:$0xf] %v1261
      %1326 = vst [vmem:[%s234 + $0x8] sm:$0xf] %v1262
      %1327 = vst [vmem:[%s234 + $0xc] sm:$0xf] %v1263
      %1328 = vst [vmem:[%s234 + $0x10] sm:$0xf] %v1264
      %1329 = vst [vmem:[%s234 + $0x14] sm:$0xf] %v1265
      %1330 = vst [vmem:[%s234 + $0x18] sm:$0xf] %v1266
      %1331 = vst [vmem:[%s234 + $0x1c] sm:$0xf] %v1267
      %1332 = vst [vmem:[%s234 + $0x20] sm:$0xf] %v1268
      %1333 = vst [vmem:[%s234 + $0x24] sm:$0xf] %v1269
      %1334 = vst [vmem:[%s234 + $0x28] sm:$0xf] %v1270
      %1335 = vst [vmem:[%s234 + $0x2c] sm:$0xf] %v1271
      %1336 = vst [vmem:[%s234 + $0x30] sm:$0xf] %v1272
      %1337 = vst [vmem:[%s234 + $0x34] sm:$0xf] %v1273
      %1338 = vst [vmem:[%s234 + $0x38] sm:$0xf] %v1274
      %1339 = vst [vmem:[%s234 + $0x3c] sm:$0xf] %v1275
      %1340 = vst [vmem:[%s234 + $0x40] sm:$0xf] %v1276
      %1341 = vst [vmem:[%s234 + $0x44] sm:$0xf] %v1277
      %1342 = vst [vmem:[%s234 + $0x48] sm:$0xf] %v1278
      %1343 = vst [vmem:[%s234 + $0x4c] sm:$0xf] %v1279
      %1344 = vst [vmem:[%s234 + $0x50] sm:$0xf] %v1280
      %1345 = vst [vmem:[%s234 + $0x54] sm:$0xf] %v1281
      %1346 = vst [vmem:[%s234 + $0x58] sm:$0xf] %v1282
      %1347 = vst [vmem:[%s234 + $0x5c] sm:$0xf] %v1283
      %1348 = vst [vmem:[%s234 + $0x60] sm:$0xf] %v1284
      %1349 = vst [vmem:[%s234 + $0x64] sm:$0xf] %v1285
      %1350 = vst [vmem:[%s234 + $0x68] sm:$0xf] %v1286
      %1351 = vst [vmem:[%s234 + $0x6c] sm:$0xf] %v1287
      %1352 = vst [vmem:[%s234 + $0x70] sm:$0xf] %v1288
      %1353 = vst [vmem:[%s234 + $0x74] sm:$0xf] %v1289
      %1354 = vst [vmem:[%s234 + $0x78] sm:$0xf] %v1290
      %1355 = vst [vmem:[%s234 + $0x7c] sm:$0xf] %v1291
      %v1356 = vpack.c.bf16 %v1135, %v1133
      %v1357 = vpack.c.bf16 %v1139, %v1137
      %v1358 = vpack.c.bf16 %v1143, %v1141
      %v1359 = vpack.c.bf16 %v1147, %v1145
      %v1360 = vpack.c.bf16 %v1151, %v1149
      %v1361 = vpack.c.bf16 %v1155, %v1153
      %v1362 = vpack.c.bf16 %v1159, %v1157
      %v1363 = vpack.c.bf16 %v1163, %v1161
      %v1364 = vpack.c.bf16 %v1167, %v1165
      %v1365 = vpack.c.bf16 %v1171, %v1169
      %v1366 = vpack.c.bf16 %v1175, %v1173
      %v1367 = vpack.c.bf16 %v1179, %v1177
      %v1368 = vpack.c.bf16 %v1183, %v1181
      %v1369 = vpack.c.bf16 %v1187, %v1185
      %v1370 = vpack.c.bf16 %v1191, %v1189
      %v1371 = vpack.c.bf16 %v1195, %v1193
      %v1388 = vunpack.c.l.b16 %v1356
      %v1389 = vunpack.c.h.b16 %v1356
      %v1390 = vunpack.c.l.b16 %v1357
      %v1391 = vunpack.c.h.b16 %v1357
      %v1392 = vunpack.c.l.b16 %v1358
      %v1393 = vunpack.c.h.b16 %v1358
      %v1394 = vunpack.c.l.b16 %v1359
      %v1395 = vunpack.c.h.b16 %v1359
      %v1396 = vunpack.c.l.b16 %v1360
      %v1397 = vunpack.c.h.b16 %v1360
      %v1398 = vunpack.c.l.b16 %v1361
      %v1399 = vunpack.c.h.b16 %v1361
      %v1400 = vunpack.c.l.b16 %v1362
      %v1401 = vunpack.c.h.b16 %v1362
      %v1402 = vunpack.c.l.b16 %v1363
      %v1403 = vunpack.c.h.b16 %v1363
      %v1404 = vunpack.c.l.b16 %v1364
      %v1405 = vunpack.c.h.b16 %v1364
      %v1406 = vunpack.c.l.b16 %v1365
      %v1407 = vunpack.c.h.b16 %v1365
      %v1408 = vunpack.c.l.b16 %v1366
      %v1409 = vunpack.c.h.b16 %v1366
      %v1410 = vunpack.c.l.b16 %v1367
      %v1411 = vunpack.c.h.b16 %v1367
      %v1412 = vunpack.c.l.b16 %v1368
      %v1413 = vunpack.c.h.b16 %v1368
      %v1414 = vunpack.c.l.b16 %v1369
      %v1415 = vunpack.c.h.b16 %v1369
      %v1416 = vunpack.c.l.b16 %v1370
      %v1417 = vunpack.c.h.b16 %v1370
      %v1418 = vunpack.c.l.b16 %v1371
      %v1419 = vunpack.c.h.b16 %v1371
      %v1420 = vpack.c.b16 %v1388, %v1388
      %v1421 = vpack.c.b16 %v1389, %v1389
      %v1422 = vpack.c.b16 %v1390, %v1390
      %v1423 = vpack.c.b16 %v1391, %v1391
      %v1424 = vpack.c.b16 %v1392, %v1392
      %v1425 = vpack.c.b16 %v1393, %v1393
      %v1426 = vpack.c.b16 %v1394, %v1394
      %v1427 = vpack.c.b16 %v1395, %v1395
      %v1428 = vpack.c.b16 %v1396, %v1396
      %v1429 = vpack.c.b16 %v1397, %v1397
      %v1430 = vpack.c.b16 %v1398, %v1398
      %v1431 = vpack.c.b16 %v1399, %v1399
      %v1432 = vpack.c.b16 %v1400, %v1400
      %v1433 = vpack.c.b16 %v1401, %v1401
      %v1434 = vpack.c.b16 %v1402, %v1402
      %v1435 = vpack.c.b16 %v1403, %v1403
      %v1436 = vpack.c.b16 %v1404, %v1404
      %v1437 = vpack.c.b16 %v1405, %v1405
      %v1438 = vpack.c.b16 %v1406, %v1406
      %v1439 = vpack.c.b16 %v1407, %v1407
      %v1440 = vpack.c.b16 %v1408, %v1408
      %v1441 = vpack.c.b16 %v1409, %v1409
      %v1442 = vpack.c.b16 %v1410, %v1410
      %v1443 = vpack.c.b16 %v1411, %v1411
      %v1444 = vpack.c.b16 %v1412, %v1412
      %v1445 = vpack.c.b16 %v1413, %v1413
      %v1446 = vpack.c.b16 %v1414, %v1414
      %v1447 = vpack.c.b16 %v1415, %v1415
      %v1448 = vpack.c.b16 %v1416, %v1416
      %v1449 = vpack.c.b16 %v1417, %v1417
      %v1450 = vpack.c.b16 %v1418, %v1418
      %v1451 = vpack.c.b16 %v1419, %v1419
      %1484 = vst [vmem:[%s240] sm:$0xf] %v1420
      %1485 = vst [vmem:[%s240 + $0x4] sm:$0xf] %v1421
      %1486 = vst [vmem:[%s240 + $0x8] sm:$0xf] %v1422
      %1487 = vst [vmem:[%s240 + $0xc] sm:$0xf] %v1423
      %1488 = vst [vmem:[%s240 + $0x10] sm:$0xf] %v1424
      %1489 = vst [vmem:[%s240 + $0x14] sm:$0xf] %v1425
      %1490 = vst [vmem:[%s240 + $0x18] sm:$0xf] %v1426
      %1491 = vst [vmem:[%s240 + $0x1c] sm:$0xf] %v1427
      %1492 = vst [vmem:[%s240 + $0x20] sm:$0xf] %v1428
      %1493 = vst [vmem:[%s240 + $0x24] sm:$0xf] %v1429
      %1494 = vst [vmem:[%s240 + $0x28] sm:$0xf] %v1430
      %1495 = vst [vmem:[%s240 + $0x2c] sm:$0xf] %v1431
      %1496 = vst [vmem:[%s240 + $0x30] sm:$0xf] %v1432
      %1497 = vst [vmem:[%s240 + $0x34] sm:$0xf] %v1433
      %1498 = vst [vmem:[%s240 + $0x38] sm:$0xf] %v1434
      %1499 = vst [vmem:[%s240 + $0x3c] sm:$0xf] %v1435
      %1500 = vst [vmem:[%s240 + $0x40] sm:$0xf] %v1436
      %1501 = vst [vmem:[%s240 + $0x44] sm:$0xf] %v1437
      %1502 = vst [vmem:[%s240 + $0x48] sm:$0xf] %v1438
      %1503 = vst [vmem:[%s240 + $0x4c] sm:$0xf] %v1439
      %1504 = vst [vmem:[%s240 + $0x50] sm:$0xf] %v1440
      %1505 = vst [vmem:[%s240 + $0x54] sm:$0xf] %v1441
      %1506 = vst [vmem:[%s240 + $0x58] sm:$0xf] %v1442
      %1507 = vst [vmem:[%s240 + $0x5c] sm:$0xf] %v1443
      %1508 = vst [vmem:[%s240 + $0x60] sm:$0xf] %v1444
      %1509 = vst [vmem:[%s240 + $0x64] sm:$0xf] %v1445
      %1510 = vst [vmem:[%s240 + $0x68] sm:$0xf] %v1446
      %1511 = vst [vmem:[%s240 + $0x6c] sm:$0xf] %v1447
      %1512 = vst [vmem:[%s240 + $0x70] sm:$0xf] %v1448
      %1513 = vst [vmem:[%s240 + $0x74] sm:$0xf] %v1449
      %1514 = vst [vmem:[%s240 + $0x78] sm:$0xf] %v1450
      %1515 = vst [vmem:[%s240 + $0x7c] sm:$0xf] %v1451
      %s1516 = smul.u32 32, %s17
      %p1517 = scmp.lt.s32.totalorder %s1516, 63
      %s1518 = scalar_select %p1517, %s1516, 63
      %s1519 = smul.addr %s1518, 4
      %s1520 = scalar_lea.vmem %s4, %s1519
      %s1521 = smul.u32 32, %s17
      %p1522 = scmp.lt.s32.totalorder %s1521, 63
      %s1523 = scalar_select %p1522, %s1521, 63
      %s1524 = smul.addr %s1523, 4
      %s1525 = scalar_lea.vmem %s5, %s1524
      // Predicated region
      $region37: #{csp_layer_forward.3} parent=35 // pred_check
        %p1526 = pneg %p124
      $region38: #{csp_layer_forward.3} parent=35 // pred_check_branch
        %1528 = sbr.rel (%p1526) target = $region40
      $region39: #{csp_layer_forward.3} parent=35 // pred_region
        %s1529 = smul.u32 32, %s17
      $region40: #{csp_layer_forward.3} parent=35 // pred_fallthru
        _
      // Predicated region
      $region41: #{csp_layer_forward.3} parent=35 // pred_check
        %p1530 = pneg %p150
      $region42: #{csp_layer_forward.3} parent=35 // pred_check_branch
        %1532 = sbr.rel (%p1530) target = $region44
      $region43: #{csp_layer_forward.3} parent=35 // pred_region
        %s1533 = smul.u32 32, %s17
      $region44: #{csp_layer_forward.3} parent=35 // pred_fallthru
        _
    $region36: #{csp_layer_forward.3} parent=5 // pred_fallthru
      _
    %p1534 = scmp.le.s32.totalorder 2, %s12
    // Predicated region
    $region45: #{csp_layer_forward.3} parent=5 // pred_check
      %p1535 = pneg %p1534
    $region46: #{csp_layer_forward.3} parent=5 // pred_check_branch
      %1537 = sbr.rel (%p1535) target = $region48
    $region47: #{csp_layer_forward.3} parent=5 // pred_region
      %s1538 = ssub.s32 %s12, 2
      // Predicated region
      $region49: #{csp_layer_forward.3} parent=47 // pred_check
        %p1539 = pneg %p130
      $region50: #{csp_layer_forward.3} parent=47 // pred_check_branch
        %1541 = sbr.rel (%p1539) target = $region52
      $region51: #{csp_layer_forward.3} parent=47 // pred_region
        %s1542 = smul.u32 32, %s18
        %p1543 = scmp.lt.s32.totalorder %s1542, 63
        %s1544 = scalar_select %p1543, %s1542, 63
        %s1545 = smul.addr %s1544, 4
        %s1546 = scalar_lea.vmem %s4, %s1545
      $region52: #{csp_layer_forward.3} parent=47 // pred_fallthru
        _
      // Predicated region
      $region53: #{csp_layer_forward.3} parent=47 // pred_check
        %p1547 = pneg %p156
      $region54: #{csp_layer_forward.3} parent=47 // pred_check_branch
        %1549 = sbr.rel (%p1547) target = $region56
      $region55: #{csp_layer_forward.3} parent=47 // pred_region
        %s1550 = smul.u32 32, %s18
        %p1551 = scmp.lt.s32.totalorder %s1550, 63
        %s1552 = scalar_select %p1551, %s1550, 63
        %s1553 = smul.addr %s1552, 4
        %s1554 = scalar_lea.vmem %s5, %s1553
      $region56: #{csp_layer_forward.3} parent=47 // pred_fallthru
        _
    $region48: #{csp_layer_forward.3} parent=5 // pred_fallthru
      _
  $region6: #{csp_layer_forward.3} parent=0 // loop_footer
    %s16 = sadd.s32 1, %s12
  $region7: #{csp_layer_forward.3} parent=0 // loop_footer_branch
    %11 = sbr.rel target = $region3
  $region8: #{csp_layer_forward.3} parent=0 // loop_exit
    _

// kernel: csp_layer_forward.4
$region0: #{csp_layer_forward.4}
  #allocation0 [shape = 'u32[]', space=smem, size = 0x4, offset = 0x4, fixed_abs, tag = 'smem constant byte address 0x4 - core index']
  #allocation1 [shape = 'u32[144,128]{1,0:T(1,128)}', space=vmem, size = 0x12000, scoped, tag = 'internal scratch']
  %s0 = inlined_call_operand.vmem [shape: bf16[2,16,16,128], index: 0, kind: input, shape index: {}]
  %s1 = inlined_call_operand.vmem [shape: bf16[128,128], index: 1, kind: input, shape index: {}]
  %s2 = inlined_call_operand.vmem [shape: f32[1,128], index: 2, kind: input, shape index: {}]
  %s3 = inlined_call_operand.vmem [shape: f32[1,128], index: 3, kind: input, shape index: {}]
  %s4 = inlined_call_operand.vmem [shape: bf16[3,384,128], index: 4, kind: input, shape index: {}]
  %s5 = inlined_call_operand.vmem [shape: f32[1,128], index: 5, kind: input, shape index: {}]
  %s6 = inlined_call_operand.vmem [shape: f32[1,128], index: 6, kind: input, shape index: {}]
  %s7 = inlined_call_operand.vmem [shape: bf16[2,16,16,128], index: 7, kind: output, shape index: {}]
  %s8 = sld [smem:[#allocation0]]
  $region61: #{csp_layer_forward.4} parent=0
    _
  %s10 = ssub.s32 1, %s8
  %s11 = scalar_select 0, %s10, %s8
  loop: start=0, step=1, limit=4
  $region2: #{csp_layer_forward.4} parent=0 // loop_pre_header
    _
  $region3: #{csp_layer_forward.4} parent=0 // loop_header
    %s13 = sphi 0, %s17
    %p14 = scmp.ge.s32.totalorder %s13, 4
    %s23 = sphi 0, %s25
    %s26 = sphi 0, %s23
    %s27 = sphi 0, %s26
    %s43 = sphi 0, %s27
    %s47 = sphi 0, %s47
    %s49 = sphi 0, %s47
    %s50 = sphi 0, %s49
    %s64 = sphi 0, %s50
    %s68 = sphi 0, %s68
    %s70 = sphi 0, %s68
    %s71 = sphi 0, %s70
    %s85 = sphi 0, %s71
    %s89 = sphi 0, %s89
    %s91 = sphi 0, %s89
    %s92 = sphi 0, %s91
    %s106 = sphi 0, %s92
    %s110 = sphi 0, %s110
    %s112 = sphi 0, %s110
    %s113 = sphi 0, %s112
    %s127 = sphi 0, %s113
    %s131 = sphi 0, %s131
    %s133 = sphi 0, %s131
    %s134 = sphi 0, %s133
    %s148 = sphi 0, %s134
    %s152 = sphi 0, %s152
    %s154 = sphi 0, %s152
    %s155 = sphi 0, %s154
    %s169 = sphi 0, %s155
    %s175 = sphi 0, %s177
    %s178 = sphi 0, %s175
    %s179 = sphi 0, %s178
    %s195 = sphi 0, %s179
  $region4: #{csp_layer_forward.4} parent=0 // loop_header_branch
    %16 = sbr.rel (%p14) target = $region8
  $region5: #{csp_layer_forward.4} parent=0 // loop_body
    %s18 = ssub.s32 %s13, 1
    %s19 = ssub.s32 %s13, 2
    %s20 = sadd.s32 %s13, 1
    %s21 = ssub.s32 %s13, %s20
    %p22 = scmp.eq.s32.totalorder %s21, 0
    %s24 = sadd.s32 %s23, 1
    %s25 = scalar_select %p22, %s23, %s24
    %p28 = pneg %p22
    %p29 = scmp.eq.s32.totalorder %s13, 1
    %p30 = por %p28, %p29
    %p31 = scmp.ne.s32.totalorder %s23, %s26
    %p32 = scmp.eq.s32.totalorder %s13, 0
    %p33 = por %p31, %p32
    %p34 = scmp.ne.s32.totalorder %s23, %s26
    %p35 = scmp.eq.s32.totalorder %s18, 1
    %p36 = por %p34, %p35
    %p37 = scmp.ne.s32.totalorder %s26, %s27
    %p38 = scmp.eq.s32.totalorder %s18, 0
    %p39 = por %p37, %p38
    %p40 = scmp.ne.s32.totalorder %s26, %s27
    %p41 = scmp.eq.s32.totalorder %s19, 1
    %p42 = por %p40, %p41
    %p44 = scmp.ne.s32.totalorder %s27, %s43
    %p45 = scmp.eq.s32.totalorder %s19, 0
    %p46 = por %p44, %p45
    %s48 = sadd.s32 %s47, 1
    %p51 = scmp.eq.s32.totalorder %s13, 1
    %p52 = scmp.ne.s32.totalorder %s47, %s49
    %p53 = scmp.eq.s32.totalorder %s13, 0
    %p54 = por %p52, %p53
    %p55 = scmp.ne.s32.totalorder %s47, %s49
    %p56 = scmp.eq.s32.totalorder %s18, 1
    %p57 = por %p55, %p56
    %p58 = scmp.ne.s32.totalorder %s49, %s50
    %p59 = scmp.eq.s32.totalorder %s18, 0
    %p60 = por %p58, %p59
    %p61 = scmp.ne.s32.totalorder %s49, %s50
    %p62 = scmp.eq.s32.totalorder %s19, 1
    %p63 = por %p61, %p62
    %p65 = scmp.ne.s32.totalorder %s50, %s64
    %p66 = scmp.eq.s32.totalorder %s19, 0
    %p67 = por %p65, %p66
    %s69 = sadd.s32 %s68, 1
    %p72 = scmp.eq.s32.totalorder %s13, 1
    %p73 = scmp.ne.s32.totalorder %s68, %s70
    %p74 = scmp.eq.s32.totalorder %s13, 0
    %p75 = por %p73, %p74
    %p76 = scmp.ne.s32.totalorder %s68, %s70
    %p77 = scmp.eq.s32.totalorder %s18, 1
    %p78 = por %p76, %p77
    %p79 = scmp.ne.s32.totalorder %s70, %s71
    %p80 = scmp.eq.s32.totalorder %s18, 0
    %p81 = por %p79, %p80
    %p82 = scmp.ne.s32.totalorder %s70, %s71
    %p83 = scmp.eq.s32.totalorder %s19, 1
    %p84 = por %p82, %p83
    %p86 = scmp.ne.s32.totalorder %s71, %s85
    %p87 = scmp.eq.s32.totalorder %s19, 0
    %p88 = por %p86, %p87
    %s90 = sadd.s32 %s89, 1
    %p93 = scmp.eq.s32.totalorder %s13, 1
    %p94 = scmp.ne.s32.totalorder %s89, %s91
    %p95 = scmp.eq.s32.totalorder %s13, 0
    %p96 = por %p94, %p95
    %p97 = scmp.ne.s32.totalorder %s89, %s91
    %p98 = scmp.eq.s32.totalorder %s18, 1
    %p99 = por %p97, %p98
    %p100 = scmp.ne.s32.totalorder %s91, %s92
    %p101 = scmp.eq.s32.totalorder %s18, 0
    %p102 = por %p100, %p101
    %p103 = scmp.ne.s32.totalorder %s91, %s92
    %p104 = scmp.eq.s32.totalorder %s19, 1
    %p105 = por %p103, %p104
    %p107 = scmp.ne.s32.totalorder %s92, %s106
    %p108 = scmp.eq.s32.totalorder %s19, 0
    %p109 = por %p107, %p108
    %s111 = sadd.s32 %s110, 1
    %p114 = scmp.eq.s32.totalorder %s13, 1
    %p115 = scmp.ne.s32.totalorder %s110, %s112
    %p116 = scmp.eq.s32.totalorder %s13, 0
    %p117 = por %p115, %p116
    %p118 = scmp.ne.s32.totalorder %s110, %s112
    %p119 = scmp.eq.s32.totalorder %s18, 1
    %p120 = por %p118, %p119
    %p121 = scmp.ne.s32.totalorder %s112, %s113
    %p122 = scmp.eq.s32.totalorder %s18, 0
    %p123 = por %p121, %p122
    %p124 = scmp.ne.s32.totalorder %s112, %s113
    %p125 = scmp.eq.s32.totalorder %s19, 1
    %p126 = por %p124, %p125
    %p128 = scmp.ne.s32.totalorder %s113, %s127
    %p129 = scmp.eq.s32.totalorder %s19, 0
    %p130 = por %p128, %p129
    %s132 = sadd.s32 %s131, 1
    %p135 = scmp.eq.s32.totalorder %s13, 1
    %p136 = scmp.ne.s32.totalorder %s131, %s133
    %p137 = scmp.eq.s32.totalorder %s13, 0
    %p138 = por %p136, %p137
    %p139 = scmp.ne.s32.totalorder %s131, %s133
    %p140 = scmp.eq.s32.totalorder %s18, 1
    %p141 = por %p139, %p140
    %p142 = scmp.ne.s32.totalorder %s133, %s134
    %p143 = scmp.eq.s32.totalorder %s18, 0
    %p144 = por %p142, %p143
    %p145 = scmp.ne.s32.totalorder %s133, %s134
    %p146 = scmp.eq.s32.totalorder %s19, 1
    %p147 = por %p145, %p146
    %p149 = scmp.ne.s32.totalorder %s134, %s148
    %p150 = scmp.eq.s32.totalorder %s19, 0
    %p151 = por %p149, %p150
    %s153 = sadd.s32 %s152, 1
    %p156 = scmp.eq.s32.totalorder %s13, 1
    %p157 = scmp.ne.s32.totalorder %s152, %s154
    %p158 = scmp.eq.s32.totalorder %s13, 0
    %p159 = por %p157, %p158
    %p160 = scmp.ne.s32.totalorder %s152, %s154
    %p161 = scmp.eq.s32.totalorder %s18, 1
    %p162 = por %p160, %p161
    %p163 = scmp.ne.s32.totalorder %s154, %s155
    %p164 = scmp.eq.s32.totalorder %s18, 0
    %p165 = por %p163, %p164
    %p166 = scmp.ne.s32.totalorder %s154, %s155
    %p167 = scmp.eq.s32.totalorder %s19, 1
    %p168 = por %p166, %p167
    %p170 = scmp.ne.s32.totalorder %s155, %s169
    %p171 = scmp.eq.s32.totalorder %s19, 0
    %p172 = por %p170, %p171
    %s173 = ssub.s32 %s13, %s20
    %p174 = scmp.eq.s32.totalorder %s173, 0
    %s176 = sadd.s32 %s175, 1
    %s177 = scalar_select %p174, %s175, %s176
    %p180 = pneg %p174
    %p181 = scmp.eq.s32.totalorder %s13, 1
    %p182 = por %p180, %p181
    %p183 = scmp.ne.s32.totalorder %s175, %s178
    %p184 = scmp.eq.s32.totalorder %s13, 0
    %p185 = por %p183, %p184
    %p186 = scmp.ne.s32.totalorder %s175, %s178
    %p187 = scmp.eq.s32.totalorder %s18, 1
    %p188 = por %p186, %p187
    %p189 = scmp.ne.s32.totalorder %s178, %s179
    %p190 = scmp.eq.s32.totalorder %s18, 0
    %p191 = por %p189, %p190
    %p192 = scmp.ne.s32.totalorder %s178, %s179
    %p193 = scmp.eq.s32.totalorder %s19, 1
    %p194 = por %p192, %p193
    %p196 = scmp.ne.s32.totalorder %s179, %s195
    %p197 = scmp.eq.s32.totalorder %s19, 0
    %p198 = por %p196, %p197
    %p199 = scmp.le.s32.totalorder 1, %s13
    %p200 = scmp.lt.s32.totalorder %s13, 3
    %p201 = pnand %p199, %p200
    %p202 = pneg %p201
    // Predicated region
    $region9: #{csp_layer_forward.4} parent=5 // pred_check
      _
    $region10: #{csp_layer_forward.4} parent=5 // pred_check_branch
      %204 = sbr.rel (%p201) target = $region12
    $region11: #{csp_layer_forward.4} parent=5 // pred_region
      %s205 = ssub.s32 %s13, 1
      // Predicated region
      $region13: #{csp_layer_forward.4} parent=11 // pred_check
        %p206 = pneg %p60
      $region14: #{csp_layer_forward.4} parent=11 // pred_check_branch
        %208 = sbr.rel (%p206) target = $region16
      $region15: #{csp_layer_forward.4} parent=11 // pred_region
        _
      $region16: #{csp_layer_forward.4} parent=11 // pred_fallthru
        _
      // Predicated region
      $region17: #{csp_layer_forward.4} parent=11 // pred_check
        %p209 = pneg %p81
      $region18: #{csp_layer_forward.4} parent=11 // pred_check_branch
        %211 = sbr.rel (%p209) target = $region20
      $region19: #{csp_layer_forward.4} parent=11 // pred_region
        _
      $region20: #{csp_layer_forward.4} parent=11 // pred_fallthru
        _
      // Predicated region
      $region21: #{csp_layer_forward.4} parent=11 // pred_check
        %p212 = pneg %p102
      $region22: #{csp_layer_forward.4} parent=11 // pred_check_branch
        %214 = sbr.rel (%p212) target = $region24
      $region23: #{csp_layer_forward.4} parent=11 // pred_region
        _
      $region24: #{csp_layer_forward.4} parent=11 // pred_fallthru
        _
      // Predicated region
      $region25: #{csp_layer_forward.4} parent=11 // pred_check
        %p215 = pneg %p123
      $region26: #{csp_layer_forward.4} parent=11 // pred_check_branch
        %217 = sbr.rel (%p215) target = $region28
      $region27: #{csp_layer_forward.4} parent=11 // pred_region
        _
      $region28: #{csp_layer_forward.4} parent=11 // pred_fallthru
        _
      // Predicated region
      $region29: #{csp_layer_forward.4} parent=11 // pred_check
        %p218 = pneg %p144
      $region30: #{csp_layer_forward.4} parent=11 // pred_check_branch
        %220 = sbr.rel (%p218) target = $region32
      $region31: #{csp_layer_forward.4} parent=11 // pred_region
        _
      $region32: #{csp_layer_forward.4} parent=11 // pred_fallthru
        _
      // Predicated region
      $region33: #{csp_layer_forward.4} parent=11 // pred_check
        %p221 = pneg %p165
      $region34: #{csp_layer_forward.4} parent=11 // pred_check_branch
        %223 = sbr.rel (%p221) target = $region36
      $region35: #{csp_layer_forward.4} parent=11 // pred_region
        _
      $region36: #{csp_layer_forward.4} parent=11 // pred_fallthru
        _
    $region12: #{csp_layer_forward.4} parent=5 // pred_fallthru
      _
    %p224 = scmp.lt.s32.totalorder %s13, 2
    // Predicated region
    $region37: #{csp_layer_forward.4} parent=5 // pred_check
      %p225 = pneg %p224
    $region38: #{csp_layer_forward.4} parent=5 // pred_check_branch
      %227 = sbr.rel (%p225) target = $region40
    $region39: #{csp_layer_forward.4} parent=5 // pred_region
      // Predicated region
      $region41: #{csp_layer_forward.4} parent=39 // pred_check
        %p228 = pneg %p33
      $region42: #{csp_layer_forward.4} parent=39 // pred_check_branch
        %230 = sbr.rel (%p228) target = $region44
      $region43: #{csp_layer_forward.4} parent=39 // pred_region
        %p231 = scmp.lt.s32.totalorder %s13, 1
        %s232 = scalar_select %p231, %s13, 1
        %s233 = smul.addr %s232, 32
        %s234 = smul.addr %s233, 4
        %s235 = scalar_lea.vmem %s0, %s234
      $region44: #{csp_layer_forward.4} parent=39 // pred_fallthru
        _
    $region40: #{csp_layer_forward.4} parent=5 // pred_fallthru
      _
    %p236 = scmp.le.s32.totalorder 1, %s13
    %p237 = scmp.lt.s32.totalorder %s13, 3
    %p238 = pnand %p236, %p237
    %p239 = pneg %p238
    // Predicated region
    $region45: #{csp_layer_forward.4} parent=5 // pred_check
      _
    $region46: #{csp_layer_forward.4} parent=5 // pred_check_branch
      %241 = sbr.rel (%p238) target = $region48
    $region47: #{csp_layer_forward.4} parent=5 // pred_region
      %s242 = ssub.s32 %s13, 1
      %p243 = scmp.lt.s32.totalorder %s18, 1
      %s244 = scalar_select %p243, %s18, 1
      %s245 = smul.addr %s244, 32
      %s246 = smul.addr %s245, 4
      %s247 = scalar_lea.vmem %s0, %s246
      %p248 = pneg %p39
      %p249 = pneg %p36
      %p250 = pneg %p60
      %p251 = pneg %p57
      %p252 = pneg %p81
      %p253 = pneg %p78
      %p254 = pneg %p102
      %p255 = pneg %p99
      %p256 = pneg %p123
      %p257 = pneg %p120
      %p258 = pneg %p144
      %p259 = pneg %p141
      %p260 = pneg %p165
      %p261 = pneg %p162
      %p262 = pneg %p191
      %p263 = pneg %p188
      %p264 = scmp.lt.s32.totalorder %s18, 1
      %s265 = scalar_select %p264, %s18, 1
      %s266 = smul.addr %s265, 32
      %s267 = smul.addr %s266, 4
      %s268 = scalar_lea.vmem %s7, %s267
      %p269 = scmp.lt.s32.totalorder %s18, 1
      %s270 = scalar_select %p269, %s18, 1
      %s271 = smul.addr %s270, 32
      %s272 = smul.addr %s271, 4
      %s273 = scalar_lea.vmem %s0, %s272
      %p274 = scmp.lt.s32.totalorder %s18, 1
      %s275 = scalar_select %p274, %s18, 1
      %s276 = smul.addr %s275, 32
      %s277 = smul.addr %s276, 4
      %s278 = scalar_lea.vmem %s7, %s277
      %v282 = vld [vmem:[%s273] sm:$0xf]
      %v283 = vld [vmem:[%s273 + $0x4] sm:$0xf]
      %v284 = vld [vmem:[%s273 + $0x8] sm:$0xf]
      %v285 = vld [vmem:[%s273 + $0xc] sm:$0xf]
      %v286 = vld [vmem:[%s273 + $0x10] sm:$0xf]
      %v287 = vld [vmem:[%s273 + $0x14] sm:$0xf]
      %v288 = vld [vmem:[%s273 + $0x18] sm:$0xf]
      %v289 = vld [vmem:[%s273 + $0x1c] sm:$0xf]
      %v290 = vld [vmem:[%s273 + $0x20] sm:$0xf]
      %v291 = vld [vmem:[%s273 + $0x24] sm:$0xf]
      %v292 = vld [vmem:[%s273 + $0x28] sm:$0xf]
      %v293 = vld [vmem:[%s273 + $0x2c] sm:$0xf]
      %v294 = vld [vmem:[%s273 + $0x30] sm:$0xf]
      %v295 = vld [vmem:[%s273 + $0x34] sm:$0xf]
      %v296 = vld [vmem:[%s273 + $0x38] sm:$0xf]
      %v297 = vld [vmem:[%s273 + $0x3c] sm:$0xf]
      %v298 = vld [vmem:[%s273 + $0x40] sm:$0xf]
      %v299 = vld [vmem:[%s273 + $0x44] sm:$0xf]
      %v300 = vld [vmem:[%s273 + $0x48] sm:$0xf]
      %v301 = vld [vmem:[%s273 + $0x4c] sm:$0xf]
      %v302 = vld [vmem:[%s273 + $0x50] sm:$0xf]
      %v303 = vld [vmem:[%s273 + $0x54] sm:$0xf]
      %v304 = vld [vmem:[%s273 + $0x58] sm:$0xf]
      %v305 = vld [vmem:[%s273 + $0x5c] sm:$0xf]
      %v306 = vld [vmem:[%s273 + $0x60] sm:$0xf]
      %v307 = vld [vmem:[%s273 + $0x64] sm:$0xf]
      %v308 = vld [vmem:[%s273 + $0x68] sm:$0xf]
      %v309 = vld [vmem:[%s273 + $0x6c] sm:$0xf]
      %v310 = vld [vmem:[%s273 + $0x70] sm:$0xf]
      %v311 = vld [vmem:[%s273 + $0x74] sm:$0xf]
      %v312 = vld [vmem:[%s273 + $0x78] sm:$0xf]
      %v313 = vld [vmem:[%s273 + $0x7c] sm:$0xf]
      %v314 = vld [vmem:[%s1] sm:$0xf]
      %v315 = vld [vmem:[%s1 + $0x4] sm:$0xf]
      %v316 = vld [vmem:[%s1 + $0x8] sm:$0xf]
      %v317 = vld [vmem:[%s1 + $0xc] sm:$0xf]
      %v318 = vld [vmem:[%s1 + $0x10] sm:$0xf]
      %v319 = vld [vmem:[%s1 + $0x14] sm:$0xf]
      %v320 = vld [vmem:[%s1 + $0x18] sm:$0xf]
      %v321 = vld [vmem:[%s1 + $0x1c] sm:$0xf]
      %v322 = vld [vmem:[%s1 + $0x20] sm:$0xf]
      %v323 = vld [vmem:[%s1 + $0x24] sm:$0xf]
      %v324 = vld [vmem:[%s1 + $0x28] sm:$0xf]
      %v325 = vld [vmem:[%s1 + $0x2c] sm:$0xf]
      %v326 = vld [vmem:[%s1 + $0x30] sm:$0xf]
      %v327 = vld [vmem:[%s1 + $0x34] sm:$0xf]
      %v328 = vld [vmem:[%s1 + $0x38] sm:$0xf]
      %v329 = vld [vmem:[%s1 + $0x3c] sm:$0xf]
      %v362 = vunpack.c.l.b16 %v282
      %v363 = vunpack.c.l.b16 %v283
      %v364 = vunpack.c.l.b16 %v284
      %v365 = vunpack.c.l.b16 %v285
      %v366 = vunpack.c.l.b16 %v286
      %v367 = vunpack.c.l.b16 %v287
      %v368 = vunpack.c.l.b16 %v288
      %v369 = vunpack.c.l.b16 %v289
      %v370 = vunpack.c.l.b16 %v290
      %v371 = vunpack.c.l.b16 %v291
      %v372 = vunpack.c.l.b16 %v292
      %v373 = vunpack.c.l.b16 %v293
      %v374 = vunpack.c.l.b16 %v294
      %v375 = vunpack.c.l.b16 %v295
      %v376 = vunpack.c.l.b16 %v296
      %v377 = vunpack.c.l.b16 %v297
      %v378 = vunpack.c.l.b16 %v298
      %v379 = vunpack.c.l.b16 %v299
      %v380 = vunpack.c.l.b16 %v300
      %v381 = vunpack.c.l.b16 %v301
      %v382 = vunpack.c.l.b16 %v302
      %v383 = vunpack.c.l.b16 %v303
      %v384 = vunpack.c.l.b16 %v304
      %v385 = vunpack.c.l.b16 %v305
      %v386 = vunpack.c.l.b16 %v306
      %v387 = vunpack.c.l.b16 %v307
      %v388 = vunpack.c.l.b16 %v308
      %v389 = vunpack.c.l.b16 %v309
      %v390 = vunpack.c.l.b16 %v310
      %v391 = vunpack.c.l.b16 %v311
      %v392 = vunpack.c.l.b16 %v312
      %v393 = vunpack.c.l.b16 %v313
      %v394 = vpack.c.b16 %v363, %v362
      %v395 = vpack.c.b16 %v365, %v364
      %v396 = vpack.c.b16 %v367, %v366
      %v397 = vpack.c.b16 %v369, %v368
      %v398 = vpack.c.b16 %v371, %v370
      %v399 = vpack.c.b16 %v373, %v372
      %v400 = vpack.c.b16 %v375, %v374
      %v401 = vpack.c.b16 %v377, %v376
      %v402 = vpack.c.b16 %v379, %v378
      %v403 = vpack.c.b16 %v381, %v380
      %v404 = vpack.c.b16 %v383, %v382
      %v405 = vpack.c.b16 %v385, %v384
      %v406 = vpack.c.b16 %v387, %v386
      %v407 = vpack.c.b16 %v389, %v388
      %v408 = vpack.c.b16 %v391, %v390
      %v409 = vpack.c.b16 %v393, %v392
      %v442 = vunpack.c.l.b16 %v314
      %v443 = vunpack.c.l.b16 %v315
      %v444 = vunpack.c.l.b16 %v316
      %v445 = vunpack.c.l.b16 %v317
      %v446 = vunpack.c.l.b16 %v318
      %v447 = vunpack.c.l.b16 %v319
      %v448 = vunpack.c.l.b16 %v320
      %v449 = vunpack.c.l.b16 %v321
      %v450 = vunpack.c.l.b16 %v322
      %v451 = vunpack.c.l.b16 %v323
      %v452 = vunpack.c.l.b16 %v324
      %v453 = vunpack.c.l.b16 %v325
      %v454 = vunpack.c.l.b16 %v326
      %v455 = vunpack.c.l.b16 %v327
      %v456 = vunpack.c.l.b16 %v328
      %v457 = vunpack.c.l.b16 %v329
      %v458 = vpack.c.b16 %v443, %v442
      %v459 = vpack.c.b16 %v445, %v444
      %v460 = vpack.c.b16 %v447, %v446
      %v461 = vpack.c.b16 %v449, %v448
      %v462 = vpack.c.b16 %v451, %v450
      %v463 = vpack.c.b16 %v453, %v452
      %v464 = vpack.c.b16 %v455, %v454
      %v465 = vpack.c.b16 %v457, %v456
      %474 = vmatprep.subr.bf16.mxu0 0
      %475 = vmatpush1.bf16.msra.mxu0 %v458
      %476 = vmatprep.subr.bf16.mxu0 0
      %477 = vmatpush1.bf16.msra.mxu0 %v459
      %478 = vmatprep.subr.bf16.mxu0 0
      %479 = vmatpush1.bf16.msra.mxu0 %v460
      %480 = vmatprep.subr.bf16.mxu0 0
      %481 = vmatpush1.bf16.msra.mxu0 %v461
      %482 = vmatprep.subr.bf16.mxu0 0
      %483 = vmatpush1.bf16.msra.mxu0 %v462
      %484 = vmatprep.subr.bf16.mxu0 0
      %485 = vmatpush1.bf16.msra.mxu0 %v463
      %486 = vmatprep.subr.bf16.mxu0 0
      %487 = vmatpush1.bf16.msra.mxu0 %v464
      %488 = vmatprep.subr.bf16.mxu0 0
      %489 = vmatpush1.bf16.msra.mxu0 %v465
      %490 = vmatprep.subr.bf16.mxu0 0
      %491 = vmatpush1.bf16.msra.mxu0 0
      %492 = vmatprep.subr.bf16.mxu0 0
      %493 = vmatpush1.bf16.msra.mxu0 0
      %494 = vmatprep.subr.bf16.mxu0 0
      %495 = vmatpush1.bf16.msra.mxu0 0
      %496 = vmatprep.subr.bf16.mxu0 0
      %497 = vmatpush1.bf16.msra.mxu0 0
      %498 = vmatprep.subr.bf16.mxu0 0
      %499 = vmatpush1.bf16.msra.mxu0 0
      %500 = vmatprep.subr.bf16.mxu0 0
      %501 = vmatpush1.bf16.msra.mxu0 0
      %502 = vmatprep.subr.bf16.mxu0 0
      %503 = vmatpush1.bf16.msra.mxu0 0
      %504 = vmatprep.subr.bf16.mxu0 0
      %505 = vmatpush1.bf16.msra.mxu0 0
      %506 = vmatprep.mubr.bf16.mxu0 0
      %507 = vmatmul.mubr.bf16.gmra.mrb[0].mxu0 %v394
      %v508 = vpop.f32.mrb[0].mxu0
      %v509 = vadd.f32 0.0, %v508
      %v510 = vpop.f32.mrb[0].mxu0
      %v511 = vpop.f32.mrb[0].mxu0
      %v512 = vadd.f32 0.0, %v511
      %v513 = vpop.f32.mrb[0].mxu0
      %514 = vmatprep.mubr.bf16.mxu0 0
      %515 = vmatmul.mubr.bf16.gmra.mrb[0].mxu0 %v395
      %v516 = vpop.f32.mrb[0].mxu0
      %v517 = vadd.f32 0.0, %v516
      %v518 = vpop.f32.mrb[0].mxu0
      %v519 = vpop.f32.mrb[0].mxu0
      %v520 = vadd.f32 0.0, %v519
      %v521 = vpop.f32.mrb[0].mxu0
      %522 = vmatprep.mubr.bf16.mxu0 0
      %523 = vmatmul.mubr.bf16.gmra.mrb[0].mxu0 %v396
      %v524 = vpop.f32.mrb[0].mxu0
      %v525 = vadd.f32 0.0, %v524
      %v526 = vpop.f32.mrb[0].mxu0
      %v527 = vpop.f32.mrb[0].mxu0
      %v528 = vadd.f32 0.0, %v527
      %v529 = vpop.f32.mrb[0].mxu0
      %530 = vmatprep.mubr.bf16.mxu0 0
      %531 = vmatmul.mubr.bf16.gmra.mrb[0].mxu0 %v397
      %v532 = vpop.f32.mrb[0].mxu0
      %v533 = vadd.f32 0.0, %v532
      %v534 = vpop.f32.mrb[0].mxu0
      %v535 = vpop.f32.mrb[0].mxu0
      %v536 = vadd.f32 0.0, %v535
      %v537 = vpop.f32.mrb[0].mxu0
      %538 = vmatprep.mubr.bf16.mxu0 0
      %539 = vmatmul.mubr.bf16.gmra.mrb[0].mxu0 %v398
      %v540 = vpop.f32.mrb[0].mxu0
      %v541 = vadd.f32 0.0, %v540
      %v542 = vpop.f32.mrb[0].mxu0
      %v543 = vpop.f32.mrb[0].mxu0
      %v544 = vadd.f32 0.0, %v543
      %v545 = vpop.f32.mrb[0].mxu0
      %546 = vmatprep.mubr.bf16.mxu0 0
      %547 = vmatmul.mubr.bf16.gmra.mrb[0].mxu0 %v399
      %v548 = vpop.f32.mrb[0].mxu0
      %v549 = vadd.f32 0.0, %v548
      %v550 = vpop.f32.mrb[0].mxu0
      %v551 = vpop.f32.mrb[0].mxu0
      %v552 = vadd.f32 0.0, %v551
      %v553 = vpop.f32.mrb[0].mxu0
      %554 = vmatprep.mubr.bf16.mxu0 0
      %555 = vmatmul.mubr.bf16.gmra.mrb[0].mxu0 %v400
      %v556 = vpop.f32.mrb[0].mxu0
      %v557 = vadd.f32 0.0, %v556
      %v558 = vpop.f32.mrb[0].mxu0
      %v559 = vpop.f32.mrb[0].mxu0
      %v560 = vadd.f32 0.0, %v559
      %v561 = vpop.f32.mrb[0].mxu0
      %562 = vmatprep.mubr.bf16.mxu0 0
      %563 = vmatmul.mubr.bf16.gmra.mrb[0].mxu0 %v401
      %v564 = vpop.f32.mrb[0].mxu0
      %v565 = vadd.f32 0.0, %v564
      %v566 = vpop.f32.mrb[0].mxu0
      %v567 = vpop.f32.mrb[0].mxu0
      %v568 = vadd.f32 0.0, %v567
      %v569 = vpop.f32.mrb[0].mxu0
      %570 = vmatprep.mubr.bf16.mxu0 0
      %571 = vmatmul.mubr.bf16.gmra.mrb[0].mxu0 %v402
      %v572 = vpop.f32.mrb[0].mxu0
      %v573 = vadd.f32 0.0, %v572
      %v574 = vpop.f32.mrb[0].mxu0
      %v575 = vpop.f32.mrb[0].mxu0
      %v576 = vadd.f32 0.0, %v575
      %v577 = vpop.f32.mrb[0].mxu0
      %578 = vmatprep.mubr.bf16.mxu0 0
      %579 = vmatmul.mubr.bf16.gmra.mrb[0].mxu0 %v403
      %v580 = vpop.f32.mrb[0].mxu0
      %v581 = vadd.f32 0.0, %v580
      %v582 = vpop.f32.mrb[0].mxu0
      %v583 = vpop.f32.mrb[0].mxu0
      %v584 = vadd.f32 0.0, %v583
      %v585 = vpop.f32.mrb[0].mxu0
      %586 = vmatprep.mubr.bf16.mxu0 0
      %587 = vmatmul.mubr.bf16.gmra.mrb[0].mxu0 %v404
      %v588 = vpop.f32.mrb[0].mxu0
      %v589 = vadd.f32 0.0, %v588
      %v590 = vpop.f32.mrb[0].mxu0
      %v591 = vpop.f32.mrb[0].mxu0
      %v592 = vadd.f32 0.0, %v591
      %v593 = vpop.f32.mrb[0].mxu0
      %594 = vmatprep.mubr.bf16.mxu0 0
      %595 = vmatmul.mubr.bf16.gmra.mrb[0].mxu0 %v405
      %v596 = vpop.f32.mrb[0].mxu0
      %v597 = vadd.f32 0.0, %v596
      %v598 = vpop.f32.mrb[0].mxu0
      %v599 = vpop.f32.mrb[0].mxu0
      %v600 = vadd.f32 0.0, %v599
      %v601 = vpop.f32.mrb[0].mxu0
      %602 = vmatprep.mubr.bf16.mxu0 0
      %603 = vmatmul.mubr.bf16.gmra.mrb[0].mxu0 %v406
      %v604 = vpop.f32.mrb[0].mxu0
      %v605 = vadd.f32 0.0, %v604
      %v606 = vpop.f32.mrb[0].mxu0
      %v607 = vpop.f32.mrb[0].mxu0
      %v608 = vadd.f32 0.0, %v607
      %v609 = vpop.f32.mrb[0].mxu0
      %610 = vmatprep.mubr.bf16.mxu0 0
      %611 = vmatmul.mubr.bf16.gmra.mrb[0].mxu0 %v407
      %v612 = vpop.f32.mrb[0].mxu0
      %v613 = vadd.f32 0.0, %v612
      %v614 = vpop.f32.mrb[0].mxu0
      %v615 = vpop.f32.mrb[0].mxu0
      %v616 = vadd.f32 0.0, %v615
      %v617 = vpop.f32.mrb[0].mxu0
      %618 = vmatprep.mubr.bf16.mxu0 0
      %619 = vmatmul.mubr.bf16.gmra.mrb[0].mxu0 %v408
      %v620 = vpop.f32.mrb[0].mxu0
      %v621 = vadd.f32 0.0, %v620
      %v622 = vpop.f32.mrb[0].mxu0
      %v623 = vpop.f32.mrb[0].mxu0
      %v624 = vadd.f32 0.0, %v623
      %v625 = vpop.f32.mrb[0].mxu0
      %626 = vmatprep.mubr.bf16.mxu0 0
      %627 = vmatmul.mubr.bf16.gmra.mrb[0].mxu0 %v409
      %v628 = vpop.f32.mrb[0].mxu0
      %v629 = vadd.f32 0.0, %v628
      %v630 = vpop.f32.mrb[0].mxu0
      %v631 = vpop.f32.mrb[0].mxu0
      %v632 = vadd.f32 0.0, %v631
      %v633 = vpop.f32.mrb[0].mxu0
      %634 = vdwg.mxu0
      %v635 = vld [vmem:[%s2] sm:$0x1]
      %v637 = vlaneseq
      %v638 = vshrl.u32 %v637, 7
      %v639 = vsub.s32 0, %v638
      %v640 = vrot.slane %v635, %v639
      %v642 = vmul.f32 %v509, %v640
      %v643 = vmul.f32 %v512, %v640
      %v644 = vmul.f32 %v517, %v640
      %v645 = vmul.f32 %v520, %v640
      %v646 = vmul.f32 %v525, %v640
      %v647 = vmul.f32 %v528, %v640
      %v648 = vmul.f32 %v533, %v640
      %v649 = vmul.f32 %v536, %v640
      %v650 = vmul.f32 %v541, %v640
      %v651 = vmul.f32 %v544, %v640
      %v652 = vmul.f32 %v549, %v640
      %v653 = vmul.f32 %v552, %v640
      %v654 = vmul.f32 %v557, %v640
      %v655 = vmul.f32 %v560, %v640
      %v656 = vmul.f32 %v565, %v640
      %v657 = vmul.f32 %v568, %v640
      %v658 = vmul.f32 %v573, %v640
      %v659 = vmul.f32 %v576, %v640
      %v660 = vmul.f32 %v581, %v640
      %v661 = vmul.f32 %v584, %v640
      %v662 = vmul.f32 %v589, %v640
      %v663 = vmul.f32 %v592, %v640
      %v664 = vmul.f32 %v597, %v640
      %v665 = vmul.f32 %v600, %v640
      %v666 = vmul.f32 %v605, %v640
      %v667 = vmul.f32 %v608, %v640
      %v668 = vmul.f32 %v613, %v640
      %v669 = vmul.f32 %v616, %v640
      %v670 = vmul.f32 %v621, %v640
      %v671 = vmul.f32 %v624, %v640
      %v672 = vmul.f32 %v629, %v640
      %v673 = vmul.f32 %v632, %v640
      %v674 = vld [vmem:[%s3] sm:$0x1]
      %v676 = vlaneseq
      %v677 = vshrl.u32 %v676, 7
      %v678 = vsub.s32 0, %v677
      %v679 = vrot.slane %v674, %v678
      %v681 = vadd.f32 %v642, %v679
      %v682 = vadd.f32 %v643, %v679
      %v683 = vadd.f32 %v644, %v679
      %v684 = vadd.f32 %v645, %v679
      %v685 = vadd.f32 %v646, %v679
      %v686 = vadd.f32 %v647, %v679
      %v687 = vadd.f32 %v648, %v679
      %v688 = vadd.f32 %v649, %v679
      %v689 = vadd.f32 %v650, %v679
      %v690 = vadd.f32 %v651, %v679
      %v691 = vadd.f32 %v652, %v679
      %v692 = vadd.f32 %v653, %v679
      %v693 = vadd.f32 %v654, %v679
      %v694 = vadd.f32 %v655, %v679
      %v695 = vadd.f32 %v656, %v679
      %v696 = vadd.f32 %v657, %v679
      %v697 = vadd.f32 %v658, %v679
      %v698 = vadd.f32 %v659, %v679
      %v699 = vadd.f32 %v660, %v679
      %v700 = vadd.f32 %v661, %v679
      %v701 = vadd.f32 %v662, %v679
      %v702 = vadd.f32 %v663, %v679
      %v703 = vadd.f32 %v664, %v679
      %v704 = vadd.f32 %v665, %v679
      %v705 = vadd.f32 %v666, %v679
      %v706 = vadd.f32 %v667, %v679
      %v707 = vadd.f32 %v668, %v679
      %v708 = vadd.f32 %v669, %v679
      %v709 = vadd.f32 %v670, %v679
      %v710 = vadd.f32 %v671, %v679
      %v711 = vadd.f32 %v672, %v679
      %v712 = vadd.f32 %v673, %v679
      %v713 = vsub.f32 0.0, %v681
      %v714 = vsub.f32 0.0, %v682
      %v715 = vsub.f32 0.0, %v683
      %v716 = vsub.f32 0.0, %v684
      %v717 = vsub.f32 0.0, %v685
      %v718 = vsub.f32 0.0, %v686
      %v719 = vsub.f32 0.0, %v687
      %v720 = vsub.f32 0.0, %v688
      %v721 = vsub.f32 0.0, %v689
      %v722 = vsub.f32 0.0, %v690
      %v723 = vsub.f32 0.0, %v691
      %v724 = vsub.f32 0.0, %v692
      %v725 = vsub.f32 0.0, %v693
      %v726 = vsub.f32 0.0, %v694
      %v727 = vsub.f32 0.0, %v695
      %v728 = vsub.f32 0.0, %v696
      %v729 = vsub.f32 0.0, %v697
      %v730 = vsub.f32 0.0, %v698
      %v731 = vsub.f32 0.0, %v699
      %v732 = vsub.f32 0.0, %v700
      %v733 = vsub.f32 0.0, %v701
      %v734 = vsub.f32 0.0, %v702
      %v735 = vsub.f32 0.0, %v703
      %v736 = vsub.f32 0.0, %v704
      %v737 = vsub.f32 0.0, %v705
      %v738 = vsub.f32 0.0, %v706
      %v739 = vsub.f32 0.0, %v707
      %v740 = vsub.f32 0.0, %v708
      %v741 = vsub.f32 0.0, %v709
      %v742 = vsub.f32 0.0, %v710
      %v743 = vsub.f32 0.0, %v711
      %v744 = vsub.f32 0.0, %v712
      %v745 = vmul.f32 %v713, 1.442695
      %v746 = vpow.pop %v745
      %v747 = vmul.f32 %v714, 1.442695
      %v748 = vpow.pop %v747
      %v749 = vmul.f32 %v715, 1.442695
      %v750 = vpow.pop %v749
      %v751 = vmul.f32 %v716, 1.442695
      %v752 = vpow.pop %v751
      %v753 = vmul.f32 %v717, 1.442695
      %v754 = vpow.pop %v753
      %v755 = vmul.f32 %v718, 1.442695
      %v756 = vpow.pop %v755
      %v757 = vmul.f32 %v719, 1.442695
      %v758 = vpow.pop %v757
      %v759 = vmul.f32 %v720, 1.442695
      %v760 = vpow.pop %v759
      %v761 = vmul.f32 %v721, 1.442695
      %v762 = vpow.pop %v761
      %v763 = vmul.f32 %v722, 1.442695
      %v764 = vpow.pop %v763
      %v765 = vmul.f32 %v723, 1.442695
      %v766 = vpow.pop %v765
      %v767 = vmul.f32 %v724, 1.442695
      %v768 = vpow.pop %v767
      %v769 = vmul.f32 %v725, 1.442695
      %v770 = vpow.pop %v769
      %v771 = vmul.f32 %v726, 1.442695
      %v772 = vpow.pop %v771
      %v773 = vmul.f32 %v727, 1.442695
      %v774 = vpow.pop %v773
      %v775 = vmul.f32 %v728, 1.442695
      %v776 = vpow.pop %v775
      %v777 = vmul.f32 %v729, 1.442695
      %v778 = vpow.pop %v777
      %v779 = vmul.f32 %v730, 1.442695
      %v780 = vpow.pop %v779
      %v781 = vmul.f32 %v731, 1.442695
      %v782 = vpow.pop %v781
      %v783 = vmul.f32 %v732, 1.442695
      %v784 = vpow.pop %v783
      %v785 = vmul.f32 %v733, 1.442695
      %v786 = vpow.pop %v785
      %v787 = vmul.f32 %v734, 1.442695
      %v788 = vpow.pop %v787
      %v789 = vmul.f32 %v735, 1.442695
      %v790 = vpow.pop %v789
      %v791 = vmul.f32 %v736, 1.442695
      %v792 = vpow.pop %v791
      %v793 = vmul.f32 %v737, 1.442695
      %v794 = vpow.pop %v793
      %v795 = vmul.f32 %v738, 1.442695
      %v796 = vpow.pop %v795
      %v797 = vmul.f32 %v739, 1.442695
      %v798 = vpow.pop %v797
      %v799 = vmul.f32 %v740, 1.442695
      %v800 = vpow.pop %v799
      %v801 = vmul.f32 %v741, 1.442695
      %v802 = vpow.pop %v801
      %v803 = vmul.f32 %v742, 1.442695
      %v804 = vpow.pop %v803
      %v805 = vmul.f32 %v743, 1.442695
      %v806 = vpow.pop %v805
      %v807 = vmul.f32 %v744, 1.442695
      %v808 = vpow.pop %v807
      %v809 = vadd.f32 %v746, 1.0
      %v810 = vadd.f32 %v748, 1.0
      %v811 = vadd.f32 %v750, 1.0
      %v812 = vadd.f32 %v752, 1.0
      %v813 = vadd.f32 %v754, 1.0
      %v814 = vadd.f32 %v756, 1.0
      %v815 = vadd.f32 %v758, 1.0
      %v816 = vadd.f32 %v760, 1.0
      %v817 = vadd.f32 %v762, 1.0
      %v818 = vadd.f32 %v764, 1.0
      %v819 = vadd.f32 %v766, 1.0
      %v820 = vadd.f32 %v768, 1.0
      %v821 = vadd.f32 %v770, 1.0
      %v822 = vadd.f32 %v772, 1.0
      %v823 = vadd.f32 %v774, 1.0
      %v824 = vadd.f32 %v776, 1.0
      %v825 = vadd.f32 %v778, 1.0
      %v826 = vadd.f32 %v780, 1.0
      %v827 = vadd.f32 %v782, 1.0
      %v828 = vadd.f32 %v784, 1.0
      %v829 = vadd.f32 %v786, 1.0
      %v830 = vadd.f32 %v788, 1.0
      %v831 = vadd.f32 %v790, 1.0
      %v832 = vadd.f32 %v792, 1.0
      %v833 = vadd.f32 %v794, 1.0
      %v834 = vadd.f32 %v796, 1.0
      %v835 = vadd.f32 %v798, 1.0
      %v836 = vadd.f32 %v800, 1.0
      %v837 = vadd.f32 %v802, 1.0
      %v838 = vadd.f32 %v804, 1.0
      %v839 = vadd.f32 %v806, 1.0
      %v840 = vadd.f32 %v808, 1.0
      %v841 = vrcp.pop %v809
      %v842 = vrcp.pop %v810
      %v843 = vrcp.pop %v811
      %v844 = vrcp.pop %v812
      %v845 = vrcp.pop %v813
      %v846 = vrcp.pop %v814
      %v847 = vrcp.pop %v815
      %v848 = vrcp.pop %v816
      %v849 = vrcp.pop %v817
      %v850 = vrcp.pop %v818
      %v851 = vrcp.pop %v819
      %v852 = vrcp.pop %v820
      %v853 = vrcp.pop %v821
      %v854 = vrcp.pop %v822
      %v855 = vrcp.pop %v823
      %v856 = vrcp.pop %v824
      %v857 = vrcp.pop %v825
      %v858 = vrcp.pop %v826
      %v859 = vrcp.pop %v827
      %v860 = vrcp.pop %v828
      %v861 = vrcp.pop %v829
      %v862 = vrcp.pop %v830
      %v863 = vrcp.pop %v831
      %v864 = vrcp.pop %v832
      %v865 = vrcp.pop %v833
      %v866 = vrcp.pop %v834
      %v867 = vrcp.pop %v835
      %v868 = vrcp.pop %v836
      %v869 = vrcp.pop %v837
      %v870 = vrcp.pop %v838
      %v871 = vrcp.pop %v839
      %v872 = vrcp.pop %v840
      %v873 = vmul.f32 %v681, %v841
      %v874 = vmul.f32 %v682, %v842
      %v875 = vmul.f32 %v683, %v843
      %v876 = vmul.f32 %v684, %v844
      %v877 = vmul.f32 %v685, %v845
      %v878 = vmul.f32 %v686, %v846
      %v879 = vmul.f32 %v687, %v847
      %v880 = vmul.f32 %v688, %v848
      %v881 = vmul.f32 %v689, %v849
      %v882 = vmul.f32 %v690, %v850
      %v883 = vmul.f32 %v691, %v851
      %v884 = vmul.f32 %v692, %v852
      %v885 = vmul.f32 %v693, %v853
      %v886 = vmul.f32 %v694, %v854
      %v887 = vmul.f32 %v695, %v855
      %v888 = vmul.f32 %v696, %v856
      %v889 = vmul.f32 %v697, %v857
      %v890 = vmul.f32 %v698, %v858
      %v891 = vmul.f32 %v699, %v859
      %v892 = vmul.f32 %v700, %v860
      %v893 = vmul.f32 %v701, %v861
      %v894 = vmul.f32 %v702, %v862
      %v895 = vmul.f32 %v703, %v863
      %v896 = vmul.f32 %v704, %v864
      %v897 = vmul.f32 %v705, %v865
      %v898 = vmul.f32 %v706, %v866
      %v899 = vmul.f32 %v707, %v867
      %v900 = vmul.f32 %v708, %v868
      %v901 = vmul.f32 %v709, %v869
      %v902 = vmul.f32 %v710, %v870
      %v903 = vmul.f32 %v711, %v871
      %v904 = vmul.f32 %v712, %v872
      %v905 = vpack.c.bf16 %v874, %v873
      %v906 = vpack.c.bf16 %v876, %v875
      %v907 = vpack.c.bf16 %v878, %v877
      %v908 = vpack.c.bf16 %v880, %v879
      %v909 = vpack.c.bf16 %v882, %v881
      %v910 = vpack.c.bf16 %v884, %v883
      %v911 = vpack.c.bf16 %v886, %v885
      %v912 = vpack.c.bf16 %v888, %v887
      %v913 = vpack.c.bf16 %v890, %v889
      %v914 = vpack.c.bf16 %v892, %v891
      %v915 = vpack.c.bf16 %v894, %v893
      %v916 = vpack.c.bf16 %v896, %v895
      %v917 = vpack.c.bf16 %v898, %v897
      %v918 = vpack.c.bf16 %v900, %v899
      %v919 = vpack.c.bf16 %v902, %v901
      %v920 = vpack.c.bf16 %v904, %v903
      %v921 = vlaneseq
      %v922 = vshrl.u32 %v921, 7
      %v923 = vadd.s32 %v922, 8
      %vm924 = vcmp.lt.s32.totalorder %v922, 15
      %vm925 = vcmp.lt.s32.totalorder %v923, 15
      %vm926 = vmpackc.low %vm924, %vm924
      %vm927 = vmpackc.low %vm925, %vm925
      %v928 = vsel %vm926, 65537, 0
      %v929 = vsel %vm927, 65537, 0
      %v930 = vunpack.c.l.b16 %v928
      %v931 = vunpack.c.l.b16 %v929
      %v932 = vpack.c.b16 %v931, %v930
      %vm933 = vcmp.ne.s16.totalorder %v932, 0
      %v934 = vsel %vm933, %v905, 0
      %v935 = vsel %vm933, %v906, 0
      %v936 = vsel %vm933, %v907, 0
      %v937 = vsel %vm933, %v908, 0
      %v938 = vsel %vm933, %v909, 0
      %v939 = vsel %vm933, %v910, 0
      %v940 = vsel %vm933, %v911, 0
      %v941 = vsel %vm933, %v912, 0
      %v942 = vsel %vm933, %v913, 0
      %v943 = vsel %vm933, %v914, 0
      %v944 = vsel %vm933, %v915, 0
      %v945 = vsel %vm933, %v916, 0
      %v946 = vsel %vm933, %v917, 0
      %v947 = vsel %vm933, %v918, 0
      %v948 = vsel %vm933, %v919, 0
      %v949 = vsel %vm933, %v920, 0
      %vm950 = vcmp.gt.s32.totalorder %v922, 0
      %vm951 = vcmp.gt.s32.totalorder %v923, 0
      %vm952 = vmpackc.low %vm950, %vm950
      %vm953 = vmpackc.low %vm951, %vm951
      %v954 = vsel %vm952, 65537, 0
      %v955 = vsel %vm953, 65537, 0
      %v956 = vunpack.c.l.b16 %v954
      %v957 = vunpack.c.l.b16 %v955
      %v958 = vpack.c.b16 %v957, %v956
      %vm959 = vcmp.ne.s16.totalorder %v958, 0
      %v960 = vsel %vm959, %v905, 0
      %v961 = vsel %vm959, %v906, 0
      %v962 = vsel %vm959, %v907, 0
      %v963 = vsel %vm959, %v908, 0
      %v964 = vsel %vm959, %v909, 0
      %v965 = vsel %vm959, %v910, 0
      %v966 = vsel %vm959, %v911, 0
      %v967 = vsel %vm959, %v912, 0
      %v968 = vsel %vm959, %v913, 0
      %v969 = vsel %vm959, %v914, 0
      %v970 = vsel %vm959, %v915, 0
      %v971 = vsel %vm959, %v916, 0
      %v972 = vsel %vm959, %v917, 0
      %v973 = vsel %vm959, %v918, 0
      %v974 = vsel %vm959, %v919, 0
      %v975 = vsel %vm959, %v920, 0
      %vm976 = vsmask.f32 7424
      %v978 = vshll.u32 0, 16
      %v980 = vrot.slane %v978, 1
      %v981 = vshrl.u32 0, 16
      %v983 = vor.u32 %v981, %v980
      %v985 = vshll.u32 %v905, 16
      %v987 = vrot.slane %v985, 1
      %v988 = vsel %vm976, %v983, %v987
      %v989 = vshrl.u32 %v905, 16
      %v991 = vor.u32 %v989, %v987
      %v993 = vshll.u32 %v906, 16
      %v995 = vrot.slane %v993, 1
      %v996 = vsel %vm976, %v991, %v995
      %v997 = vshrl.u32 %v906, 16
      %v999 = vor.u32 %v997, %v995
      %v1001 = vshll.u32 %v907, 16
      %v1003 = vrot.slane %v1001, 1
      %v1004 = vsel %vm976, %v999, %v1003
      %v1005 = vshrl.u32 %v907, 16
      %v1007 = vor.u32 %v1005, %v1003
      %v1009 = vshll.u32 %v908, 16
      %v1011 = vrot.slane %v1009, 1
      %v1012 = vsel %vm976, %v1007, %v1011
      %v1013 = vshrl.u32 %v908, 16
      %v1015 = vor.u32 %v1013, %v1011
      %v1017 = vshll.u32 %v909, 16
      %v1019 = vrot.slane %v1017, 1
      %v1020 = vsel %vm976, %v1015, %v1019
      %v1021 = vshrl.u32 %v909, 16
      %v1023 = vor.u32 %v1021, %v1019
      %v1025 = vshll.u32 %v910, 16
      %v1027 = vrot.slane %v1025, 1
      %v1028 = vsel %vm976, %v1023, %v1027
      %v1029 = vshrl.u32 %v910, 16
      %v1031 = vor.u32 %v1029, %v1027
      %v1033 = vshll.u32 %v911, 16
      %v1035 = vrot.slane %v1033, 1
      %v1036 = vsel %vm976, %v1031, %v1035
      %v1037 = vshrl.u32 %v911, 16
      %v1039 = vor.u32 %v1037, %v1035
      %v1041 = vshll.u32 %v912, 16
      %v1043 = vrot.slane %v1041, 1
      %v1044 = vsel %vm976, %v1039, %v1043
      %v1045 = vshrl.u32 %v912, 16
      %v1047 = vor.u32 %v1045, %v1043
      %v1049 = vshll.u32 %v913, 16
      %v1051 = vrot.slane %v1049, 1
      %v1052 = vsel %vm976, %v1047, %v1051
      %v1053 = vshrl.u32 %v913, 16
      %v1055 = vor.u32 %v1053, %v1051
      %v1057 = vshll.u32 %v914, 16
      %v1059 = vrot.slane %v1057, 1
      %v1060 = vsel %vm976, %v1055, %v1059
      %v1061 = vshrl.u32 %v914, 16
      %v1063 = vor.u32 %v1061, %v1059
      %v1065 = vshll.u32 %v915, 16
      %v1067 = vrot.slane %v1065, 1
      %v1068 = vsel %vm976, %v1063, %v1067
      %v1069 = vshrl.u32 %v915, 16
      %v1071 = vor.u32 %v1069, %v1067
      %v1073 = vshll.u32 %v916, 16
      %v1075 = vrot.slane %v1073, 1
      %v1076 = vsel %vm976, %v1071, %v1075
      %v1077 = vshrl.u32 %v916, 16
      %v1079 = vor.u32 %v1077, %v1075
      %v1081 = vshll.u32 %v917, 16
      %v1083 = vrot.slane %v1081, 1
      %v1084 = vsel %vm976, %v1079, %v1083
      %v1085 = vshrl.u32 %v917, 16
      %v1087 = vor.u32 %v1085, %v1083
      %v1089 = vshll.u32 %v918, 16
      %v1091 = vrot.slane %v1089, 1
      %v1092 = vsel %vm976, %v1087, %v1091
      %v1093 = vshrl.u32 %v918, 16
      %v1095 = vor.u32 %v1093, %v1091
      %v1097 = vshll.u32 %v919, 16
      %v1099 = vrot.slane %v1097, 1
      %v1100 = vsel %vm976, %v1095, %v1099
      %v1101 = vshrl.u32 %v919, 16
      %v1103 = vor.u32 %v1101, %v1099
      %vm1121 = vcmask 1046528
      %v1122 = vrot.slane 0, 1
      %v1123 = vrot.slane %v960, 1
      %v1124 = vsel %vm1121, %v1122, %v1123
      %v1125 = vrot.slane %v961, 1
      %v1126 = vsel %vm1121, %v1123, %v1125
      %v1127 = vrot.slane %v962, 1
      %v1128 = vsel %vm1121, %v1125, %v1127
      %v1129 = vrot.slane %v963, 1
      %v1130 = vsel %vm1121, %v1127, %v1129
      %v1131 = vrot.slane %v964, 1
      %v1132 = vsel %vm1121, %v1129, %v1131
      %v1133 = vrot.slane %v965, 1
      %v1134 = vsel %vm1121, %v1131, %v1133
      %v1135 = vrot.slane %v966, 1
      %v1136 = vsel %vm1121, %v1133, %v1135
      %v1137 = vrot.slane %v967, 1
      %v1138 = vsel %vm1121, %v1135, %v1137
      %v1139 = vrot.slane %v968, 1
      %v1140 = vsel %vm1121, %v1137, %v1139
      %v1141 = vrot.slane %v969, 1
      %v1142 = vsel %vm1121, %v1139, %v1141
      %v1143 = vrot.slane %v970, 1
      %v1144 = vsel %vm1121, %v1141, %v1143
      %v1145 = vrot.slane %v971, 1
      %v1146 = vsel %vm1121, %v1143, %v1145
      %v1147 = vrot.slane %v972, 1
      %v1148 = vsel %vm1121, %v1145, %v1147
      %v1149 = vrot.slane %v973, 1
      %v1150 = vsel %vm1121, %v1147, %v1149
      %v1151 = vrot.slane %v974, 1
      %v1152 = vsel %vm1121, %v1149, %v1151
      %v1153 = vrot.slane %v975, 1
      %v1154 = vsel %vm1121, %v1151, %v1153
      %v1155 = vld [vmem:[%s4] sm:$0xf]
      %v1156 = vld [vmem:[%s4 + $0x4] sm:$0xf]
      %v1157 = vld [vmem:[%s4 + $0x8] sm:$0xf]
      %v1158 = vld [vmem:[%s4 + $0xc] sm:$0xf]
      %v1159 = vld [vmem:[%s4 + $0x10] sm:$0xf]
      %v1160 = vld [vmem:[%s4 + $0x14] sm:$0xf]
      %v1161 = vld [vmem:[%s4 + $0x18] sm:$0xf]
      %v1162 = vld [vmem:[%s4 + $0x1c] sm:$0xf]
      %v1163 = vld [vmem:[%s4 + $0x20] sm:$0xf]
      %v1164 = vld [vmem:[%s4 + $0x24] sm:$0xf]
      %v1165 = vld [vmem:[%s4 + $0x28] sm:$0xf]
      %v1166 = vld [vmem:[%s4 + $0x2c] sm:$0xf]
      %v1167 = vld [vmem:[%s4 + $0x30] sm:$0xf]
      %v1168 = vld [vmem:[%s4 + $0x34] sm:$0xf]
      %v1169 = vld [vmem:[%s4 + $0x38] sm:$0xf]
      %v1170 = vld [vmem:[%s4 + $0x3c] sm:$0xf]
      %v1171 = vld [vmem:[%s4 + $0x40] sm:$0xf]
      %v1172 = vld [vmem:[%s4 + $0x44] sm:$0xf]
      %v1173 = vld [vmem:[%s4 + $0x48] sm:$0xf]
      %v1174 = vld [vmem:[%s4 + $0x4c] sm:$0xf]
      %v1175 = vld [vmem:[%s4 + $0x50] sm:$0xf]
      %v1176 = vld [vmem:[%s4 + $0x54] sm:$0xf]
      %v1177 = vld [vmem:[%s4 + $0x58] sm:$0xf]
      %v1178 = vld [vmem:[%s4 + $0x5c] sm:$0xf]
      %v1179 = vld [vmem:[%s4 + $0x60] sm:$0xf]
      %v1180 = vld [vmem:[%s4 + $0x64] sm:$0xf]
      %v1181 = vld [vmem:[%s4 + $0x68] sm:$0xf]
      %v1182 = vld [vmem:[%s4 + $0x6c] sm:$0xf]
      %v1183 = vld [vmem:[%s4 + $0x70] sm:$0xf]
      %v1184 = vld [vmem:[%s4 + $0x74] sm:$0xf]
      %v1185 = vld [vmem:[%s4 + $0x78] sm:$0xf]
      %v1186 = vld [vmem:[%s4 + $0x7c] sm:$0xf]
      %v1187 = vld [vmem:[%s4 + $0x80] sm:$0xf]
      %v1188 = vld [vmem:[%s4 + $0x84] sm:$0xf]
      %v1189 = vld [vmem:[%s4 + $0x88] sm:$0xf]
      %v1190 = vld [vmem:[%s4 + $0x8c] sm:$0xf]
      %v1191 = vld [vmem:[%s4 + $0x90] sm:$0xf]
      %v1192 = vld [vmem:[%s4 + $0x94] sm:$0xf]
      %v1193 = vld [vmem:[%s4 + $0x98] sm:$0xf]
      %v1194 = vld [vmem:[%s4 + $0x9c] sm:$0xf]
      %v1195 = vld [vmem:[%s4 + $0xa0] sm:$0xf]
      %v1196 = vld [vmem:[%s4 + $0xa4] sm:$0xf]
      %v1197 = vld [vmem:[%s4 + $0xa8] sm:$0xf]
      %v1198 = vld [vmem:[%s4 + $0xac] sm:$0xf]
      %v1199 = vld [vmem:[%s4 + $0xb0] sm:$0xf]
      %v1200 = vld [vmem:[%s4 + $0xb4] sm:$0xf]
      %v1201 = vld [vmem:[%s4 + $0xb8] sm:$0xf]
      %v1202 = vld [vmem:[%s4 + $0xbc] sm:$0xf]
      %v1204 = vshll.u32 %v920, 16
      %v1206 = vrot.slane %v1204, 1
      %v1207 = vsel %vm976, %v1103, %v1206
      %v1208 = vshrl.u32 %v920, 16
      %v1210 = vor.u32 %v1208, %v1206
      %v1211 = vsel %vm1121, %v1153, %v1122
      %s1212 = scalar_lea.vmem %s4, 192
      %v1213 = vld [vmem:[%s1212] sm:$0xf]
      %v1214 = vld [vmem:[%s1212 + $0x4] sm:$0xf]
      %v1215 = vld [vmem:[%s1212 + $0x8] sm:$0xf]
      %v1216 = vld [vmem:[%s1212 + $0xc] sm:$0xf]
      %v1217 = vld [vmem:[%s1212 + $0x10] sm:$0xf]
      %v1218 = vld [vmem:[%s1212 + $0x14] sm:$0xf]
      %v1219 = vld [vmem:[%s1212 + $0x18] sm:$0xf]
      %v1220 = vld [vmem:[%s1212 + $0x1c] sm:$0xf]
      %v1221 = vld [vmem:[%s1212 + $0x20] sm:$0xf]
      %v1222 = vld [vmem:[%s1212 + $0x24] sm:$0xf]
      %v1223 = vld [vmem:[%s1212 + $0x28] sm:$0xf]
      %v1224 = vld [vmem:[%s1212 + $0x2c] sm:$0xf]
      %v1225 = vld [vmem:[%s1212 + $0x30] sm:$0xf]
      %v1226 = vld [vmem:[%s1212 + $0x34] sm:$0xf]
      %v1227 = vld [vmem:[%s1212 + $0x38] sm:$0xf]
      %v1228 = vld [vmem:[%s1212 + $0x3c] sm:$0xf]
      %v1229 = vld [vmem:[%s1212 + $0x40] sm:$0xf]
      %v1230 = vld [vmem:[%s1212 + $0x44] sm:$0xf]
      %v1231 = vld [vmem:[%s1212 + $0x48] sm:$0xf]
      %v1232 = vld [vmem:[%s1212 + $0x4c] sm:$0xf]
      %v1233 = vld [vmem:[%s1212 + $0x50] sm:$0xf]
      %v1234 = vld [vmem:[%s1212 + $0x54] sm:$0xf]
      %v1235 = vld [vmem:[%s1212 + $0x58] sm:$0xf]
      %v1236 = vld [vmem:[%s1212 + $0x5c] sm:$0xf]
      %v1237 = vld [vmem:[%s1212 + $0x60] sm:$0xf]
      %v1238 = vld [vmem:[%s1212 + $0x64] sm:$0xf]
      %v1239 = vld [vmem:[%s1212 + $0x68] sm:$0xf]
      %v1240 = vld [vmem:[%s1212 + $0x6c] sm:$0xf]
      %v1241 = vld [vmem:[%s1212 + $0x70] sm:$0xf]
      %v1242 = vld [vmem:[%s1212 + $0x74] sm:$0xf]
      %v1243 = vld [vmem:[%s1212 + $0x78] sm:$0xf]
      %v1244 = vld [vmem:[%s1212 + $0x7c] sm:$0xf]
      %v1245 = vld [vmem:[%s1212 + $0x80] sm:$0xf]
      %v1246 = vld [vmem:[%s1212 + $0x84] sm:$0xf]
      %v1247 = vld [vmem:[%s1212 + $0x88] sm:$0xf]
      %v1248 = vld [vmem:[%s1212 + $0x8c] sm:$0xf]
      %v1249 = vld [vmem:[%s1212 + $0x90] sm:$0xf]
      %v1250 = vld [vmem:[%s1212 + $0x94] sm:$0xf]
      %v1251 = vld [vmem:[%s1212 + $0x98] sm:$0xf]
      %v1252 = vld [vmem:[%s1212 + $0x9c] sm:$0xf]
      %v1253 = vld [vmem:[%s1212 + $0xa0] sm:$0xf]
      %v1254 = vld [vmem:[%s1212 + $0xa4] sm:$0xf]
      %v1255 = vld [vmem:[%s1212 + $0xa8] sm:$0xf]
      %v1256 = vld [vmem:[%s1212 + $0xac] sm:$0xf]
      %v1257 = vld [vmem:[%s1212 + $0xb0] sm:$0xf]
      %v1258 = vld [vmem:[%s1212 + $0xb4] sm:$0xf]
      %v1259 = vld [vmem:[%s1212 + $0xb8] sm:$0xf]
      %v1260 = vld [vmem:[%s1212 + $0xbc] sm:$0xf]
      %vm1261 = vsmask.f32 256
      %v1262 = vrot.slane %v981, 7
      %v1264 = vshrl.u32 %v934, 16
      %v1266 = vrot.slane %v1264, 7
      %v1267 = vshll.u32 %v934, 16
      %v1269 = vor.u32 %v1266, %v1267
      %v1270 = vsel %vm1261, %v1262, %v1269
      %v1272 = vshrl.u32 %v987, 16
      %v1274 = vrot.slane %v1272, 7
      %v1276 = vshrl.u32 %v996, 16
      %v1278 = vrot.slane %v1276, 7
      %v1279 = vshll.u32 %v996, 16
      %v1281 = vor.u32 %v1278, %v1279
      %v1282 = vsel %vm1261, %v1274, %v1281
      %v1284 = vshrl.u32 %v1123, 16
      %v1286 = vrot.slane %v1284, 7
      %v1288 = vshrl.u32 %v1126, 16
      %v1290 = vrot.slane %v1288, 7
      %v1291 = vshll.u32 %v1126, 16
      %v1293 = vor.u32 %v1290, %v1291
      %v1294 = vsel %vm1261, %v1286, %v1293
      %v1296 = vshrl.u32 %v935, 16
      %v1298 = vrot.slane %v1296, 7
      %v1299 = vshll.u32 %v935, 16
      %v1301 = vor.u32 %v1298, %v1299
      %v1302 = vsel %vm1261, %v1266, %v1301
      %v1304 = vshrl.u32 %v1004, 16
      %v1306 = vrot.slane %v1304, 7
      %v1307 = vshll.u32 %v1004, 16
      %v1309 = vor.u32 %v1306, %v1307
      %v1310 = vsel %vm1261, %v1278, %v1309
      %v1312 = vshrl.u32 %v1128, 16
      %v1314 = vrot.slane %v1312, 7
      %v1315 = vshll.u32 %v1128, 16
      %v1317 = vor.u32 %v1314, %v1315
      %v1318 = vsel %vm1261, %v1290, %v1317
      %v1320 = vshrl.u32 %v936, 16
      %v1322 = vrot.slane %v1320, 7
      %v1323 = vshll.u32 %v936, 16
      %v1325 = vor.u32 %v1322, %v1323
      %v1326 = vsel %vm1261, %v1298, %v1325
      %v1328 = vshrl.u32 %v1012, 16
      %v1330 = vrot.slane %v1328, 7
      %v1331 = vshll.u32 %v1012, 16
      %v1333 = vor.u32 %v1330, %v1331
      %v1334 = vsel %vm1261, %v1306, %v1333
      %v1336 = vshrl.u32 %v1130, 16
      %v1338 = vrot.slane %v1336, 7
      %v1339 = vshll.u32 %v1130, 16
      %v1341 = vor.u32 %v1338, %v1339
      %v1342 = vsel %vm1261, %v1314, %v1341
      %v1344 = vshrl.u32 %v937, 16
      %v1346 = vrot.slane %v1344, 7
      %v1347 = vshll.u32 %v937, 16
      %v1349 = vor.u32 %v1346, %v1347
      %v1350 = vsel %vm1261, %v1322, %v1349
      %v1352 = vshrl.u32 %v1020, 16
      %v1354 = vrot.slane %v1352, 7
      %v1355 = vshll.u32 %v1020, 16
      %v1357 = vor.u32 %v1354, %v1355
      %v1358 = vsel %vm1261, %v1330, %v1357
      %v1360 = vshrl.u32 %v1132, 16
      %v1362 = vrot.slane %v1360, 7
      %v1363 = vshll.u32 %v1132, 16
      %v1365 = vor.u32 %v1362, %v1363
      %v1366 = vsel %vm1261, %v1338, %v1365
      %v1368 = vshrl.u32 %v938, 16
      %v1370 = vrot.slane %v1368, 7
      %v1371 = vshll.u32 %v938, 16
      %v1373 = vor.u32 %v1370, %v1371
      %v1374 = vsel %vm1261, %v1346, %v1373
      %v1376 = vshrl.u32 %v1028, 16
      %v1378 = vrot.slane %v1376, 7
      %v1379 = vshll.u32 %v1028, 16
      %v1381 = vor.u32 %v1378, %v1379
      %v1382 = vsel %vm1261, %v1354, %v1381
      %v1384 = vshrl.u32 %v1134, 16
      %v1386 = vrot.slane %v1384, 7
      %v1387 = vshll.u32 %v1134, 16
      %v1389 = vor.u32 %v1386, %v1387
      %v1390 = vsel %vm1261, %v1362, %v1389
      %v1392 = vshrl.u32 %v939, 16
      %v1394 = vrot.slane %v1392, 7
      %v1395 = vshll.u32 %v939, 16
      %v1397 = vor.u32 %v1394, %v1395
      %v1398 = vsel %vm1261, %v1370, %v1397
      %v1400 = vshrl.u32 %v1036, 16
      %v1402 = vrot.slane %v1400, 7
      %v1403 = vshll.u32 %v1036, 16
      %v1405 = vor.u32 %v1402, %v1403
      %v1406 = vsel %vm1261, %v1378, %v1405
      %v1408 = vshrl.u32 %v1136, 16
      %v1410 = vrot.slane %v1408, 7
      %v1411 = vshll.u32 %v1136, 16
      %v1413 = vor.u32 %v1410, %v1411
      %v1414 = vsel %vm1261, %v1386, %v1413
      %v1416 = vshrl.u32 %v940, 16
      %v1418 = vrot.slane %v1416, 7
      %v1419 = vshll.u32 %v940, 16
      %v1421 = vor.u32 %v1418, %v1419
      %v1422 = vsel %vm1261, %v1394, %v1421
      %v1424 = vshrl.u32 %v1044, 16
      %v1426 = vrot.slane %v1424, 7
      %v1427 = vshll.u32 %v1044, 16
      %v1429 = vor.u32 %v1426, %v1427
      %v1430 = vsel %vm1261, %v1402, %v1429
      %v1432 = vshrl.u32 %v1138, 16
      %v1434 = vrot.slane %v1432, 7
      %v1435 = vshll.u32 %v1138, 16
      %v1437 = vor.u32 %v1434, %v1435
      %v1438 = vsel %vm1261, %v1410, %v1437
      %v1440 = vshrl.u32 %v941, 16
      %v1442 = vrot.slane %v1440, 7
      %v1443 = vshll.u32 %v941, 16
      %v1445 = vor.u32 %v1442, %v1443
      %v1446 = vsel %vm1261, %v1418, %v1445
      %v1448 = vshrl.u32 %v1052, 16
      %v1450 = vrot.slane %v1448, 7
      %v1451 = vshll.u32 %v1052, 16
      %v1453 = vor.u32 %v1450, %v1451
      %v1454 = vsel %vm1261, %v1426, %v1453
      %v1456 = vshrl.u32 %v1140, 16
      %v1458 = vrot.slane %v1456, 7
      %v1459 = vshll.u32 %v1140, 16
      %v1461 = vor.u32 %v1458, %v1459
      %v1462 = vsel %vm1261, %v1434, %v1461
      %v1464 = vshrl.u32 %v942, 16
      %v1466 = vrot.slane %v1464, 7
      %v1467 = vshll.u32 %v942, 16
      %v1469 = vor.u32 %v1466, %v1467
      %v1470 = vsel %vm1261, %v1442, %v1469
      %v1472 = vshrl.u32 %v1060, 16
      %v1474 = vrot.slane %v1472, 7
      %v1475 = vshll.u32 %v1060, 16
      %v1477 = vor.u32 %v1474, %v1475
      %v1478 = vsel %vm1261, %v1450, %v1477
      %v1480 = vshrl.u32 %v1142, 16
      %v1482 = vrot.slane %v1480, 7
      %v1483 = vshll.u32 %v1142, 16
      %v1485 = vor.u32 %v1482, %v1483
      %v1486 = vsel %vm1261, %v1458, %v1485
      %v1488 = vshrl.u32 %v943, 16
      %v1490 = vrot.slane %v1488, 7
      %v1491 = vshll.u32 %v943, 16
      %v1493 = vor.u32 %v1490, %v1491
      %v1494 = vsel %vm1261, %v1466, %v1493
      %v1496 = vshrl.u32 %v1068, 16
      %v1498 = vrot.slane %v1496, 7
      %v1499 = vshll.u32 %v1068, 16
      %v1501 = vor.u32 %v1498, %v1499
      %v1502 = vsel %vm1261, %v1474, %v1501
      %v1504 = vshrl.u32 %v1144, 16
      %v1506 = vrot.slane %v1504, 7
      %v1507 = vshll.u32 %v1144, 16
      %v1509 = vor.u32 %v1506, %v1507
      %v1510 = vsel %vm1261, %v1482, %v1509
      %v1512 = vshrl.u32 %v944, 16
      %v1514 = vrot.slane %v1512, 7
      %v1515 = vshll.u32 %v944, 16
      %v1517 = vor.u32 %v1514, %v1515
      %v1518 = vsel %vm1261, %v1490, %v1517
      %v1520 = vshrl.u32 %v1076, 16
      %v1522 = vrot.slane %v1520, 7
      %v1523 = vshll.u32 %v1076, 16
      %v1525 = vor.u32 %v1522, %v1523
      %v1526 = vsel %vm1261, %v1498, %v1525
      %v1528 = vshrl.u32 %v1146, 16
      %v1530 = vrot.slane %v1528, 7
      %v1531 = vshll.u32 %v1146, 16
      %v1533 = vor.u32 %v1530, %v1531
      %v1534 = vsel %vm1261, %v1506, %v1533
      %v1536 = vshrl.u32 %v945, 16
      %v1538 = vrot.slane %v1536, 7
      %v1539 = vshll.u32 %v945, 16
      %v1541 = vor.u32 %v1538, %v1539
      %v1542 = vsel %vm1261, %v1514, %v1541
      %v1544 = vshrl.u32 %v1084, 16
      %v1546 = vrot.slane %v1544, 7
      %v1547 = vshll.u32 %v1084, 16
      %v1549 = vor.u32 %v1546, %v1547
      %v1550 = vsel %vm1261, %v1522, %v1549
      %v1552 = vshrl.u32 %v1148, 16
      %v1554 = vrot.slane %v1552, 7
      %v1555 = vshll.u32 %v1148, 16
      %v1557 = vor.u32 %v1554, %v1555
      %v1558 = vsel %vm1261, %v1530, %v1557
      %v1560 = vshrl.u32 %v946, 16
      %v1562 = vrot.slane %v1560, 7
      %v1563 = vshll.u32 %v946, 16
      %v1565 = vor.u32 %v1562, %v1563
      %v1566 = vsel %vm1261, %v1538, %v1565
      %v1568 = vshrl.u32 %v1092, 16
      %v1570 = vrot.slane %v1568, 7
      %v1571 = vshll.u32 %v1092, 16
      %v1573 = vor.u32 %v1570, %v1571
      %v1574 = vsel %vm1261, %v1546, %v1573
      %v1576 = vshrl.u32 %v1150, 16
      %v1578 = vrot.slane %v1576, 7
      %v1579 = vshll.u32 %v1150, 16
      %v1581 = vor.u32 %v1578, %v1579
      %v1582 = vsel %vm1261, %v1554, %v1581
      %v1584 = vshrl.u32 %v947, 16
      %v1586 = vrot.slane %v1584, 7
      %v1587 = vshll.u32 %v947, 16
      %v1589 = vor.u32 %v1586, %v1587
      %v1590 = vsel %vm1261, %v1562, %v1589
      %v1592 = vshrl.u32 %v1100, 16
      %v1594 = vrot.slane %v1592, 7
      %v1595 = vshll.u32 %v1100, 16
      %v1597 = vor.u32 %v1594, %v1595
      %v1598 = vsel %vm1261, %v1570, %v1597
      %v1600 = vshrl.u32 %v1152, 16
      %v1602 = vrot.slane %v1600, 7
      %v1603 = vshll.u32 %v1152, 16
      %v1605 = vor.u32 %v1602, %v1603
      %v1606 = vsel %vm1261, %v1578, %v1605
      %v1608 = vshrl.u32 %v948, 16
      %v1610 = vrot.slane %v1608, 7
      %v1611 = vshll.u32 %v948, 16
      %v1613 = vor.u32 %v1610, %v1611
      %v1614 = vsel %vm1261, %v1586, %v1613
      %v1616 = vshrl.u32 %v1207, 16
      %v1618 = vrot.slane %v1616, 7
      %v1619 = vshll.u32 %v1207, 16
      %v1621 = vor.u32 %v1618, %v1619
      %v1622 = vsel %vm1261, %v1594, %v1621
      %v1624 = vshrl.u32 %v1154, 16
      %v1626 = vrot.slane %v1624, 7
      %v1627 = vshll.u32 %v1154, 16
      %v1629 = vor.u32 %v1626, %v1627
      %v1630 = vsel %vm1261, %v1602, %v1629
      %v1632 = vshrl.u32 %v949, 16
      %v1634 = vrot.slane %v1632, 7
      %v1635 = vshll.u32 %v949, 16
      %v1637 = vor.u32 %v1634, %v1635
      %v1638 = vsel %vm1261, %v1610, %v1637
      %v1640 = vshrl.u32 %v1210, 16
      %v1642 = vrot.slane %v1640, 7
      %v1643 = vshll.u32 %v1210, 16
      %v1645 = vor.u32 %v1642, %v1643
      %v1646 = vsel %vm1261, %v1618, %v1645
      %v1648 = vshrl.u32 %v1211, 16
      %v1650 = vrot.slane %v1648, 7
      %v1651 = vshll.u32 %v1211, 16
      %v1653 = vor.u32 %v1650, %v1651
      %v1654 = vsel %vm1261, %v1626, %v1653
      %v1751 = vunpack.c.l.b16 %v1213
      %v1752 = vunpack.c.l.b16 %v1214
      %v1753 = vunpack.c.l.b16 %v1215
      %v1754 = vunpack.c.l.b16 %v1216
      %v1755 = vunpack.c.l.b16 %v1217
      %v1756 = vunpack.c.l.b16 %v1218
      %v1757 = vunpack.c.l.b16 %v1219
      %v1758 = vunpack.c.l.b16 %v1220
      %v1759 = vunpack.c.l.b16 %v1221
      %v1760 = vunpack.c.l.b16 %v1222
      %v1761 = vunpack.c.l.b16 %v1223
      %v1762 = vunpack.c.l.b16 %v1224
      %v1763 = vunpack.c.l.b16 %v1225
      %v1764 = vunpack.c.l.b16 %v1226
      %v1765 = vunpack.c.l.b16 %v1227
      %v1766 = vunpack.c.l.b16 %v1228
      %v1767 = vunpack.c.l.b16 %v1229
      %v1768 = vunpack.c.l.b16 %v1230
      %v1769 = vunpack.c.l.b16 %v1231
      %v1770 = vunpack.c.l.b16 %v1232
      %v1771 = vunpack.c.l.b16 %v1233
      %v1772 = vunpack.c.l.b16 %v1234
      %v1773 = vunpack.c.l.b16 %v1235
      %v1774 = vunpack.c.l.b16 %v1236
      %v1775 = vunpack.c.l.b16 %v1237
      %v1776 = vunpack.c.l.b16 %v1238
      %v1777 = vunpack.c.l.b16 %v1239
      %v1778 = vunpack.c.l.b16 %v1240
      %v1779 = vunpack.c.l.b16 %v1241
      %v1780 = vunpack.c.l.b16 %v1242
      %v1781 = vunpack.c.l.b16 %v1243
      %v1782 = vunpack.c.l.b16 %v1244
      %v1783 = vunpack.c.l.b16 %v1245
      %v1784 = vunpack.c.l.b16 %v1246
      %v1785 = vunpack.c.l.b16 %v1247
      %v1786 = vunpack.c.l.b16 %v1248
      %v1787 = vunpack.c.l.b16 %v1249
      %v1788 = vunpack.c.l.b16 %v1250
      %v1789 = vunpack.c.l.b16 %v1251
      %v1790 = vunpack.c.l.b16 %v1252
      %v1791 = vunpack.c.l.b16 %v1253
      %v1792 = vunpack.c.l.b16 %v1254
      %v1793 = vunpack.c.l.b16 %v1255
      %v1794 = vunpack.c.l.b16 %v1256
      %v1795 = vunpack.c.l.b16 %v1257
      %v1796 = vunpack.c.l.b16 %v1258
      %v1797 = vunpack.c.l.b16 %v1259
      %v1798 = vunpack.c.l.b16 %v1260
      %v1799 = vpack.c.b16 %v1752, %v1751
      %v1800 = vpack.c.b16 %v1754, %v1753
      %v1801 = vpack.c.b16 %v1756, %v1755
      %v1802 = vpack.c.b16 %v1758, %v1757
      %v1803 = vpack.c.b16 %v1760, %v1759
      %v1804 = vpack.c.b16 %v1762, %v1761
      %v1805 = vpack.c.b16 %v1764, %v1763
      %v1806 = vpack.c.b16 %v1766, %v1765
      %v1807 = vpack.c.b16 %v1768, %v1767
      %v1808 = vpack.c.b16 %v1770, %v1769
      %v1809 = vpack.c.b16 %v1772, %v1771
      %v1810 = vpack.c.b16 %v1774, %v1773
      %v1811 = vpack.c.b16 %v1776, %v1775
      %v1812 = vpack.c.b16 %v1778, %v1777
      %v1813 = vpack.c.b16 %v1780, %v1779
      %v1814 = vpack.c.b16 %v1782, %v1781
      %v1815 = vpack.c.b16 %v1784, %v1783
      %v1816 = vpack.c.b16 %v1786, %v1785
      %v1817 = vpack.c.b16 %v1788, %v1787
      %v1818 = vpack.c.b16 %v1790, %v1789
      %v1819 = vpack.c.b16 %v1792, %v1791
      %v1820 = vpack.c.b16 %v1794, %v1793
      %v1821 = vpack.c.b16 %v1796, %v1795
      %v1822 = vpack.c.b16 %v1798, %v1797
      %1847 = vmatprep.subr.bf16.mxu0 0
      %1848 = vmatpush1.bf16.msra.mxu0 %v1799
      %1849 = vmatprep.subr.bf16.mxu0 0
      %1850 = vmatpush1.bf16.msra.mxu0 %v1800
      %1851 = vmatprep.subr.bf16.mxu0 0
      %1852 = vmatpush1.bf16.msra.mxu0 %v1801
      %1853 = vmatprep.subr.bf16.mxu0 0
      %1854 = vmatpush1.bf16.msra.mxu0 %v1802
      %1855 = vmatprep.subr.bf16.mxu0 0
      %1856 = vmatpush1.bf16.msra.mxu0 %v1803
      %1857 = vmatprep.subr.bf16.mxu0 0
      %1858 = vmatpush1.bf16.msra.mxu0 %v1804
      %1859 = vmatprep.subr.bf16.mxu0 0
      %1860 = vmatpush1.bf16.msra.mxu0 %v1805
      %1861 = vmatprep.subr.bf16.mxu0 0
      %1862 = vmatpush1.bf16.msra.mxu0 %v1806
      %1863 = vmatprep.subr.bf16.mxu0 0
      %1864 = vmatpush1.bf16.msra.mxu0 %v1807
      %1865 = vmatprep.subr.bf16.mxu0 0
      %1866 = vmatpush1.bf16.msra.mxu0 %v1808
      %1867 = vmatprep.subr.bf16.mxu0 0
      %1868 = vmatpush1.bf16.msra.mxu0 %v1809
      %1869 = vmatprep.subr.bf16.mxu0 0
      %1870 = vmatpush1.bf16.msra.mxu0 %v1810
      %1871 = vmatprep.subr.bf16.mxu0 0
      %1872 = vmatpush1.bf16.msra.mxu0 %v1811
      %1873 = vmatprep.subr.bf16.mxu0 0
      %1874 = vmatpush1.bf16.msra.mxu0 %v1812
      %1875 = vmatprep.subr.bf16.mxu0 0
      %1876 = vmatpush1.bf16.msra.mxu0 %v1813
      %1877 = vmatprep.subr.bf16.mxu0 0
      %1878 = vmatpush1.bf16.msra.mxu0 %v1814
      %1879 = vmatprep.mubr.bf16.mxu0 %v1282
      %1880 = vmatmul.mubr.bf16.gmra.mrb[0].mxu0 %v1270
      %v1881 = vpop.f32.mrb[0].mxu0
      %v1882 = vadd.f32 0.0, %v1881
      %v1883 = vpop.f32.mrb[0].mxu0
      %v1884 = vpop.f32.mrb[0].mxu0
      %v1885 = vadd.f32 0.0, %v1884
      %v1886 = vpop.f32.mrb[0].mxu0
      %1887 = vmatprep.mubr.bf16.mxu0 %v1310
      %1888 = vmatmul.mubr.bf16.gmra.mrb[0].mxu0 %v1302
      %v1889 = vpop.f32.mrb[0].mxu0
      %v1890 = vadd.f32 0.0, %v1889
      %v1891 = vpop.f32.mrb[0].mxu0
      %v1892 = vpop.f32.mrb[0].mxu0
      %v1893 = vadd.f32 0.0, %v1892
      %v1894 = vpop.f32.mrb[0].mxu0
      %1895 = vmatprep.mubr.bf16.mxu0 %v1334
      %1896 = vmatmul.mubr.bf16.gmra.mrb[0].mxu0 %v1326
      %v1897 = vpop.f32.mrb[0].mxu0
      %v1898 = vadd.f32 0.0, %v1897
      %v1899 = vpop.f32.mrb[0].mxu0
      %v1900 = vpop.f32.mrb[0].mxu0
      %v1901 = vadd.f32 0.0, %v1900
      %v1902 = vpop.f32.mrb[0].mxu0
      %1903 = vmatprep.mubr.bf16.mxu0 %v1358
      %1904 = vmatmul.mubr.bf16.gmra.mrb[0].mxu0 %v1350
      %v1905 = vpop.f32.mrb[0].mxu0
      %v1906 = vadd.f32 0.0, %v1905
      %v1907 = vpop.f32.mrb[0].mxu0
      %v1908 = vpop.f32.mrb[0].mxu0
      %v1909 = vadd.f32 0.0, %v1908
      %v1910 = vpop.f32.mrb[0].mxu0
      %1911 = vmatprep.mubr.bf16.mxu0 %v1382
      %1912 = vmatmul.mubr.bf16.gmra.mrb[0].mxu0 %v1374
      %v1913 = vpop.f32.mrb[0].mxu0
      %v1914 = vadd.f32 0.0, %v1913
      %v1915 = vpop.f32.mrb[0].mxu0
      %v1916 = vpop.f32.mrb[0].mxu0
      %v1917 = vadd.f32 0.0, %v1916
      %v1918 = vpop.f32.mrb[0].mxu0
      %1919 = vmatprep.mubr.bf16.mxu0 %v1406
      %1920 = vmatmul.mubr.bf16.gmra.mrb[0].mxu0 %v1398
      %v1921 = vpop.f32.mrb[0].mxu0
      %v1922 = vadd.f32 0.0, %v1921
      %v1923 = vpop.f32.mrb[0].mxu0
      %v1924 = vpop.f32.mrb[0].mxu0
      %v1925 = vadd.f32 0.0, %v1924
      %v1926 = vpop.f32.mrb[0].mxu0
      %1927 = vmatprep.mubr.bf16.mxu0 %v1430
      %1928 = vmatmul.mubr.bf16.gmra.mrb[0].mxu0 %v1422
      %v1929 = vpop.f32.mrb[0].mxu0
      %v1930 = vadd.f32 0.0, %v1929
      %v1931 = vpop.f32.mrb[0].mxu0
      %v1932 = vpop.f32.mrb[0].mxu0
      %v1933 = vadd.f32 0.0, %v1932
      %v1934 = vpop.f32.mrb[0].mxu0
      %1935 = vmatprep.mubr.bf16.mxu0 %v1454
      %1936 = vmatmul.mubr.bf16.gmra.mrb[0].mxu0 %v1446
      %v1937 = vpop.f32.mrb[0].mxu0
      %v1938 = vadd.f32 0.0, %v1937
      %v1939 = vpop.f32.mrb[0].mxu0
      %v1940 = vpop.f32.mrb[0].mxu0
      %v1941 = vadd.f32 0.0, %v1940
      %v1942 = vpop.f32.mrb[0].mxu0
      %1943 = vmatprep.mubr.bf16.mxu0 %v1478
      %1944 = vmatmul.mubr.bf16.gmra.mrb[0].mxu0 %v1470
      %v1945 = vpop.f32.mrb[0].mxu0
      %v1946 = vadd.f32 0.0, %v1945
      %v1947 = vpop.f32.mrb[0].mxu0
      %v1948 = vpop.f32.mrb[0].mxu0
      %v1949 = vadd.f32 0.0, %v1948
      %v1950 = vpop.f32.mrb[0].mxu0
      %1951 = vmatprep.mubr.bf16.mxu0 %v1502
      %1952 = vmatmul.mubr.bf16.gmra.mrb[0].mxu0 %v1494
      %v1953 = vpop.f32.mrb[0].mxu0
      %v1954 = vadd.f32 0.0, %v1953
      %v1955 = vpop.f32.mrb[0].mxu0
      %v1956 = vpop.f32.mrb[0].mxu0
      %v1957 = vadd.f32 0.0, %v1956
      %v1958 = vpop.f32.mrb[0].mxu0
      %1959 = vmatprep.mubr.bf16.mxu0 %v1526
      %1960 = vmatmul.mubr.bf16.gmra.mrb[0].mxu0 %v1518
      %v1961 = vpop.f32.mrb[0].mxu0
      %v1962 = vadd.f32 0.0, %v1961
      %v1963 = vpop.f32.mrb[0].mxu0
      %v1964 = vpop.f32.mrb[0].mxu0
      %v1965 = vadd.f32 0.0, %v1964
      %v1966 = vpop.f32.mrb[0].mxu0
      %1967 = vmatprep.mubr.bf16.mxu0 %v1550
      %1968 = vmatmul.mubr.bf16.gmra.mrb[0].mxu0 %v1542
      %v1969 = vpop.f32.mrb[0].mxu0
      %v1970 = vadd.f32 0.0, %v1969
      %v1971 = vpop.f32.mrb[0].mxu0
      %v1972 = vpop.f32.mrb[0].mxu0
      %v1973 = vadd.f32 0.0, %v1972
      %v1974 = vpop.f32.mrb[0].mxu0
      %1975 = vmatprep.mubr.bf16.mxu0 %v1574
      %1976 = vmatmul.mubr.bf16.gmra.mrb[0].mxu0 %v1566
      %v1977 = vpop.f32.mrb[0].mxu0
      %v1978 = vadd.f32 0.0, %v1977
      %v1979 = vpop.f32.mrb[0].mxu0
      %v1980 = vpop.f32.mrb[0].mxu0
      %v1981 = vadd.f32 0.0, %v1980
      %v1982 = vpop.f32.mrb[0].mxu0
      %1983 = vmatprep.mubr.bf16.mxu0 %v1598
      %1984 = vmatmul.mubr.bf16.gmra.mrb[0].mxu0 %v1590
      %v1985 = vpop.f32.mrb[0].mxu0
      %v1986 = vadd.f32 0.0, %v1985
      %v1987 = vpop.f32.mrb[0].mxu0
      %v1988 = vpop.f32.mrb[0].mxu0
      %v1989 = vadd.f32 0.0, %v1988
      %v1990 = vpop.f32.mrb[0].mxu0
      %1991 = vmatprep.mubr.bf16.mxu0 %v1622
      %1992 = vmatmul.mubr.bf16.gmra.mrb[0].mxu0 %v1614
      %v1993 = vpop.f32.mrb[0].mxu0
      %v1994 = vadd.f32 0.0, %v1993
      %v1995 = vpop.f32.mrb[0].mxu0
      %v1996 = vpop.f32.mrb[0].mxu0
      %v1997 = vadd.f32 0.0, %v1996
      %v1998 = vpop.f32.mrb[0].mxu0
      %1999 = vmatprep.mubr.bf16.mxu0 %v1646
      %2000 = vmatmul.mubr.bf16.gmra.mrb[0].mxu0 %v1638
      %v2001 = vpop.f32.mrb[0].mxu0
      %v2002 = vadd.f32 0.0, %v2001
      %v2003 = vpop.f32.mrb[0].mxu0
      %v2004 = vpop.f32.mrb[0].mxu0
      %v2005 = vadd.f32 0.0, %v2004
      %v2006 = vpop.f32.mrb[0].mxu0
      %2007 = vdwg.mxu0
      %2008 = vmatprep.subr.bf16.mxu0 0
      %2009 = vmatpush1.bf16.msra.mxu0 %v1815
      %2010 = vmatprep.subr.bf16.mxu0 0
      %2011 = vmatpush1.bf16.msra.mxu0 %v1816
      %2012 = vmatprep.subr.bf16.mxu0 0
      %2013 = vmatpush1.bf16.msra.mxu0 %v1817
      %2014 = vmatprep.subr.bf16.mxu0 0
      %2015 = vmatpush1.bf16.msra.mxu0 %v1818
      %2016 = vmatprep.subr.bf16.mxu0 0
      %2017 = vmatpush1.bf16.msra.mxu0 %v1819
      %2018 = vmatprep.subr.bf16.mxu0 0
      %2019 = vmatpush1.bf16.msra.mxu0 %v1820
      %2020 = vmatprep.subr.bf16.mxu0 0
      %2021 = vmatpush1.bf16.msra.mxu0 %v1821
      %2022 = vmatprep.subr.bf16.mxu0 0
      %2023 = vmatpush1.bf16.msra.mxu0 %v1822
      %2024 = vmatprep.subr.bf16.mxu0 0
      %2025 = vmatpush1.bf16.msra.mxu0 0
      %2026 = vmatprep.subr.bf16.mxu0 0
      %2027 = vmatpush1.bf16.msra.mxu0 0
      %2028 = vmatprep.subr.bf16.mxu0 0
      %2029 = vmatpush1.bf16.msra.mxu0 0
      %2030 = vmatprep.subr.bf16.mxu0 0
      %2031 = vmatpush1.bf16.msra.mxu0 0
      %2032 = vmatprep.subr.bf16.mxu0 0
      %2033 = vmatpush1.bf16.msra.mxu0 0
      %2034 = vmatprep.subr.bf16.mxu0 0
      %2035 = vmatpush1.bf16.msra.mxu0 0
      %2036 = vmatprep.subr.bf16.mxu0 0
      %2037 = vmatpush1.bf16.msra.mxu0 0
      %2038 = vmatprep.subr.bf16.mxu0 0
      %2039 = vmatpush1.bf16.msra.mxu0 0
      %2040 = vmatprep.mubr.bf16.mxu0 0
      %2041 = vmatmul.mubr.bf16.gmra.mrb[0].mxu0 %v1294
      %v2042 = vpop.f32.mrb[0].mxu0
      %v2043 = vadd.f32 %v1882, %v2042
      %v2044 = vpop.f32.mrb[0].mxu0
      %v2045 = vpop.f32.mrb[0].mxu0
      %v2046 = vadd.f32 %v1885, %v2045
      %v2047 = vpop.f32.mrb[0].mxu0
      %2048 = vmatprep.mubr.bf16.mxu0 0
      %2049 = vmatmul.mubr.bf16.gmra.mrb[0].mxu0 %v1318
      %v2050 = vpop.f32.mrb[0].mxu0
      %v2051 = vadd.f32 %v1890, %v2050
      %v2052 = vpop.f32.mrb[0].mxu0
      %v2053 = vpop.f32.mrb[0].mxu0
      %v2054 = vadd.f32 %v1893, %v2053
      %v2055 = vpop.f32.mrb[0].mxu0
      %2056 = vmatprep.mubr.bf16.mxu0 0
      %2057 = vmatmul.mubr.bf16.gmra.mrb[0].mxu0 %v1342
      %v2058 = vpop.f32.mrb[0].mxu0
      %v2059 = vadd.f32 %v1898, %v2058
      %v2060 = vpop.f32.mrb[0].mxu0
      %v2061 = vpop.f32.mrb[0].mxu0
      %v2062 = vadd.f32 %v1901, %v2061
      %v2063 = vpop.f32.mrb[0].mxu0
      %2064 = vmatprep.mubr.bf16.mxu0 0
      %2065 = vmatmul.mubr.bf16.gmra.mrb[0].mxu0 %v1366
      %v2066 = vpop.f32.mrb[0].mxu0
      %v2067 = vadd.f32 %v1906, %v2066
      %v2068 = vpop.f32.mrb[0].mxu0
      %v2069 = vpop.f32.mrb[0].mxu0
      %v2070 = vadd.f32 %v1909, %v2069
      %v2071 = vpop.f32.mrb[0].mxu0
      %2072 = vmatprep.mubr.bf16.mxu0 0
      %2073 = vmatmul.mubr.bf16.gmra.mrb[0].mxu0 %v1390
      %v2074 = vpop.f32.mrb[0].mxu0
      %v2075 = vadd.f32 %v1914, %v2074
      %v2076 = vpop.f32.mrb[0].mxu0
      %v2077 = vpop.f32.mrb[0].mxu0
      %v2078 = vadd.f32 %v1917, %v2077
      %v2079 = vpop.f32.mrb[0].mxu0
      %2080 = vmatprep.mubr.bf16.mxu0 0
      %2081 = vmatmul.mubr.bf16.gmra.mrb[0].mxu0 %v1414
      %v2082 = vpop.f32.mrb[0].mxu0
      %v2083 = vadd.f32 %v1922, %v2082
      %v2084 = vpop.f32.mrb[0].mxu0
      %v2085 = vpop.f32.mrb[0].mxu0
      %v2086 = vadd.f32 %v1925, %v2085
      %v2087 = vpop.f32.mrb[0].mxu0
      %2088 = vmatprep.mubr.bf16.mxu0 0
      %2089 = vmatmul.mubr.bf16.gmra.mrb[0].mxu0 %v1438
      %v2090 = vpop.f32.mrb[0].mxu0
      %v2091 = vadd.f32 %v1930, %v2090
      %v2092 = vpop.f32.mrb[0].mxu0
      %v2093 = vpop.f32.mrb[0].mxu0
      %v2094 = vadd.f32 %v1933, %v2093
      %v2095 = vpop.f32.mrb[0].mxu0
      %2096 = vmatprep.mubr.bf16.mxu0 0
      %2097 = vmatmul.mubr.bf16.gmra.mrb[0].mxu0 %v1462
      %v2098 = vpop.f32.mrb[0].mxu0
      %v2099 = vadd.f32 %v1938, %v2098
      %v2100 = vpop.f32.mrb[0].mxu0
      %v2101 = vpop.f32.mrb[0].mxu0
      %v2102 = vadd.f32 %v1941, %v2101
      %v2103 = vpop.f32.mrb[0].mxu0
      %2104 = vmatprep.mubr.bf16.mxu0 0
      %2105 = vmatmul.mubr.bf16.gmra.mrb[0].mxu0 %v1486
      %v2106 = vpop.f32.mrb[0].mxu0
      %v2107 = vadd.f32 %v1946, %v2106
      %v2108 = vpop.f32.mrb[0].mxu0
      %v2109 = vpop.f32.mrb[0].mxu0
      %v2110 = vadd.f32 %v1949, %v2109
      %v2111 = vpop.f32.mrb[0].mxu0
      %2112 = vmatprep.mubr.bf16.mxu0 0
      %2113 = vmatmul.mubr.bf16.gmra.mrb[0].mxu0 %v1510
      %v2114 = vpop.f32.mrb[0].mxu0
      %v2115 = vadd.f32 %v1954, %v2114
      %v2116 = vpop.f32.mrb[0].mxu0
      %v2117 = vpop.f32.mrb[0].mxu0
      %v2118 = vadd.f32 %v1957, %v2117
      %v2119 = vpop.f32.mrb[0].mxu0
      %2120 = vmatprep.mubr.bf16.mxu0 0
      %2121 = vmatmul.mubr.bf16.gmra.mrb[0].mxu0 %v1534
      %v2122 = vpop.f32.mrb[0].mxu0
      %v2123 = vadd.f32 %v1962, %v2122
      %v2124 = vpop.f32.mrb[0].mxu0
      %v2125 = vpop.f32.mrb[0].mxu0
      %v2126 = vadd.f32 %v1965, %v2125
      %v2127 = vpop.f32.mrb[0].mxu0
      %2128 = vmatprep.mubr.bf16.mxu0 0
      %2129 = vmatmul.mubr.bf16.gmra.mrb[0].mxu0 %v1558
      %v2130 = vpop.f32.mrb[0].mxu0
      %v2131 = vadd.f32 %v1970, %v2130
      %v2132 = vpop.f32.mrb[0].mxu0
      %v2133 = vpop.f32.mrb[0].mxu0
      %v2134 = vadd.f32 %v1973, %v2133
      %v2135 = vpop.f32.mrb[0].mxu0
      %2136 = vmatprep.mubr.bf16.mxu0 0
      %2137 = vmatmul.mubr.bf16.gmra.mrb[0].mxu0 %v1582
      %v2138 = vpop.f32.mrb[0].mxu0
      %v2139 = vadd.f32 %v1978, %v2138
      %v2140 = vpop.f32.mrb[0].mxu0
      %v2141 = vpop.f32.mrb[0].mxu0
      %v2142 = vadd.f32 %v1981, %v2141
      %v2143 = vpop.f32.mrb[0].mxu0
      %2144 = vmatprep.mubr.bf16.mxu0 0
      %2145 = vmatmul.mubr.bf16.gmra.mrb[0].mxu0 %v1606
      %v2146 = vpop.f32.mrb[0].mxu0
      %v2147 = vadd.f32 %v1986, %v2146
      %v2148 = vpop.f32.mrb[0].mxu0
      %v2149 = vpop.f32.mrb[0].mxu0
      %v2150 = vadd.f32 %v1989, %v2149
      %v2151 = vpop.f32.mrb[0].mxu0
      %2152 = vmatprep.mubr.bf16.mxu0 0
      %2153 = vmatmul.mubr.bf16.gmra.mrb[0].mxu0 %v1630
      %v2154 = vpop.f32.mrb[0].mxu0
      %v2155 = vadd.f32 %v1994, %v2154
      %v2156 = vpop.f32.mrb[0].mxu0
      %v2157 = vpop.f32.mrb[0].mxu0
      %v2158 = vadd.f32 %v1997, %v2157
      %v2159 = vpop.f32.mrb[0].mxu0
      %2160 = vmatprep.mubr.bf16.mxu0 0
      %2161 = vmatmul.mubr.bf16.gmra.mrb[0].mxu0 %v1654
      %v2162 = vpop.f32.mrb[0].mxu0
      %v2163 = vadd.f32 %v2002, %v2162
      %v2164 = vpop.f32.mrb[0].mxu0
      %v2165 = vpop.f32.mrb[0].mxu0
      %v2166 = vadd.f32 %v2005, %v2165
      %v2167 = vpop.f32.mrb[0].mxu0
      %2168 = vdwg.mxu0
      %v2169 = vor.u32 %v1262, %v978
      %v2170 = vsel %vm1261, %v1262, %v2169
      %v2172 = vshrl.u32 %v980, 16
      %v2174 = vrot.slane %v2172, 7
      %v2176 = vshrl.u32 %v988, 16
      %v2178 = vrot.slane %v2176, 7
      %v2179 = vshll.u32 %v988, 16
      %v2181 = vor.u32 %v2178, %v2179
      %v2182 = vsel %vm1261, %v2174, %v2181
      %v2184 = vshrl.u32 %v1122, 16
      %v2186 = vrot.slane %v2184, 7
      %v2188 = vshrl.u32 %v1124, 16
      %v2190 = vrot.slane %v2188, 7
      %v2191 = vshll.u32 %v1124, 16
      %v2193 = vor.u32 %v2190, %v2191
      %v2194 = vsel %vm1261, %v2186, %v2193
      %v2195 = vsel %vm1261, %v2178, %v1281
      %v2196 = vsel %vm1261, %v2190, %v1293
      %v2198 = vshrl.u32 %v1103, 16
      %v2200 = vrot.slane %v2198, 7
      %v2201 = vshll.u32 %v1103, 16
      %v2203 = vor.u32 %v2200, %v2201
      %v2204 = vsel %vm1261, %v1594, %v2203
      %v2259 = vunpack.c.l.b16 %v1155
      %v2260 = vunpack.c.l.b16 %v1156
      %v2261 = vunpack.c.l.b16 %v1157
      %v2262 = vunpack.c.l.b16 %v1158
      %v2263 = vunpack.c.l.b16 %v1159
      %v2264 = vunpack.c.l.b16 %v1160
      %v2265 = vunpack.c.l.b16 %v1161
      %v2266 = vunpack.c.l.b16 %v1162
      %v2267 = vunpack.c.l.b16 %v1163
      %v2268 = vunpack.c.l.b16 %v1164
      %v2269 = vunpack.c.l.b16 %v1165
      %v2270 = vunpack.c.l.b16 %v1166
      %v2271 = vunpack.c.l.b16 %v1167
      %v2272 = vunpack.c.l.b16 %v1168
      %v2273 = vunpack.c.l.b16 %v1169
      %v2274 = vunpack.c.l.b16 %v1170
      %v2275 = vunpack.c.l.b16 %v1171
      %v2276 = vunpack.c.l.b16 %v1172
      %v2277 = vunpack.c.l.b16 %v1173
      %v2278 = vunpack.c.l.b16 %v1174
      %v2279 = vunpack.c.l.b16 %v1175
      %v2280 = vunpack.c.l.b16 %v1176
      %v2281 = vunpack.c.l.b16 %v1177
      %v2282 = vunpack.c.l.b16 %v1178
      %v2283 = vunpack.c.l.b16 %v1179
      %v2284 = vunpack.c.l.b16 %v1180
      %v2285 = vunpack.c.l.b16 %v1181
      %v2286 = vunpack.c.l.b16 %v1182
      %v2287 = vunpack.c.l.b16 %v1183
      %v2288 = vunpack.c.l.b16 %v1184
      %v2289 = vunpack.c.l.b16 %v1185
      %v2290 = vunpack.c.l.b16 %v1186
      %v2291 = vunpack.c.l.b16 %v1187
      %v2292 = vunpack.c.l.b16 %v1188
      %v2293 = vunpack.c.l.b16 %v1189
      %v2294 = vunpack.c.l.b16 %v1190
      %v2295 = vunpack.c.l.b16 %v1191
      %v2296 = vunpack.c.l.b16 %v1192
      %v2297 = vunpack.c.l.b16 %v1193
      %v2298 = vunpack.c.l.b16 %v1194
      %v2299 = vunpack.c.l.b16 %v1195
      %v2300 = vunpack.c.l.b16 %v1196
      %v2301 = vunpack.c.l.b16 %v1197
      %v2302 = vunpack.c.l.b16 %v1198
      %v2303 = vunpack.c.l.b16 %v1199
      %v2304 = vunpack.c.l.b16 %v1200
      %v2305 = vunpack.c.l.b16 %v1201
      %v2306 = vunpack.c.l.b16 %v1202
      %v2307 = vpack.c.b16 %v2260, %v2259
      %v2308 = vpack.c.b16 %v2262, %v2261
      %v2309 = vpack.c.b16 %v2264, %v2263
      %v2310 = vpack.c.b16 %v2266, %v2265
      %v2311 = vpack.c.b16 %v2268, %v2267
      %v2312 = vpack.c.b16 %v2270, %v2269
      %v2313 = vpack.c.b16 %v2272, %v2271
      %v2314 = vpack.c.b16 %v2274, %v2273
      %v2315 = vpack.c.b16 %v2276, %v2275
      %v2316 = vpack.c.b16 %v2278, %v2277
      %v2317 = vpack.c.b16 %v2280, %v2279
      %v2318 = vpack.c.b16 %v2282, %v2281
      %v2319 = vpack.c.b16 %v2284, %v2283
      %v2320 = vpack.c.b16 %v2286, %v2285
      %v2321 = vpack.c.b16 %v2288, %v2287
      %v2322 = vpack.c.b16 %v2290, %v2289
      %v2323 = vpack.c.b16 %v2292, %v2291
      %v2324 = vpack.c.b16 %v2294, %v2293
      %v2325 = vpack.c.b16 %v2296, %v2295
      %v2326 = vpack.c.b16 %v2298, %v2297
      %v2327 = vpack.c.b16 %v2300, %v2299
      %v2328 = vpack.c.b16 %v2302, %v2301
      %v2329 = vpack.c.b16 %v2304, %v2303
      %v2330 = vpack.c.b16 %v2306, %v2305
      %2355 = vmatprep.subr.bf16.mxu0 0
      %2356 = vmatpush1.bf16.msra.mxu0 %v2307
      %2357 = vmatprep.subr.bf16.mxu0 0
      %2358 = vmatpush1.bf16.msra.mxu0 %v2308
      %2359 = vmatprep.subr.bf16.mxu0 0
      %2360 = vmatpush1.bf16.msra.mxu0 %v2309
      %2361 = vmatprep.subr.bf16.mxu0 0
      %2362 = vmatpush1.bf16.msra.mxu0 %v2310
      %2363 = vmatprep.subr.bf16.mxu0 0
      %2364 = vmatpush1.bf16.msra.mxu0 %v2311
      %2365 = vmatprep.subr.bf16.mxu0 0
      %2366 = vmatpush1.bf16.msra.mxu0 %v2312
      %2367 = vmatprep.subr.bf16.mxu0 0
      %2368 = vmatpush1.bf16.msra.mxu0 %v2313
      %2369 = vmatprep.subr.bf16.mxu0 0
      %2370 = vmatpush1.bf16.msra.mxu0 %v2314
      %2371 = vmatprep.subr.bf16.mxu0 0
      %2372 = vmatpush1.bf16.msra.mxu0 %v2315
      %2373 = vmatprep.subr.bf16.mxu0 0
      %2374 = vmatpush1.bf16.msra.mxu0 %v2316
      %2375 = vmatprep.subr.bf16.mxu0 0
      %2376 = vmatpush1.bf16.msra.mxu0 %v2317
      %2377 = vmatprep.subr.bf16.mxu0 0
      %2378 = vmatpush1.bf16.msra.mxu0 %v2318
      %2379 = vmatprep.subr.bf16.mxu0 0
      %2380 = vmatpush1.bf16.msra.mxu0 %v2319
      %2381 = vmatprep.subr.bf16.mxu0 0
      %2382 = vmatpush1.bf16.msra.mxu0 %v2320
      %2383 = vmatprep.subr.bf16.mxu0 0
      %2384 = vmatpush1.bf16.msra.mxu0 %v2321
      %2385 = vmatprep.subr.bf16.mxu0 0
      %2386 = vmatpush1.bf16.msra.mxu0 %v2322
      %2387 = vmatprep.mubr.bf16.mxu0 %v2182
      %2388 = vmatmul.mubr.bf16.gmra.mrb[0].mxu0 %v2170
      %v2389 = vpop.f32.mrb[0].mxu0
      %v2390 = vadd.f32 %v2043, %v2389
      %v2391 = vpop.f32.mrb[0].mxu0
      %v2392 = vpop.f32.mrb[0].mxu0
      %v2393 = vadd.f32 %v2046, %v2392
      %v2394 = vpop.f32.mrb[0].mxu0
      %2395 = vmatprep.mubr.bf16.mxu0 %v2195
      %2396 = vmatmul.mubr.bf16.gmra.mrb[0].mxu0 %v1270
      %v2397 = vpop.f32.mrb[0].mxu0
      %v2398 = vadd.f32 %v2051, %v2397
      %v2399 = vpop.f32.mrb[0].mxu0
      %v2400 = vpop.f32.mrb[0].mxu0
      %v2401 = vadd.f32 %v2054, %v2400
      %v2402 = vpop.f32.mrb[0].mxu0
      %2403 = vmatprep.mubr.bf16.mxu0 %v1310
      %2404 = vmatmul.mubr.bf16.gmra.mrb[0].mxu0 %v1302
      %v2405 = vpop.f32.mrb[0].mxu0
      %v2406 = vadd.f32 %v2059, %v2405
      %v2407 = vpop.f32.mrb[0].mxu0
      %v2408 = vpop.f32.mrb[0].mxu0
      %v2409 = vadd.f32 %v2062, %v2408
      %v2410 = vpop.f32.mrb[0].mxu0
      %2411 = vmatprep.mubr.bf16.mxu0 %v1334
      %2412 = vmatmul.mubr.bf16.gmra.mrb[0].mxu0 %v1326
      %v2413 = vpop.f32.mrb[0].mxu0
      %v2414 = vadd.f32 %v2067, %v2413
      %v2415 = vpop.f32.mrb[0].mxu0
      %v2416 = vpop.f32.mrb[0].mxu0
      %v2417 = vadd.f32 %v2070, %v2416
      %v2418 = vpop.f32.mrb[0].mxu0
      %2419 = vmatprep.mubr.bf16.mxu0 %v1358
      %2420 = vmatmul.mubr.bf16.gmra.mrb[0].mxu0 %v1350
      %v2421 = vpop.f32.mrb[0].mxu0
      %v2422 = vadd.f32 %v2075, %v2421
      %v2423 = vpop.f32.mrb[0].mxu0
      %v2424 = vpop.f32.mrb[0].mxu0
      %v2425 = vadd.f32 %v2078, %v2424
      %v2426 = vpop.f32.mrb[0].mxu0
      %2427 = vmatprep.mubr.bf16.mxu0 %v1382
      %2428 = vmatmul.mubr.bf16.gmra.mrb[0].mxu0 %v1374
      %v2429 = vpop.f32.mrb[0].mxu0
      %v2430 = vadd.f32 %v2083, %v2429
      %v2431 = vpop.f32.mrb[0].mxu0
      %v2432 = vpop.f32.mrb[0].mxu0
      %v2433 = vadd.f32 %v2086, %v2432
      %v2434 = vpop.f32.mrb[0].mxu0
      %2435 = vmatprep.mubr.bf16.mxu0 %v1406
      %2436 = vmatmul.mubr.bf16.gmra.mrb[0].mxu0 %v1398
      %v2437 = vpop.f32.mrb[0].mxu0
      %v2438 = vadd.f32 %v2091, %v2437
      %v2439 = vpop.f32.mrb[0].mxu0
      %v2440 = vpop.f32.mrb[0].mxu0
      %v2441 = vadd.f32 %v2094, %v2440
      %v2442 = vpop.f32.mrb[0].mxu0
      %2443 = vmatprep.mubr.bf16.mxu0 %v1430
      %2444 = vmatmul.mubr.bf16.gmra.mrb[0].mxu0 %v1422
      %v2445 = vpop.f32.mrb[0].mxu0
      %v2446 = vadd.f32 %v2099, %v2445
      %v2447 = vpop.f32.mrb[0].mxu0
      %v2448 = vpop.f32.mrb[0].mxu0
      %v2449 = vadd.f32 %v2102, %v2448
      %v2450 = vpop.f32.mrb[0].mxu0
      %2451 = vmatprep.mubr.bf16.mxu0 %v1454
      %2452 = vmatmul.mubr.bf16.gmra.mrb[0].mxu0 %v1446
      %v2453 = vpop.f32.mrb[0].mxu0
      %v2454 = vadd.f32 %v2107, %v2453
      %v2455 = vpop.f32.mrb[0].mxu0
      %v2456 = vpop.f32.mrb[0].mxu0
      %v2457 = vadd.f32 %v2110, %v2456
      %v2458 = vpop.f32.mrb[0].mxu0
      %2459 = vmatprep.mubr.bf16.mxu0 %v1478
      %2460 = vmatmul.mubr.bf16.gmra.mrb[0].mxu0 %v1470
      %v2461 = vpop.f32.mrb[0].mxu0
      %v2462 = vadd.f32 %v2115, %v2461
      %v2463 = vpop.f32.mrb[0].mxu0
      %v2464 = vpop.f32.mrb[0].mxu0
      %v2465 = vadd.f32 %v2118, %v2464
      %v2466 = vpop.f32.mrb[0].mxu0
      %2467 = vmatprep.mubr.bf16.mxu0 %v1502
      %2468 = vmatmul.mubr.bf16.gmra.mrb[0].mxu0 %v1494
      %v2469 = vpop.f32.mrb[0].mxu0
      %v2470 = vadd.f32 %v2123, %v2469
      %v2471 = vpop.f32.mrb[0].mxu0
      %v2472 = vpop.f32.mrb[0].mxu0
      %v2473 = vadd.f32 %v2126, %v2472
      %v2474 = vpop.f32.mrb[0].mxu0
      %2475 = vmatprep.mubr.bf16.mxu0 %v1526
      %2476 = vmatmul.mubr.bf16.gmra.mrb[0].mxu0 %v1518
      %v2477 = vpop.f32.mrb[0].mxu0
      %v2478 = vadd.f32 %v2131, %v2477
      %v2479 = vpop.f32.mrb[0].mxu0
      %v2480 = vpop.f32.mrb[0].mxu0
      %v2481 = vadd.f32 %v2134, %v2480
      %v2482 = vpop.f32.mrb[0].mxu0
      %2483 = vmatprep.mubr.bf16.mxu0 %v1550
      %2484 = vmatmul.mubr.bf16.gmra.mrb[0].mxu0 %v1542
      %v2485 = vpop.f32.mrb[0].mxu0
      %v2486 = vadd.f32 %v2139, %v2485
      %v2487 = vpop.f32.mrb[0].mxu0
      %v2488 = vpop.f32.mrb[0].mxu0
      %v2489 = vadd.f32 %v2142, %v2488
      %v2490 = vpop.f32.mrb[0].mxu0
      %2491 = vmatprep.mubr.bf16.mxu0 %v1574
      %2492 = vmatmul.mubr.bf16.gmra.mrb[0].mxu0 %v1566
      %v2493 = vpop.f32.mrb[0].mxu0
      %v2494 = vadd.f32 %v2147, %v2493
      %v2495 = vpop.f32.mrb[0].mxu0
      %v2496 = vpop.f32.mrb[0].mxu0
      %v2497 = vadd.f32 %v2150, %v2496
      %v2498 = vpop.f32.mrb[0].mxu0
      %2499 = vmatprep.mubr.bf16.mxu0 %v1598
      %2500 = vmatmul.mubr.bf16.gmra.mrb[0].mxu0 %v1590
      %v2501 = vpop.f32.mrb[0].mxu0
      %v2502 = vadd.f32 %v2155, %v2501
      %v2503 = vpop.f32.mrb[0].mxu0
      %v2504 = vpop.f32.mrb[0].mxu0
      %v2505 = vadd.f32 %v2158, %v2504
      %v2506 = vpop.f32.mrb[0].mxu0
      %2507 = vmatprep.mubr.bf16.mxu0 %v2204
      %2508 = vmatmul.mubr.bf16.gmra.mrb[0].mxu0 %v1614
      %v2509 = vpop.f32.mrb[0].mxu0
      %v2510 = vadd.f32 %v2163, %v2509
      %v2511 = vpop.f32.mrb[0].mxu0
      %v2512 = vpop.f32.mrb[0].mxu0
      %v2513 = vadd.f32 %v2166, %v2512
      %v2514 = vpop.f32.mrb[0].mxu0
      %2515 = vdwg.mxu0
      %2516 = vmatprep.subr.bf16.mxu0 0
      %2517 = vmatpush1.bf16.msra.mxu0 %v2323
      %2518 = vmatprep.subr.bf16.mxu0 0
      %2519 = vmatpush1.bf16.msra.mxu0 %v2324
      %2520 = vmatprep.subr.bf16.mxu0 0
      %2521 = vmatpush1.bf16.msra.mxu0 %v2325
      %2522 = vmatprep.subr.bf16.mxu0 0
      %2523 = vmatpush1.bf16.msra.mxu0 %v2326
      %2524 = vmatprep.subr.bf16.mxu0 0
      %2525 = vmatpush1.bf16.msra.mxu0 %v2327
      %2526 = vmatprep.subr.bf16.mxu0 0
      %2527 = vmatpush1.bf16.msra.mxu0 %v2328
      %2528 = vmatprep.subr.bf16.mxu0 0
      %2529 = vmatpush1.bf16.msra.mxu0 %v2329
      %2530 = vmatprep.subr.bf16.mxu0 0
      %2531 = vmatpush1.bf16.msra.mxu0 %v2330
      %2532 = vmatprep.subr.bf16.mxu0 0
      %2533 = vmatpush1.bf16.msra.mxu0 0
      %2534 = vmatprep.subr.bf16.mxu0 0
      %2535 = vmatpush1.bf16.msra.mxu0 0
      %2536 = vmatprep.subr.bf16.mxu0 0
      %2537 = vmatpush1.bf16.msra.mxu0 0
      %2538 = vmatprep.subr.bf16.mxu0 0
      %2539 = vmatpush1.bf16.msra.mxu0 0
      %2540 = vmatprep.subr.bf16.mxu0 0
      %2541 = vmatpush1.bf16.msra.mxu0 0
      %2542 = vmatprep.subr.bf16.mxu0 0
      %2543 = vmatpush1.bf16.msra.mxu0 0
      %2544 = vmatprep.subr.bf16.mxu0 0
      %2545 = vmatpush1.bf16.msra.mxu0 0
      %2546 = vmatprep.subr.bf16.mxu0 0
      %2547 = vmatpush1.bf16.msra.mxu0 0
      %2548 = vmatprep.mubr.bf16.mxu0 0
      %2549 = vmatmul.mubr.bf16.gmra.mrb[0].mxu0 %v2194
      %v2550 = vpop.f32.mrb[0].mxu0
      %v2551 = vadd.f32 %v2390, %v2550
      %v2552 = vpop.f32.mrb[0].mxu0
      %v2553 = vpop.f32.mrb[0].mxu0
      %v2554 = vadd.f32 %v2393, %v2553
      %v2555 = vpop.f32.mrb[0].mxu0
      %2556 = vmatprep.mubr.bf16.mxu0 0
      %2557 = vmatmul.mubr.bf16.gmra.mrb[0].mxu0 %v2196
      %v2558 = vpop.f32.mrb[0].mxu0
      %v2559 = vadd.f32 %v2398, %v2558
      %v2560 = vpop.f32.mrb[0].mxu0
      %v2561 = vpop.f32.mrb[0].mxu0
      %v2562 = vadd.f32 %v2401, %v2561
      %v2563 = vpop.f32.mrb[0].mxu0
      %2564 = vmatprep.mubr.bf16.mxu0 0
      %2565 = vmatmul.mubr.bf16.gmra.mrb[0].mxu0 %v1318
      %v2566 = vpop.f32.mrb[0].mxu0
      %v2567 = vadd.f32 %v2406, %v2566
      %v2568 = vpop.f32.mrb[0].mxu0
      %v2569 = vpop.f32.mrb[0].mxu0
      %v2570 = vadd.f32 %v2409, %v2569
      %v2571 = vpop.f32.mrb[0].mxu0
      %2572 = vmatprep.mubr.bf16.mxu0 0
      %2573 = vmatmul.mubr.bf16.gmra.mrb[0].mxu0 %v1342
      %v2574 = vpop.f32.mrb[0].mxu0
      %v2575 = vadd.f32 %v2414, %v2574
      %v2576 = vpop.f32.mrb[0].mxu0
      %v2577 = vpop.f32.mrb[0].mxu0
      %v2578 = vadd.f32 %v2417, %v2577
      %v2579 = vpop.f32.mrb[0].mxu0
      %2580 = vmatprep.mubr.bf16.mxu0 0
      %2581 = vmatmul.mubr.bf16.gmra.mrb[0].mxu0 %v1366
      %v2582 = vpop.f32.mrb[0].mxu0
      %v2583 = vadd.f32 %v2422, %v2582
      %v2584 = vpop.f32.mrb[0].mxu0
      %v2585 = vpop.f32.mrb[0].mxu0
      %v2586 = vadd.f32 %v2425, %v2585
      %v2587 = vpop.f32.mrb[0].mxu0
      %2588 = vmatprep.mubr.bf16.mxu0 0
      %2589 = vmatmul.mubr.bf16.gmra.mrb[0].mxu0 %v1390
      %v2590 = vpop.f32.mrb[0].mxu0
      %v2591 = vadd.f32 %v2430, %v2590
      %v2592 = vpop.f32.mrb[0].mxu0
      %v2593 = vpop.f32.mrb[0].mxu0
      %v2594 = vadd.f32 %v2433, %v2593
      %v2595 = vpop.f32.mrb[0].mxu0
      %2596 = vmatprep.mubr.bf16.mxu0 0
      %2597 = vmatmul.mubr.bf16.gmra.mrb[0].mxu0 %v1414
      %v2598 = vpop.f32.mrb[0].mxu0
      %v2599 = vadd.f32 %v2438, %v2598
      %v2600 = vpop.f32.mrb[0].mxu0
      %v2601 = vpop.f32.mrb[0].mxu0
      %v2602 = vadd.f32 %v2441, %v2601
      %v2603 = vpop.f32.mrb[0].mxu0
      %2604 = vmatprep.mubr.bf16.mxu0 0
      %2605 = vmatmul.mubr.bf16.gmra.mrb[0].mxu0 %v1438
      %v2606 = vpop.f32.mrb[0].mxu0
      %v2607 = vadd.f32 %v2446, %v2606
      %v2608 = vpop.f32.mrb[0].mxu0
      %v2609 = vpop.f32.mrb[0].mxu0
      %v2610 = vadd.f32 %v2449, %v2609
      %v2611 = vpop.f32.mrb[0].mxu0
      %2612 = vmatprep.mubr.bf16.mxu0 0
      %2613 = vmatmul.mubr.bf16.gmra.mrb[0].mxu0 %v1462
      %v2614 = vpop.f32.mrb[0].mxu0
      %v2615 = vadd.f32 %v2454, %v2614
      %v2616 = vpop.f32.mrb[0].mxu0
      %v2617 = vpop.f32.mrb[0].mxu0
      %v2618 = vadd.f32 %v2457, %v2617
      %v2619 = vpop.f32.mrb[0].mxu0
      %2620 = vmatprep.mubr.bf16.mxu0 0
      %2621 = vmatmul.mubr.bf16.gmra.mrb[0].mxu0 %v1486
      %v2622 = vpop.f32.mrb[0].mxu0
      %v2623 = vadd.f32 %v2462, %v2622
      %v2624 = vpop.f32.mrb[0].mxu0
      %v2625 = vpop.f32.mrb[0].mxu0
      %v2626 = vadd.f32 %v2465, %v2625
      %v2627 = vpop.f32.mrb[0].mxu0
      %2628 = vmatprep.mubr.bf16.mxu0 0
      %2629 = vmatmul.mubr.bf16.gmra.mrb[0].mxu0 %v1510
      %v2630 = vpop.f32.mrb[0].mxu0
      %v2631 = vadd.f32 %v2470, %v2630
      %v2632 = vpop.f32.mrb[0].mxu0
      %v2633 = vpop.f32.mrb[0].mxu0
      %v2634 = vadd.f32 %v2473, %v2633
      %v2635 = vpop.f32.mrb[0].mxu0
      %2636 = vmatprep.mubr.bf16.mxu0 0
      %2637 = vmatmul.mubr.bf16.gmra.mrb[0].mxu0 %v1534
      %v2638 = vpop.f32.mrb[0].mxu0
      %v2639 = vadd.f32 %v2478, %v2638
      %v2640 = vpop.f32.mrb[0].mxu0
      %v2641 = vpop.f32.mrb[0].mxu0
      %v2642 = vadd.f32 %v2481, %v2641
      %v2643 = vpop.f32.mrb[0].mxu0
      %2644 = vmatprep.mubr.bf16.mxu0 0
      %2645 = vmatmul.mubr.bf16.gmra.mrb[0].mxu0 %v1558
      %v2646 = vpop.f32.mrb[0].mxu0
      %v2647 = vadd.f32 %v2486, %v2646
      %v2648 = vpop.f32.mrb[0].mxu0
      %v2649 = vpop.f32.mrb[0].mxu0
      %v2650 = vadd.f32 %v2489, %v2649
      %v2651 = vpop.f32.mrb[0].mxu0
      %2652 = vmatprep.mubr.bf16.mxu0 0
      %2653 = vmatmul.mubr.bf16.gmra.mrb[0].mxu0 %v1582
      %v2654 = vpop.f32.mrb[0].mxu0
      %v2655 = vadd.f32 %v2494, %v2654
      %v2656 = vpop.f32.mrb[0].mxu0
      %v2657 = vpop.f32.mrb[0].mxu0
      %v2658 = vadd.f32 %v2497, %v2657
      %v2659 = vpop.f32.mrb[0].mxu0
      %2660 = vmatprep.mubr.bf16.mxu0 0
      %2661 = vmatmul.mubr.bf16.gmra.mrb[0].mxu0 %v1606
      %v2662 = vpop.f32.mrb[0].mxu0
      %v2663 = vadd.f32 %v2502, %v2662
      %v2664 = vpop.f32.mrb[0].mxu0
      %v2665 = vpop.f32.mrb[0].mxu0
      %v2666 = vadd.f32 %v2505, %v2665
      %v2667 = vpop.f32.mrb[0].mxu0
      %2668 = vmatprep.mubr.bf16.mxu0 0
      %2669 = vmatmul.mubr.bf16.gmra.mrb[0].mxu0 %v1630
      %v2670 = vpop.f32.mrb[0].mxu0
      %v2671 = vadd.f32 %v2510, %v2670
      %v2672 = vpop.f32.mrb[0].mxu0
      %v2673 = vpop.f32.mrb[0].mxu0
      %v2674 = vadd.f32 %v2513, %v2673
      %v2675 = vpop.f32.mrb[0].mxu0
      %2676 = vdwg.mxu0
      %v2677 = vsel %vm976, %v1210, %v980
      %v2678 = vsel %vm1121, %v1122, %v1122
      %s2679 = scalar_lea.vmem %s4, 384
      %v2680 = vld [vmem:[%s2679] sm:$0xf]
      %v2681 = vld [vmem:[%s2679 + $0x4] sm:$0xf]
      %v2682 = vld [vmem:[%s2679 + $0x8] sm:$0xf]
      %v2683 = vld [vmem:[%s2679 + $0xc] sm:$0xf]
      %v2684 = vld [vmem:[%s2679 + $0x10] sm:$0xf]
      %v2685 = vld [vmem:[%s2679 + $0x14] sm:$0xf]
      %v2686 = vld [vmem:[%s2679 + $0x18] sm:$0xf]
      %v2687 = vld [vmem:[%s2679 + $0x1c] sm:$0xf]
      %v2688 = vld [vmem:[%s2679 + $0x20] sm:$0xf]
      %v2689 = vld [vmem:[%s2679 + $0x24] sm:$0xf]
      %v2690 = vld [vmem:[%s2679 + $0x28] sm:$0xf]
      %v2691 = vld [vmem:[%s2679 + $0x2c] sm:$0xf]
      %v2692 = vld [vmem:[%s2679 + $0x30] sm:$0xf]
      %v2693 = vld [vmem:[%s2679 + $0x34] sm:$0xf]
      %v2694 = vld [vmem:[%s2679 + $0x38] sm:$0xf]
      %v2695 = vld [vmem:[%s2679 + $0x3c] sm:$0xf]
      %v2696 = vld [vmem:[%s2679 + $0x40] sm:$0xf]
      %v2697 = vld [vmem:[%s2679 + $0x44] sm:$0xf]
      %v2698 = vld [vmem:[%s2679 + $0x48] sm:$0xf]
      %v2699 = vld [vmem:[%s2679 + $0x4c] sm:$0xf]
      %v2700 = vld [vmem:[%s2679 + $0x50] sm:$0xf]
      %v2701 = vld [vmem:[%s2679 + $0x54] sm:$0xf]
      %v2702 = vld [vmem:[%s2679 + $0x58] sm:$0xf]
      %v2703 = vld [vmem:[%s2679 + $0x5c] sm:$0xf]
      %v2704 = vld [vmem:[%s2679 + $0x60] sm:$0xf]
      %v2705 = vld [vmem:[%s2679 + $0x64] sm:$0xf]
      %v2706 = vld [vmem:[%s2679 + $0x68] sm:$0xf]
      %v2707 = vld [vmem:[%s2679 + $0x6c] sm:$0xf]
      %v2708 = vld [vmem:[%s2679 + $0x70] sm:$0xf]
      %v2709 = vld [vmem:[%s2679 + $0x74] sm:$0xf]
      %v2710 = vld [vmem:[%s2679 + $0x78] sm:$0xf]
      %v2711 = vld [vmem:[%s2679 + $0x7c] sm:$0xf]
      %v2712 = vld [vmem:[%s2679 + $0x80] sm:$0xf]
      %v2713 = vld [vmem:[%s2679 + $0x84] sm:$0xf]
      %v2714 = vld [vmem:[%s2679 + $0x88] sm:$0xf]
      %v2715 = vld [vmem:[%s2679 + $0x8c] sm:$0xf]
      %v2716 = vld [vmem:[%s2679 + $0x90] sm:$0xf]
      %v2717 = vld [vmem:[%s2679 + $0x94] sm:$0xf]
      %v2718 = vld [vmem:[%s2679 + $0x98] sm:$0xf]
      %v2719 = vld [vmem:[%s2679 + $0x9c] sm:$0xf]
      %v2720 = vld [vmem:[%s2679 + $0xa0] sm:$0xf]
      %v2721 = vld [vmem:[%s2679 + $0xa4] sm:$0xf]
      %v2722 = vld [vmem:[%s2679 + $0xa8] sm:$0xf]
      %v2723 = vld [vmem:[%s2679 + $0xac] sm:$0xf]
      %v2724 = vld [vmem:[%s2679 + $0xb0] sm:$0xf]
      %v2725 = vld [vmem:[%s2679 + $0xb4] sm:$0xf]
      %v2726 = vld [vmem:[%s2679 + $0xb8] sm:$0xf]
      %v2727 = vld [vmem:[%s2679 + $0xbc] sm:$0xf]
      %v2729 = vshrl.u32 %v995, 16
      %v2731 = vrot.slane %v2729, 7
      %v2732 = vsel %vm1261, %v2731, %v1309
      %v2734 = vshrl.u32 %v1125, 16
      %v2736 = vrot.slane %v2734, 7
      %v2737 = vsel %vm1261, %v2736, %v1317
      %v2739 = vshrl.u32 %v2677, 16
      %v2741 = vrot.slane %v2739, 7
      %v2742 = vshll.u32 %v2677, 16
      %v2744 = vor.u32 %v2741, %v2742
      %v2745 = vsel %vm1261, %v1618, %v2744
      %v2746 = vsel %vm1261, %v1634, %v2169
      %v2748 = vshrl.u32 %v983, 16
      %v2750 = vrot.slane %v2748, 7
      %v2751 = vshll.u32 %v983, 16
      %v2753 = vor.u32 %v2750, %v2751
      %v2754 = vsel %vm1261, %v2741, %v2753
      %v2756 = vshrl.u32 %v2678, 16
      %v2758 = vrot.slane %v2756, 7
      %v2759 = vshll.u32 %v2678, 16
      %v2761 = vor.u32 %v2758, %v2759
      %v2762 = vsel %vm1261, %v1650, %v2761
      %v2817 = vunpack.c.l.b16 %v2680
      %v2818 = vunpack.c.l.b16 %v2681
      %v2819 = vunpack.c.l.b16 %v2682
      %v2820 = vunpack.c.l.b16 %v2683
      %v2821 = vunpack.c.l.b16 %v2684
      %v2822 = vunpack.c.l.b16 %v2685
      %v2823 = vunpack.c.l.b16 %v2686
      %v2824 = vunpack.c.l.b16 %v2687
      %v2825 = vunpack.c.l.b16 %v2688
      %v2826 = vunpack.c.l.b16 %v2689
      %v2827 = vunpack.c.l.b16 %v2690
      %v2828 = vunpack.c.l.b16 %v2691
      %v2829 = vunpack.c.l.b16 %v2692
      %v2830 = vunpack.c.l.b16 %v2693
      %v2831 = vunpack.c.l.b16 %v2694
      %v2832 = vunpack.c.l.b16 %v2695
      %v2833 = vunpack.c.l.b16 %v2696
      %v2834 = vunpack.c.l.b16 %v2697
      %v2835 = vunpack.c.l.b16 %v2698
      %v2836 = vunpack.c.l.b16 %v2699
      %v2837 = vunpack.c.l.b16 %v2700
      %v2838 = vunpack.c.l.b16 %v2701
      %v2839 = vunpack.c.l.b16 %v2702
      %v2840 = vunpack.c.l.b16 %v2703
      %v2841 = vunpack.c.l.b16 %v2704
      %v2842 = vunpack.c.l.b16 %v2705
      %v2843 = vunpack.c.l.b16 %v2706
      %v2844 = vunpack.c.l.b16 %v2707
      %v2845 = vunpack.c.l.b16 %v2708
      %v2846 = vunpack.c.l.b16 %v2709
      %v2847 = vunpack.c.l.b16 %v2710
      %v2848 = vunpack.c.l.b16 %v2711
      %v2849 = vunpack.c.l.b16 %v2712
      %v2850 = vunpack.c.l.b16 %v2713
      %v2851 = vunpack.c.l.b16 %v2714
      %v2852 = vunpack.c.l.b16 %v2715
      %v2853 = vunpack.c.l.b16 %v2716
      %v2854 = vunpack.c.l.b16 %v2717
      %v2855 = vunpack.c.l.b16 %v2718
      %v2856 = vunpack.c.l.b16 %v2719
      %v2857 = vunpack.c.l.b16 %v2720
      %v2858 = vunpack.c.l.b16 %v2721
      %v2859 = vunpack.c.l.b16 %v2722
      %v2860 = vunpack.c.l.b16 %v2723
      %v2861 = vunpack.c.l.b16 %v2724
      %v2862 = vunpack.c.l.b16 %v2725
      %v2863 = vunpack.c.l.b16 %v2726
      %v2864 = vunpack.c.l.b16 %v2727
      %v2865 = vpack.c.b16 %v2818, %v2817
      %v2866 = vpack.c.b16 %v2820, %v2819
      %v2867 = vpack.c.b16 %v2822, %v2821
      %v2868 = vpack.c.b16 %v2824, %v2823
      %v2869 = vpack.c.b16 %v2826, %v2825
      %v2870 = vpack.c.b16 %v2828, %v2827
      %v2871 = vpack.c.b16 %v2830, %v2829
      %v2872 = vpack.c.b16 %v2832, %v2831
      %v2873 = vpack.c.b16 %v2834, %v2833
      %v2874 = vpack.c.b16 %v2836, %v2835
      %v2875 = vpack.c.b16 %v2838, %v2837
      %v2876 = vpack.c.b16 %v2840, %v2839
      %v2877 = vpack.c.b16 %v2842, %v2841
      %v2878 = vpack.c.b16 %v2844, %v2843
      %v2879 = vpack.c.b16 %v2846, %v2845
      %v2880 = vpack.c.b16 %v2848, %v2847
      %v2881 = vpack.c.b16 %v2850, %v2849
      %v2882 = vpack.c.b16 %v2852, %v2851
      %v2883 = vpack.c.b16 %v2854, %v2853
      %v2884 = vpack.c.b16 %v2856, %v2855
      %v2885 = vpack.c.b16 %v2858, %v2857
      %v2886 = vpack.c.b16 %v2860, %v2859
      %v2887 = vpack.c.b16 %v2862, %v2861
      %v2888 = vpack.c.b16 %v2864, %v2863
      %2913 = vmatprep.subr.bf16.mxu0 0
      %2914 = vmatpush1.bf16.msra.mxu0 %v2865
      %2915 = vmatprep.subr.bf16.mxu0 0
      %2916 = vmatpush1.bf16.msra.mxu0 %v2866
      %2917 = vmatprep.subr.bf16.mxu0 0
      %2918 = vmatpush1.bf16.msra.mxu0 %v2867
      %2919 = vmatprep.subr.bf16.mxu0 0
      %2920 = vmatpush1.bf16.msra.mxu0 %v2868
      %2921 = vmatprep.subr.bf16.mxu0 0
      %2922 = vmatpush1.bf16.msra.mxu0 %v2869
      %2923 = vmatprep.subr.bf16.mxu0 0
      %2924 = vmatpush1.bf16.msra.mxu0 %v2870
      %2925 = vmatprep.subr.bf16.mxu0 0
      %2926 = vmatpush1.bf16.msra.mxu0 %v2871
      %2927 = vmatprep.subr.bf16.mxu0 0
      %2928 = vmatpush1.bf16.msra.mxu0 %v2872
      %2929 = vmatprep.subr.bf16.mxu0 0
      %2930 = vmatpush1.bf16.msra.mxu0 %v2873
      %2931 = vmatprep.subr.bf16.mxu0 0
      %2932 = vmatpush1.bf16.msra.mxu0 %v2874
      %2933 = vmatprep.subr.bf16.mxu0 0
      %2934 = vmatpush1.bf16.msra.mxu0 %v2875
      %2935 = vmatprep.subr.bf16.mxu0 0
      %2936 = vmatpush1.bf16.msra.mxu0 %v2876
      %2937 = vmatprep.subr.bf16.mxu0 0
      %2938 = vmatpush1.bf16.msra.mxu0 %v2877
      %2939 = vmatprep.subr.bf16.mxu0 0
      %2940 = vmatpush1.bf16.msra.mxu0 %v2878
      %2941 = vmatprep.subr.bf16.mxu0 0
      %2942 = vmatpush1.bf16.msra.mxu0 %v2879
      %2943 = vmatprep.subr.bf16.mxu0 0
      %2944 = vmatpush1.bf16.msra.mxu0 %v2880
      %2945 = vmatprep.mubr.bf16.mxu0 %v2732
      %2946 = vmatmul.mubr.bf16.gmra.mrb[0].mxu0 %v1302
      %v2947 = vpop.f32.mrb[0].mxu0
      %v2948 = vadd.f32 0.0, %v2947
      %v2949 = vpop.f32.mrb[0].mxu0
      %v2950 = vpop.f32.mrb[0].mxu0
      %v2951 = vadd.f32 0.0, %v2950
      %v2952 = vpop.f32.mrb[0].mxu0
      %2953 = vmatprep.mubr.bf16.mxu0 %v1334
      %2954 = vmatmul.mubr.bf16.gmra.mrb[0].mxu0 %v1326
      %v2955 = vpop.f32.mrb[0].mxu0
      %v2956 = vadd.f32 0.0, %v2955
      %v2957 = vpop.f32.mrb[0].mxu0
      %v2958 = vpop.f32.mrb[0].mxu0
      %v2959 = vadd.f32 0.0, %v2958
      %v2960 = vpop.f32.mrb[0].mxu0
      %2961 = vmatprep.mubr.bf16.mxu0 %v1358
      %2962 = vmatmul.mubr.bf16.gmra.mrb[0].mxu0 %v1350
      %v2963 = vpop.f32.mrb[0].mxu0
      %v2964 = vadd.f32 0.0, %v2963
      %v2965 = vpop.f32.mrb[0].mxu0
      %v2966 = vpop.f32.mrb[0].mxu0
      %v2967 = vadd.f32 0.0, %v2966
      %v2968 = vpop.f32.mrb[0].mxu0
      %2969 = vmatprep.mubr.bf16.mxu0 %v1382
      %2970 = vmatmul.mubr.bf16.gmra.mrb[0].mxu0 %v1374
      %v2971 = vpop.f32.mrb[0].mxu0
      %v2972 = vadd.f32 0.0, %v2971
      %v2973 = vpop.f32.mrb[0].mxu0
      %v2974 = vpop.f32.mrb[0].mxu0
      %v2975 = vadd.f32 0.0, %v2974
      %v2976 = vpop.f32.mrb[0].mxu0
      %2977 = vmatprep.mubr.bf16.mxu0 %v1406
      %2978 = vmatmul.mubr.bf16.gmra.mrb[0].mxu0 %v1398
      %v2979 = vpop.f32.mrb[0].mxu0
      %v2980 = vadd.f32 0.0, %v2979
      %v2981 = vpop.f32.mrb[0].mxu0
      %v2982 = vpop.f32.mrb[0].mxu0
      %v2983 = vadd.f32 0.0, %v2982
      %v2984 = vpop.f32.mrb[0].mxu0
      %2985 = vmatprep.mubr.bf16.mxu0 %v1430
      %2986 = vmatmul.mubr.bf16.gmra.mrb[0].mxu0 %v1422
      %v2987 = vpop.f32.mrb[0].mxu0
      %v2988 = vadd.f32 0.0, %v2987
      %v2989 = vpop.f32.mrb[0].mxu0
      %v2990 = vpop.f32.mrb[0].mxu0
      %v2991 = vadd.f32 0.0, %v2990
      %v2992 = vpop.f32.mrb[0].mxu0
      %2993 = vmatprep.mubr.bf16.mxu0 %v1454
      %2994 = vmatmul.mubr.bf16.gmra.mrb[0].mxu0 %v1446
      %v2995 = vpop.f32.mrb[0].mxu0
      %v2996 = vadd.f32 0.0, %v2995
      %v2997 = vpop.f32.mrb[0].mxu0
      %v2998 = vpop.f32.mrb[0].mxu0
      %v2999 = vadd.f32 0.0, %v2998
      %v3000 = vpop.f32.mrb[0].mxu0
      %3001 = vmatprep.mubr.bf16.mxu0 %v1478
      %3002 = vmatmul.mubr.bf16.gmra.mrb[0].mxu0 %v1470
      %v3003 = vpop.f32.mrb[0].mxu0
      %v3004 = vadd.f32 0.0, %v3003
      %v3005 = vpop.f32.mrb[0].mxu0
      %v3006 = vpop.f32.mrb[0].mxu0
      %v3007 = vadd.f32 0.0, %v3006
      %v3008 = vpop.f32.mrb[0].mxu0
      %3009 = vmatprep.mubr.bf16.mxu0 %v1502
      %3010 = vmatmul.mubr.bf16.gmra.mrb[0].mxu0 %v1494
      %v3011 = vpop.f32.mrb[0].mxu0
      %v3012 = vadd.f32 0.0, %v3011
      %v3013 = vpop.f32.mrb[0].mxu0
      %v3014 = vpop.f32.mrb[0].mxu0
      %v3015 = vadd.f32 0.0, %v3014
      %v3016 = vpop.f32.mrb[0].mxu0
      %3017 = vmatprep.mubr.bf16.mxu0 %v1526
      %3018 = vmatmul.mubr.bf16.gmra.mrb[0].mxu0 %v1518
      %v3019 = vpop.f32.mrb[0].mxu0
      %v3020 = vadd.f32 0.0, %v3019
      %v3021 = vpop.f32.mrb[0].mxu0
      %v3022 = vpop.f32.mrb[0].mxu0
      %v3023 = vadd.f32 0.0, %v3022
      %v3024 = vpop.f32.mrb[0].mxu0
      %3025 = vmatprep.mubr.bf16.mxu0 %v1550
      %3026 = vmatmul.mubr.bf16.gmra.mrb[0].mxu0 %v1542
      %v3027 = vpop.f32.mrb[0].mxu0
      %v3028 = vadd.f32 0.0, %v3027
      %v3029 = vpop.f32.mrb[0].mxu0
      %v3030 = vpop.f32.mrb[0].mxu0
      %v3031 = vadd.f32 0.0, %v3030
      %v3032 = vpop.f32.mrb[0].mxu0
      %3033 = vmatprep.mubr.bf16.mxu0 %v1574
      %3034 = vmatmul.mubr.bf16.gmra.mrb[0].mxu0 %v1566
      %v3035 = vpop.f32.mrb[0].mxu0
      %v3036 = vadd.f32 0.0, %v3035
      %v3037 = vpop.f32.mrb[0].mxu0
      %v3038 = vpop.f32.mrb[0].mxu0
      %v3039 = vadd.f32 0.0, %v3038
      %v3040 = vpop.f32.mrb[0].mxu0
      %3041 = vmatprep.mubr.bf16.mxu0 %v1598
      %3042 = vmatmul.mubr.bf16.gmra.mrb[0].mxu0 %v1590
      %v3043 = vpop.f32.mrb[0].mxu0
      %v3044 = vadd.f32 0.0, %v3043
      %v3045 = vpop.f32.mrb[0].mxu0
      %v3046 = vpop.f32.mrb[0].mxu0
      %v3047 = vadd.f32 0.0, %v3046
      %v3048 = vpop.f32.mrb[0].mxu0
      %3049 = vmatprep.mubr.bf16.mxu0 %v1622
      %3050 = vmatmul.mubr.bf16.gmra.mrb[0].mxu0 %v1614
      %v3051 = vpop.f32.mrb[0].mxu0
      %v3052 = vadd.f32 0.0, %v3051
      %v3053 = vpop.f32.mrb[0].mxu0
      %v3054 = vpop.f32.mrb[0].mxu0
      %v3055 = vadd.f32 0.0, %v3054
      %v3056 = vpop.f32.mrb[0].mxu0
      %3057 = vmatprep.mubr.bf16.mxu0 %v2745
      %3058 = vmatmul.mubr.bf16.gmra.mrb[0].mxu0 %v1638
      %v3059 = vpop.f32.mrb[0].mxu0
      %v3060 = vadd.f32 0.0, %v3059
      %v3061 = vpop.f32.mrb[0].mxu0
      %v3062 = vpop.f32.mrb[0].mxu0
      %v3063 = vadd.f32 0.0, %v3062
      %v3064 = vpop.f32.mrb[0].mxu0
      %3065 = vmatprep.mubr.bf16.mxu0 %v2754
      %3066 = vmatmul.mubr.bf16.gmra.mrb[0].mxu0 %v2746
      %v3067 = vpop.f32.mrb[0].mxu0
      %v3068 = vadd.f32 0.0, %v3067
      %v3069 = vpop.f32.mrb[0].mxu0
      %v3070 = vpop.f32.mrb[0].mxu0
      %v3071 = vadd.f32 0.0, %v3070
      %v3072 = vpop.f32.mrb[0].mxu0
      %3073 = vdwg.mxu0
      %3074 = vmatprep.subr.bf16.mxu0 0
      %3075 = vmatpush1.bf16.msra.mxu0 %v2881
      %3076 = vmatprep.subr.bf16.mxu0 0
      %3077 = vmatpush1.bf16.msra.mxu0 %v2882
      %3078 = vmatprep.subr.bf16.mxu0 0
      %3079 = vmatpush1.bf16.msra.mxu0 %v2883
      %3080 = vmatprep.subr.bf16.mxu0 0
      %3081 = vmatpush1.bf16.msra.mxu0 %v2884
      %3082 = vmatprep.subr.bf16.mxu0 0
      %3083 = vmatpush1.bf16.msra.mxu0 %v2885
      %3084 = vmatprep.subr.bf16.mxu0 0
      %3085 = vmatpush1.bf16.msra.mxu0 %v2886
      %3086 = vmatprep.subr.bf16.mxu0 0
      %3087 = vmatpush1.bf16.msra.mxu0 %v2887
      %3088 = vmatprep.subr.bf16.mxu0 0
      %3089 = vmatpush1.bf16.msra.mxu0 %v2888
      %3090 = vmatprep.subr.bf16.mxu0 0
      %3091 = vmatpush1.bf16.msra.mxu0 0
      %3092 = vmatprep.subr.bf16.mxu0 0
      %3093 = vmatpush1.bf16.msra.mxu0 0
      %3094 = vmatprep.subr.bf16.mxu0 0
      %3095 = vmatpush1.bf16.msra.mxu0 0
      %3096 = vmatprep.subr.bf16.mxu0 0
      %3097 = vmatpush1.bf16.msra.mxu0 0
      %3098 = vmatprep.subr.bf16.mxu0 0
      %3099 = vmatpush1.bf16.msra.mxu0 0
      %3100 = vmatprep.subr.bf16.mxu0 0
      %3101 = vmatpush1.bf16.msra.mxu0 0
      %3102 = vmatprep.subr.bf16.mxu0 0
      %3103 = vmatpush1.bf16.msra.mxu0 0
      %3104 = vmatprep.subr.bf16.mxu0 0
      %3105 = vmatpush1.bf16.msra.mxu0 0
      %3106 = vmatprep.mubr.bf16.mxu0 0
      %3107 = vmatmul.mubr.bf16.gmra.mrb[0].mxu0 %v2737
      %v3108 = vpop.f32.mrb[0].mxu0
      %v3109 = vadd.f32 %v2948, %v3108
      %v3110 = vpop.f32.mrb[0].mxu0
      %v3111 = vpop.f32.mrb[0].mxu0
      %v3112 = vadd.f32 %v2951, %v3111
      %v3113 = vpop.f32.mrb[0].mxu0
      %3114 = vmatprep.mubr.bf16.mxu0 0
      %3115 = vmatmul.mubr.bf16.gmra.mrb[0].mxu0 %v1342
      %v3116 = vpop.f32.mrb[0].mxu0
      %v3117 = vadd.f32 %v2956, %v3116
      %v3118 = vpop.f32.mrb[0].mxu0
      %v3119 = vpop.f32.mrb[0].mxu0
      %v3120 = vadd.f32 %v2959, %v3119
      %v3121 = vpop.f32.mrb[0].mxu0
      %3122 = vmatprep.mubr.bf16.mxu0 0
      %3123 = vmatmul.mubr.bf16.gmra.mrb[0].mxu0 %v1366
      %v3124 = vpop.f32.mrb[0].mxu0
      %v3125 = vadd.f32 %v2964, %v3124
      %v3126 = vpop.f32.mrb[0].mxu0
      %v3127 = vpop.f32.mrb[0].mxu0
      %v3128 = vadd.f32 %v2967, %v3127
      %v3129 = vpop.f32.mrb[0].mxu0
      %3130 = vmatprep.mubr.bf16.mxu0 0
      %3131 = vmatmul.mubr.bf16.gmra.mrb[0].mxu0 %v1390
      %v3132 = vpop.f32.mrb[0].mxu0
      %v3133 = vadd.f32 %v2972, %v3132
      %v3134 = vpop.f32.mrb[0].mxu0
      %v3135 = vpop.f32.mrb[0].mxu0
      %v3136 = vadd.f32 %v2975, %v3135
      %v3137 = vpop.f32.mrb[0].mxu0
      %3138 = vmatprep.mubr.bf16.mxu0 0
      %3139 = vmatmul.mubr.bf16.gmra.mrb[0].mxu0 %v1414
      %v3140 = vpop.f32.mrb[0].mxu0
      %v3141 = vadd.f32 %v2980, %v3140
      %v3142 = vpop.f32.mrb[0].mxu0
      %v3143 = vpop.f32.mrb[0].mxu0
      %v3144 = vadd.f32 %v2983, %v3143
      %v3145 = vpop.f32.mrb[0].mxu0
      %3146 = vmatprep.mubr.bf16.mxu0 0
      %3147 = vmatmul.mubr.bf16.gmra.mrb[0].mxu0 %v1438
      %v3148 = vpop.f32.mrb[0].mxu0
      %v3149 = vadd.f32 %v2988, %v3148
      %v3150 = vpop.f32.mrb[0].mxu0
      %v3151 = vpop.f32.mrb[0].mxu0
      %v3152 = vadd.f32 %v2991, %v3151
      %v3153 = vpop.f32.mrb[0].mxu0
      %3154 = vmatprep.mubr.bf16.mxu0 0
      %3155 = vmatmul.mubr.bf16.gmra.mrb[0].mxu0 %v1462
      %v3156 = vpop.f32.mrb[0].mxu0
      %v3157 = vadd.f32 %v2996, %v3156
      %v3158 = vpop.f32.mrb[0].mxu0
      %v3159 = vpop.f32.mrb[0].mxu0
      %v3160 = vadd.f32 %v2999, %v3159
      %v3161 = vpop.f32.mrb[0].mxu0
      %3162 = vmatprep.mubr.bf16.mxu0 0
      %3163 = vmatmul.mubr.bf16.gmra.mrb[0].mxu0 %v1486
      %v3164 = vpop.f32.mrb[0].mxu0
      %v3165 = vadd.f32 %v3004, %v3164
      %v3166 = vpop.f32.mrb[0].mxu0
      %v3167 = vpop.f32.mrb[0].mxu0
      %v3168 = vadd.f32 %v3007, %v3167
      %v3169 = vpop.f32.mrb[0].mxu0
      %3170 = vmatprep.mubr.bf16.mxu0 0
      %3171 = vmatmul.mubr.bf16.gmra.mrb[0].mxu0 %v1510
      %v3172 = vpop.f32.mrb[0].mxu0
      %v3173 = vadd.f32 %v3012, %v3172
      %v3174 = vpop.f32.mrb[0].mxu0
      %v3175 = vpop.f32.mrb[0].mxu0
      %v3176 = vadd.f32 %v3015, %v3175
      %v3177 = vpop.f32.mrb[0].mxu0
      %3178 = vmatprep.mubr.bf16.mxu0 0
      %3179 = vmatmul.mubr.bf16.gmra.mrb[0].mxu0 %v1534
      %v3180 = vpop.f32.mrb[0].mxu0
      %v3181 = vadd.f32 %v3020, %v3180
      %v3182 = vpop.f32.mrb[0].mxu0
      %v3183 = vpop.f32.mrb[0].mxu0
      %v3184 = vadd.f32 %v3023, %v3183
      %v3185 = vpop.f32.mrb[0].mxu0
      %3186 = vmatprep.mubr.bf16.mxu0 0
      %3187 = vmatmul.mubr.bf16.gmra.mrb[0].mxu0 %v1558
      %v3188 = vpop.f32.mrb[0].mxu0
      %v3189 = vadd.f32 %v3028, %v3188
      %v3190 = vpop.f32.mrb[0].mxu0
      %v3191 = vpop.f32.mrb[0].mxu0
      %v3192 = vadd.f32 %v3031, %v3191
      %v3193 = vpop.f32.mrb[0].mxu0
      %3194 = vmatprep.mubr.bf16.mxu0 0
      %3195 = vmatmul.mubr.bf16.gmra.mrb[0].mxu0 %v1582
      %v3196 = vpop.f32.mrb[0].mxu0
      %v3197 = vadd.f32 %v3036, %v3196
      %v3198 = vpop.f32.mrb[0].mxu0
      %v3199 = vpop.f32.mrb[0].mxu0
      %v3200 = vadd.f32 %v3039, %v3199
      %v3201 = vpop.f32.mrb[0].mxu0
      %3202 = vmatprep.mubr.bf16.mxu0 0
      %3203 = vmatmul.mubr.bf16.gmra.mrb[0].mxu0 %v1606
      %v3204 = vpop.f32.mrb[0].mxu0
      %v3205 = vadd.f32 %v3044, %v3204
      %v3206 = vpop.f32.mrb[0].mxu0
      %v3207 = vpop.f32.mrb[0].mxu0
      %v3208 = vadd.f32 %v3047, %v3207
      %v3209 = vpop.f32.mrb[0].mxu0
      %3210 = vmatprep.mubr.bf16.mxu0 0
      %3211 = vmatmul.mubr.bf16.gmra.mrb[0].mxu0 %v1630
      %v3212 = vpop.f32.mrb[0].mxu0
      %v3213 = vadd.f32 %v3052, %v3212
      %v3214 = vpop.f32.mrb[0].mxu0
      %v3215 = vpop.f32.mrb[0].mxu0
      %v3216 = vadd.f32 %v3055, %v3215
      %v3217 = vpop.f32.mrb[0].mxu0
      %3218 = vmatprep.mubr.bf16.mxu0 0
      %3219 = vmatmul.mubr.bf16.gmra.mrb[0].mxu0 %v1654
      %v3220 = vpop.f32.mrb[0].mxu0
      %v3221 = vadd.f32 %v3060, %v3220
      %v3222 = vpop.f32.mrb[0].mxu0
      %v3223 = vpop.f32.mrb[0].mxu0
      %v3224 = vadd.f32 %v3063, %v3223
      %v3225 = vpop.f32.mrb[0].mxu0
      %3226 = vmatprep.mubr.bf16.mxu0 0
      %3227 = vmatmul.mubr.bf16.gmra.mrb[0].mxu0 %v2762
      %v3228 = vpop.f32.mrb[0].mxu0
      %v3229 = vadd.f32 %v3068, %v3228
      %v3230 = vpop.f32.mrb[0].mxu0
      %v3231 = vpop.f32.mrb[0].mxu0
      %v3232 = vadd.f32 %v3071, %v3231
      %v3233 = vpop.f32.mrb[0].mxu0
      %3234 = vdwg.mxu0
      %v3235 = vadd.f32 %v2551, %v3109
      %v3236 = vadd.f32 %v2554, %v3112
      %v3237 = vadd.f32 %v2559, %v3117
      %v3238 = vadd.f32 %v2562, %v3120
      %v3239 = vadd.f32 %v2567, %v3125
      %v3240 = vadd.f32 %v2570, %v3128
      %v3241 = vadd.f32 %v2575, %v3133
      %v3242 = vadd.f32 %v2578, %v3136
      %v3243 = vadd.f32 %v2583, %v3141
      %v3244 = vadd.f32 %v2586, %v3144
      %v3245 = vadd.f32 %v2591, %v3149
      %v3246 = vadd.f32 %v2594, %v3152
      %v3247 = vadd.f32 %v2599, %v3157
      %v3248 = vadd.f32 %v2602, %v3160
      %v3249 = vadd.f32 %v2607, %v3165
      %v3250 = vadd.f32 %v2610, %v3168
      %v3251 = vadd.f32 %v2615, %v3173
      %v3252 = vadd.f32 %v2618, %v3176
      %v3253 = vadd.f32 %v2623, %v3181
      %v3254 = vadd.f32 %v2626, %v3184
      %v3255 = vadd.f32 %v2631, %v3189
      %v3256 = vadd.f32 %v2634, %v3192
      %v3257 = vadd.f32 %v2639, %v3197
      %v3258 = vadd.f32 %v2642, %v3200
      %v3259 = vadd.f32 %v2647, %v3205
      %v3260 = vadd.f32 %v2650, %v3208
      %v3261 = vadd.f32 %v2655, %v3213
      %v3262 = vadd.f32 %v2658, %v3216
      %v3263 = vadd.f32 %v2663, %v3221
      %v3264 = vadd.f32 %v2666, %v3224
      %v3265 = vadd.f32 %v2671, %v3229
      %v3266 = vadd.f32 %v2674, %v3232
      %v3267 = vld [vmem:[%s5] sm:$0x1]
      %v3269 = vlaneseq
      %v3270 = vshrl.u32 %v3269, 7
      %v3271 = vsub.s32 0, %v3270
      %v3272 = vrot.slane %v3267, %v3271
      %v3274 = vmul.f32 %v3235, %v3272
      %v3275 = vmul.f32 %v3236, %v3272
      %v3276 = vmul.f32 %v3237, %v3272
      %v3277 = vmul.f32 %v3238, %v3272
      %v3278 = vmul.f32 %v3239, %v3272
      %v3279 = vmul.f32 %v3240, %v3272
      %v3280 = vmul.f32 %v3241, %v3272
      %v3281 = vmul.f32 %v3242, %v3272
      %v3282 = vmul.f32 %v3243, %v3272
      %v3283 = vmul.f32 %v3244, %v3272
      %v3284 = vmul.f32 %v3245, %v3272
      %v3285 = vmul.f32 %v3246, %v3272
      %v3286 = vmul.f32 %v3247, %v3272
      %v3287 = vmul.f32 %v3248, %v3272
      %v3288 = vmul.f32 %v3249, %v3272
      %v3289 = vmul.f32 %v3250, %v3272
      %v3290 = vmul.f32 %v3251, %v3272
      %v3291 = vmul.f32 %v3252, %v3272
      %v3292 = vmul.f32 %v3253, %v3272
      %v3293 = vmul.f32 %v3254, %v3272
      %v3294 = vmul.f32 %v3255, %v3272
      %v3295 = vmul.f32 %v3256, %v3272
      %v3296 = vmul.f32 %v3257, %v3272
      %v3297 = vmul.f32 %v3258, %v3272
      %v3298 = vmul.f32 %v3259, %v3272
      %v3299 = vmul.f32 %v3260, %v3272
      %v3300 = vmul.f32 %v3261, %v3272
      %v3301 = vmul.f32 %v3262, %v3272
      %v3302 = vmul.f32 %v3263, %v3272
      %v3303 = vmul.f32 %v3264, %v3272
      %v3304 = vmul.f32 %v3265, %v3272
      %v3305 = vmul.f32 %v3266, %v3272
      %v3306 = vld [vmem:[%s6] sm:$0x1]
      %v3308 = vlaneseq
      %v3309 = vshrl.u32 %v3308, 7
      %v3310 = vsub.s32 0, %v3309
      %v3311 = vrot.slane %v3306, %v3310
      %v3313 = vadd.f32 %v3274, %v3311
      %v3314 = vadd.f32 %v3275, %v3311
      %v3315 = vadd.f32 %v3276, %v3311
      %v3316 = vadd.f32 %v3277, %v3311
      %v3317 = vadd.f32 %v3278, %v3311
      %v3318 = vadd.f32 %v3279, %v3311
      %v3319 = vadd.f32 %v3280, %v3311
      %v3320 = vadd.f32 %v3281, %v3311
      %v3321 = vadd.f32 %v3282, %v3311
      %v3322 = vadd.f32 %v3283, %v3311
      %v3323 = vadd.f32 %v3284, %v3311
      %v3324 = vadd.f32 %v3285, %v3311
      %v3325 = vadd.f32 %v3286, %v3311
      %v3326 = vadd.f32 %v3287, %v3311
      %v3327 = vadd.f32 %v3288, %v3311
      %v3328 = vadd.f32 %v3289, %v3311
      %v3329 = vadd.f32 %v3290, %v3311
      %v3330 = vadd.f32 %v3291, %v3311
      %v3331 = vadd.f32 %v3292, %v3311
      %v3332 = vadd.f32 %v3293, %v3311
      %v3333 = vadd.f32 %v3294, %v3311
      %v3334 = vadd.f32 %v3295, %v3311
      %v3335 = vadd.f32 %v3296, %v3311
      %v3336 = vadd.f32 %v3297, %v3311
      %v3337 = vadd.f32 %v3298, %v3311
      %v3338 = vadd.f32 %v3299, %v3311
      %v3339 = vadd.f32 %v3300, %v3311
      %v3340 = vadd.f32 %v3301, %v3311
      %v3341 = vadd.f32 %v3302, %v3311
      %v3342 = vadd.f32 %v3303, %v3311
      %v3343 = vadd.f32 %v3304, %v3311
      %v3344 = vadd.f32 %v3305, %v3311
      %v3345 = vsub.f32 0.0, %v3313
      %v3346 = vsub.f32 0.0, %v3314
      %v3347 = vsub.f32 0.0, %v3315
      %v3348 = vsub.f32 0.0, %v3316
      %v3349 = vsub.f32 0.0, %v3317
      %v3350 = vsub.f32 0.0, %v3318
      %v3351 = vsub.f32 0.0, %v3319
      %v3352 = vsub.f32 0.0, %v3320
      %v3353 = vsub.f32 0.0, %v3321
      %v3354 = vsub.f32 0.0, %v3322
      %v3355 = vsub.f32 0.0, %v3323
      %v3356 = vsub.f32 0.0, %v3324
      %v3357 = vsub.f32 0.0, %v3325
      %v3358 = vsub.f32 0.0, %v3326
      %v3359 = vsub.f32 0.0, %v3327
      %v3360 = vsub.f32 0.0, %v3328
      %v3361 = vsub.f32 0.0, %v3329
      %v3362 = vsub.f32 0.0, %v3330
      %v3363 = vsub.f32 0.0, %v3331
      %v3364 = vsub.f32 0.0, %v3332
      %v3365 = vsub.f32 0.0, %v3333
      %v3366 = vsub.f32 0.0, %v3334
      %v3367 = vsub.f32 0.0, %v3335
      %v3368 = vsub.f32 0.0, %v3336
      %v3369 = vsub.f32 0.0, %v3337
      %v3370 = vsub.f32 0.0, %v3338
      %v3371 = vsub.f32 0.0, %v3339
      %v3372 = vsub.f32 0.0, %v3340
      %v3373 = vsub.f32 0.0, %v3341
      %v3374 = vsub.f32 0.0, %v3342
      %v3375 = vsub.f32 0.0, %v3343
      %v3376 = vsub.f32 0.0, %v3344
      %v3377 = vmul.f32 %v3345, 1.442695
      %v3378 = vpow.pop %v3377
      %v3379 = vmul.f32 %v3346, 1.442695
      %v3380 = vpow.pop %v3379
      %v3381 = vmul.f32 %v3347, 1.442695
      %v3382 = vpow.pop %v3381
      %v3383 = vmul.f32 %v3348, 1.442695
      %v3384 = vpow.pop %v3383
      %v3385 = vmul.f32 %v3349, 1.442695
      %v3386 = vpow.pop %v3385
      %v3387 = vmul.f32 %v3350, 1.442695
      %v3388 = vpow.pop %v3387
      %v3389 = vmul.f32 %v3351, 1.442695
      %v3390 = vpow.pop %v3389
      %v3391 = vmul.f32 %v3352, 1.442695
      %v3392 = vpow.pop %v3391
      %v3393 = vmul.f32 %v3353, 1.442695
      %v3394 = vpow.pop %v3393
      %v3395 = vmul.f32 %v3354, 1.442695
      %v3396 = vpow.pop %v3395
      %v3397 = vmul.f32 %v3355, 1.442695
      %v3398 = vpow.pop %v3397
      %v3399 = vmul.f32 %v3356, 1.442695
      %v3400 = vpow.pop %v3399
      %v3401 = vmul.f32 %v3357, 1.442695
      %v3402 = vpow.pop %v3401
      %v3403 = vmul.f32 %v3358, 1.442695
      %v3404 = vpow.pop %v3403
      %v3405 = vmul.f32 %v3359, 1.442695
      %v3406 = vpow.pop %v3405
      %v3407 = vmul.f32 %v3360, 1.442695
      %v3408 = vpow.pop %v3407
      %v3409 = vmul.f32 %v3361, 1.442695
      %v3410 = vpow.pop %v3409
      %v3411 = vmul.f32 %v3362, 1.442695
      %v3412 = vpow.pop %v3411
      %v3413 = vmul.f32 %v3363, 1.442695
      %v3414 = vpow.pop %v3413
      %v3415 = vmul.f32 %v3364, 1.442695
      %v3416 = vpow.pop %v3415
      %v3417 = vmul.f32 %v3365, 1.442695
      %v3418 = vpow.pop %v3417
      %v3419 = vmul.f32 %v3366, 1.442695
      %v3420 = vpow.pop %v3419
      %v3421 = vmul.f32 %v3367, 1.442695
      %v3422 = vpow.pop %v3421
      %v3423 = vmul.f32 %v3368, 1.442695
      %v3424 = vpow.pop %v3423
      %v3425 = vmul.f32 %v3369, 1.442695
      %v3426 = vpow.pop %v3425
      %v3427 = vmul.f32 %v3370, 1.442695
      %v3428 = vpow.pop %v3427
      %v3429 = vmul.f32 %v3371, 1.442695
      %v3430 = vpow.pop %v3429
      %v3431 = vmul.f32 %v3372, 1.442695
      %v3432 = vpow.pop %v3431
      %v3433 = vmul.f32 %v3373, 1.442695
      %v3434 = vpow.pop %v3433
      %v3435 = vmul.f32 %v3374, 1.442695
      %v3436 = vpow.pop %v3435
      %v3437 = vmul.f32 %v3375, 1.442695
      %v3438 = vpow.pop %v3437
      %v3439 = vmul.f32 %v3376, 1.442695
      %v3440 = vpow.pop %v3439
      %v3441 = vadd.f32 %v3378, 1.0
      %v3442 = vadd.f32 %v3380, 1.0
      %v3443 = vadd.f32 %v3382, 1.0
      %v3444 = vadd.f32 %v3384, 1.0
      %v3445 = vadd.f32 %v3386, 1.0
      %v3446 = vadd.f32 %v3388, 1.0
      %v3447 = vadd.f32 %v3390, 1.0
      %v3448 = vadd.f32 %v3392, 1.0
      %v3449 = vadd.f32 %v3394, 1.0
      %v3450 = vadd.f32 %v3396, 1.0
      %v3451 = vadd.f32 %v3398, 1.0
      %v3452 = vadd.f32 %v3400, 1.0
      %v3453 = vadd.f32 %v3402, 1.0
      %v3454 = vadd.f32 %v3404, 1.0
      %v3455 = vadd.f32 %v3406, 1.0
      %v3456 = vadd.f32 %v3408, 1.0
      %v3457 = vadd.f32 %v3410, 1.0
      %v3458 = vadd.f32 %v3412, 1.0
      %v3459 = vadd.f32 %v3414, 1.0
      %v3460 = vadd.f32 %v3416, 1.0
      %v3461 = vadd.f32 %v3418, 1.0
      %v3462 = vadd.f32 %v3420, 1.0
      %v3463 = vadd.f32 %v3422, 1.0
      %v3464 = vadd.f32 %v3424, 1.0
      %v3465 = vadd.f32 %v3426, 1.0
      %v3466 = vadd.f32 %v3428, 1.0
      %v3467 = vadd.f32 %v3430, 1.0
      %v3468 = vadd.f32 %v3432, 1.0
      %v3469 = vadd.f32 %v3434, 1.0
      %v3470 = vadd.f32 %v3436, 1.0
      %v3471 = vadd.f32 %v3438, 1.0
      %v3472 = vadd.f32 %v3440, 1.0
      %v3473 = vrcp.pop %v3441
      %v3474 = vrcp.pop %v3442
      %v3475 = vrcp.pop %v3443
      %v3476 = vrcp.pop %v3444
      %v3477 = vrcp.pop %v3445
      %v3478 = vrcp.pop %v3446
      %v3479 = vrcp.pop %v3447
      %v3480 = vrcp.pop %v3448
      %v3481 = vrcp.pop %v3449
      %v3482 = vrcp.pop %v3450
      %v3483 = vrcp.pop %v3451
      %v3484 = vrcp.pop %v3452
      %v3485 = vrcp.pop %v3453
      %v3486 = vrcp.pop %v3454
      %v3487 = vrcp.pop %v3455
      %v3488 = vrcp.pop %v3456
      %v3489 = vrcp.pop %v3457
      %v3490 = vrcp.pop %v3458
      %v3491 = vrcp.pop %v3459
      %v3492 = vrcp.pop %v3460
      %v3493 = vrcp.pop %v3461
      %v3494 = vrcp.pop %v3462
      %v3495 = vrcp.pop %v3463
      %v3496 = vrcp.pop %v3464
      %v3497 = vrcp.pop %v3465
      %v3498 = vrcp.pop %v3466
      %v3499 = vrcp.pop %v3467
      %v3500 = vrcp.pop %v3468
      %v3501 = vrcp.pop %v3469
      %v3502 = vrcp.pop %v3470
      %v3503 = vrcp.pop %v3471
      %v3504 = vrcp.pop %v3472
      %v3505 = vmul.f32 %v3313, %v3473
      %v3506 = vmul.f32 %v3314, %v3474
      %v3507 = vmul.f32 %v3315, %v3475
      %v3508 = vmul.f32 %v3316, %v3476
      %v3509 = vmul.f32 %v3317, %v3477
      %v3510 = vmul.f32 %v3318, %v3478
      %v3511 = vmul.f32 %v3319, %v3479
      %v3512 = vmul.f32 %v3320, %v3480
      %v3513 = vmul.f32 %v3321, %v3481
      %v3514 = vmul.f32 %v3322, %v3482
      %v3515 = vmul.f32 %v3323, %v3483
      %v3516 = vmul.f32 %v3324, %v3484
      %v3517 = vmul.f32 %v3325, %v3485
      %v3518 = vmul.f32 %v3326, %v3486
      %v3519 = vmul.f32 %v3327, %v3487
      %v3520 = vmul.f32 %v3328, %v3488
      %v3521 = vmul.f32 %v3329, %v3489
      %v3522 = vmul.f32 %v3330, %v3490
      %v3523 = vmul.f32 %v3331, %v3491
      %v3524 = vmul.f32 %v3332, %v3492
      %v3525 = vmul.f32 %v3333, %v3493
      %v3526 = vmul.f32 %v3334, %v3494
      %v3527 = vmul.f32 %v3335, %v3495
      %v3528 = vmul.f32 %v3336, %v3496
      %v3529 = vmul.f32 %v3337, %v3497
      %v3530 = vmul.f32 %v3338, %v3498
      %v3531 = vmul.f32 %v3339, %v3499
      %v3532 = vmul.f32 %v3340, %v3500
      %v3533 = vmul.f32 %v3341, %v3501
      %v3534 = vmul.f32 %v3342, %v3502
      %v3535 = vmul.f32 %v3343, %v3503
      %v3536 = vmul.f32 %v3344, %v3504
      %v3537 = vunpack.c.l.bf16 %v282
      %v3538 = vunpack.c.l.bf16 %v283
      %v3539 = vunpack.c.l.bf16 %v284
      %v3540 = vunpack.c.l.bf16 %v285
      %v3541 = vunpack.c.l.bf16 %v286
      %v3542 = vunpack.c.l.bf16 %v287
      %v3543 = vunpack.c.l.bf16 %v288
      %v3544 = vunpack.c.l.bf16 %v289
      %v3545 = vunpack.c.l.bf16 %v290
      %v3546 = vunpack.c.l.bf16 %v291
      %v3547 = vunpack.c.l.bf16 %v292
      %v3548 = vunpack.c.l.bf16 %v293
      %v3549 = vunpack.c.l.bf16 %v294
      %v3550 = vunpack.c.l.bf16 %v295
      %v3551 = vunpack.c.l.bf16 %v296
      %v3552 = vunpack.c.l.bf16 %v297
      %v3553 = vunpack.c.l.bf16 %v298
      %v3554 = vunpack.c.l.bf16 %v299
      %v3555 = vunpack.c.l.bf16 %v300
      %v3556 = vunpack.c.l.bf16 %v301
      %v3557 = vunpack.c.l.bf16 %v302
      %v3558 = vunpack.c.l.bf16 %v303
      %v3559 = vunpack.c.l.bf16 %v304
      %v3560 = vunpack.c.l.bf16 %v305
      %v3561 = vunpack.c.l.bf16 %v306
      %v3562 = vunpack.c.l.bf16 %v307
      %v3563 = vunpack.c.l.bf16 %v308
      %v3564 = vunpack.c.l.bf16 %v309
      %v3565 = vunpack.c.l.bf16 %v310
      %v3566 = vunpack.c.l.bf16 %v311
      %v3567 = vunpack.c.l.bf16 %v312
      %v3568 = vunpack.c.l.bf16 %v313
      %v3569 = vadd.f32 %v3505, %v3537
      %v3570 = vadd.f32 %v3506, %v3538
      %v3571 = vadd.f32 %v3507, %v3539
      %v3572 = vadd.f32 %v3508, %v3540
      %v3573 = vadd.f32 %v3509, %v3541
      %v3574 = vadd.f32 %v3510, %v3542
      %v3575 = vadd.f32 %v3511, %v3543
      %v3576 = vadd.f32 %v3512, %v3544
      %v3577 = vadd.f32 %v3513, %v3545
      %v3578 = vadd.f32 %v3514, %v3546
      %v3579 = vadd.f32 %v3515, %v3547
      %v3580 = vadd.f32 %v3516, %v3548
      %v3581 = vadd.f32 %v3517, %v3549
      %v3582 = vadd.f32 %v3518, %v3550
      %v3583 = vadd.f32 %v3519, %v3551
      %v3584 = vadd.f32 %v3520, %v3552
      %v3585 = vadd.f32 %v3521, %v3553
      %v3586 = vadd.f32 %v3522, %v3554
      %v3587 = vadd.f32 %v3523, %v3555
      %v3588 = vadd.f32 %v3524, %v3556
      %v3589 = vadd.f32 %v3525, %v3557
      %v3590 = vadd.f32 %v3526, %v3558
      %v3591 = vadd.f32 %v3527, %v3559
      %v3592 = vadd.f32 %v3528, %v3560
      %v3593 = vadd.f32 %v3529, %v3561
      %v3594 = vadd.f32 %v3530, %v3562
      %v3595 = vadd.f32 %v3531, %v3563
      %v3596 = vadd.f32 %v3532, %v3564
      %v3597 = vadd.f32 %v3533, %v3565
      %v3598 = vadd.f32 %v3534, %v3566
      %v3599 = vadd.f32 %v3535, %v3567
      %v3600 = vadd.f32 %v3536, %v3568
      %v3601 = vpack.c.bf16 %v3570, %v3569
      %v3602 = vpack.c.bf16 %v3572, %v3571
      %v3603 = vpack.c.bf16 %v3574, %v3573
      %v3604 = vpack.c.bf16 %v3576, %v3575
      %v3605 = vpack.c.bf16 %v3578, %v3577
      %v3606 = vpack.c.bf16 %v3580, %v3579
      %v3607 = vpack.c.bf16 %v3582, %v3581
      %v3608 = vpack.c.bf16 %v3584, %v3583
      %v3609 = vpack.c.bf16 %v3586, %v3585
      %v3610 = vpack.c.bf16 %v3588, %v3587
      %v3611 = vpack.c.bf16 %v3590, %v3589
      %v3612 = vpack.c.bf16 %v3592, %v3591
      %v3613 = vpack.c.bf16 %v3594, %v3593
      %v3614 = vpack.c.bf16 %v3596, %v3595
      %v3615 = vpack.c.bf16 %v3598, %v3597
      %v3616 = vpack.c.bf16 %v3600, %v3599
      %v3633 = vunpack.c.l.b16 %v3601
      %v3634 = vunpack.c.h.b16 %v3601
      %v3635 = vunpack.c.l.b16 %v3602
      %v3636 = vunpack.c.h.b16 %v3602
      %v3637 = vunpack.c.l.b16 %v3603
      %v3638 = vunpack.c.h.b16 %v3603
      %v3639 = vunpack.c.l.b16 %v3604
      %v3640 = vunpack.c.h.b16 %v3604
      %v3641 = vunpack.c.l.b16 %v3605
      %v3642 = vunpack.c.h.b16 %v3605
      %v3643 = vunpack.c.l.b16 %v3606
      %v3644 = vunpack.c.h.b16 %v3606
      %v3645 = vunpack.c.l.b16 %v3607
      %v3646 = vunpack.c.h.b16 %v3607
      %v3647 = vunpack.c.l.b16 %v3608
      %v3648 = vunpack.c.h.b16 %v3608
      %v3649 = vunpack.c.l.b16 %v3609
      %v3650 = vunpack.c.h.b16 %v3609
      %v3651 = vunpack.c.l.b16 %v3610
      %v3652 = vunpack.c.h.b16 %v3610
      %v3653 = vunpack.c.l.b16 %v3611
      %v3654 = vunpack.c.h.b16 %v3611
      %v3655 = vunpack.c.l.b16 %v3612
      %v3656 = vunpack.c.h.b16 %v3612
      %v3657 = vunpack.c.l.b16 %v3613
      %v3658 = vunpack.c.h.b16 %v3613
      %v3659 = vunpack.c.l.b16 %v3614
      %v3660 = vunpack.c.h.b16 %v3614
      %v3661 = vunpack.c.l.b16 %v3615
      %v3662 = vunpack.c.h.b16 %v3615
      %v3663 = vunpack.c.l.b16 %v3616
      %v3664 = vunpack.c.h.b16 %v3616
      %v3665 = vpack.c.b16 %v3633, %v3633
      %v3666 = vpack.c.b16 %v3634, %v3634
      %v3667 = vpack.c.b16 %v3635, %v3635
      %v3668 = vpack.c.b16 %v3636, %v3636
      %v3669 = vpack.c.b16 %v3637, %v3637
      %v3670 = vpack.c.b16 %v3638, %v3638
      %v3671 = vpack.c.b16 %v3639, %v3639
      %v3672 = vpack.c.b16 %v3640, %v3640
      %v3673 = vpack.c.b16 %v3641, %v3641
      %v3674 = vpack.c.b16 %v3642, %v3642
      %v3675 = vpack.c.b16 %v3643, %v3643
      %v3676 = vpack.c.b16 %v3644, %v3644
      %v3677 = vpack.c.b16 %v3645, %v3645
      %v3678 = vpack.c.b16 %v3646, %v3646
      %v3679 = vpack.c.b16 %v3647, %v3647
      %v3680 = vpack.c.b16 %v3648, %v3648
      %v3681 = vpack.c.b16 %v3649, %v3649
      %v3682 = vpack.c.b16 %v3650, %v3650
      %v3683 = vpack.c.b16 %v3651, %v3651
      %v3684 = vpack.c.b16 %v3652, %v3652
      %v3685 = vpack.c.b16 %v3653, %v3653
      %v3686 = vpack.c.b16 %v3654, %v3654
      %v3687 = vpack.c.b16 %v3655, %v3655
      %v3688 = vpack.c.b16 %v3656, %v3656
      %v3689 = vpack.c.b16 %v3657, %v3657
      %v3690 = vpack.c.b16 %v3658, %v3658
      %v3691 = vpack.c.b16 %v3659, %v3659
      %v3692 = vpack.c.b16 %v3660, %v3660
      %v3693 = vpack.c.b16 %v3661, %v3661
      %v3694 = vpack.c.b16 %v3662, %v3662
      %v3695 = vpack.c.b16 %v3663, %v3663
      %v3696 = vpack.c.b16 %v3664, %v3664
      %3729 = vst [vmem:[%s278] sm:$0xf] %v3665
      %3730 = vst [vmem:[%s278 + $0x4] sm:$0xf] %v3666
      %3731 = vst [vmem:[%s278 + $0x8] sm:$0xf] %v3667
      %3732 = vst [vmem:[%s278 + $0xc] sm:$0xf] %v3668
      %3733 = vst [vmem:[%s278 + $0x10] sm:$0xf] %v3669
      %3734 = vst [vmem:[%s278 + $0x14] sm:$0xf] %v3670
      %3735 = vst [vmem:[%s278 + $0x18] sm:$0xf] %v3671
      %3736 = vst [vmem:[%s278 + $0x1c] sm:$0xf] %v3672
      %3737 = vst [vmem:[%s278 + $0x20] sm:$0xf] %v3673
      %3738 = vst [vmem:[%s278 + $0x24] sm:$0xf] %v3674
      %3739 = vst [vmem:[%s278 + $0x28] sm:$0xf] %v3675
      %3740 = vst [vmem:[%s278 + $0x2c] sm:$0xf] %v3676
      %3741 = vst [vmem:[%s278 + $0x30] sm:$0xf] %v3677
      %3742 = vst [vmem:[%s278 + $0x34] sm:$0xf] %v3678
      %3743 = vst [vmem:[%s278 + $0x38] sm:$0xf] %v3679
      %3744 = vst [vmem:[%s278 + $0x3c] sm:$0xf] %v3680
      %3745 = vst [vmem:[%s278 + $0x40] sm:$0xf] %v3681
      %3746 = vst [vmem:[%s278 + $0x44] sm:$0xf] %v3682
      %3747 = vst [vmem:[%s278 + $0x48] sm:$0xf] %v3683
      %3748 = vst [vmem:[%s278 + $0x4c] sm:$0xf] %v3684
      %3749 = vst [vmem:[%s278 + $0x50] sm:$0xf] %v3685
      %3750 = vst [vmem:[%s278 + $0x54] sm:$0xf] %v3686
      %3751 = vst [vmem:[%s278 + $0x58] sm:$0xf] %v3687
      %3752 = vst [vmem:[%s278 + $0x5c] sm:$0xf] %v3688
      %3753 = vst [vmem:[%s278 + $0x60] sm:$0xf] %v3689
      %3754 = vst [vmem:[%s278 + $0x64] sm:$0xf] %v3690
      %3755 = vst [vmem:[%s278 + $0x68] sm:$0xf] %v3691
      %3756 = vst [vmem:[%s278 + $0x6c] sm:$0xf] %v3692
      %3757 = vst [vmem:[%s278 + $0x70] sm:$0xf] %v3693
      %3758 = vst [vmem:[%s278 + $0x74] sm:$0xf] %v3694
      %3759 = vst [vmem:[%s278 + $0x78] sm:$0xf] %v3695
      %3760 = vst [vmem:[%s278 + $0x7c] sm:$0xf] %v3696
      %p3761 = scmp.lt.s32.totalorder %s18, 1
      %s3762 = scalar_select %p3761, %s18, 1
      %s3763 = smul.addr %s3762, 32
      %s3764 = smul.addr %s3763, 4
      %s3765 = scalar_lea.vmem %s7, %s3764
      // Predicated region
      $region49: #{csp_layer_forward.4} parent=47 // pred_check
        %p3766 = pneg %p188
      $region50: #{csp_layer_forward.4} parent=47 // pred_check_branch
        %3768 = sbr.rel (%p3766) target = $region52
      $region51: #{csp_layer_forward.4} parent=47 // pred_region
        _
      $region52: #{csp_layer_forward.4} parent=47 // pred_fallthru
        _
    $region48: #{csp_layer_forward.4} parent=5 // pred_fallthru
      _
    %p3769 = scmp.le.s32.totalorder 2, %s13
    // Predicated region
    $region53: #{csp_layer_forward.4} parent=5 // pred_check
      %p3770 = pneg %p3769
    $region54: #{csp_layer_forward.4} parent=5 // pred_check_branch
      %3772 = sbr.rel (%p3770) target = $region56
    $region55: #{csp_layer_forward.4} parent=5 // pred_region
      %s3773 = ssub.s32 %s13, 2
      // Predicated region
      $region57: #{csp_layer_forward.4} parent=55 // pred_check
        %p3774 = pneg %p194
      $region58: #{csp_layer_forward.4} parent=55 // pred_check_branch
        %3776 = sbr.rel (%p3774) target = $region60
      $region59: #{csp_layer_forward.4} parent=55 // pred_region
        %p3777 = scmp.lt.s32.totalorder %s19, 1
        %s3778 = scalar_select %p3777, %s19, 1
        %s3779 = smul.addr %s3778, 32
        %s3780 = smul.addr %s3779, 4
        %s3781 = scalar_lea.vmem %s7, %s3780
      $region60: #{csp_layer_forward.4} parent=55 // pred_fallthru
        _
    $region56: #{csp_layer_forward.4} parent=5 // pred_fallthru
      _
  $region6: #{csp_layer_forward.4} parent=0 // loop_footer
    %s17 = sadd.s32 1, %s13
  $region7: #{csp_layer_forward.4} parent=0 // loop_footer_branch
    %12 = sbr.rel target = $region3
  $region8: #{csp_layer_forward.4} parent=0 // loop_exit
    _

</llo_original>
